<compile_context>
chip_gen: v6e
topology: v6e:2x2x1
jax: 0.10.0
libtpu: 0.0.40
codegen_flags: <defaults>
</compile_context>

<pallas_src>
import functools

import jax
import jax.numpy as jnp
from jax.experimental import pallas as pl
from jax.experimental.pallas import tpu as pltpu


# ----------------------------------------------------------------------------
# Fused matmul kernel (convs via im2col):  out = maybe_relu(x @ w + b)
#   x: bf16 (tm, K) tile, w: bf16 (K, Npad) resident, b: f32 (1, Npad)
# ----------------------------------------------------------------------------
def _mm_bias_act_kernel(x_ref, w_ref, b_ref, o_ref, *, apply_relu):
    z = jnp.dot(x_ref[...], w_ref[...], preferred_element_type=jnp.float32)
    z = z + b_ref[...]
    if apply_relu:
        z = jnp.maximum(z, 0.0)
    o_ref[...] = z.astype(o_ref.dtype)


def mm_bias_act(x, w, b, *, apply_relu, out_dtype=jnp.bfloat16, tm=512):
    """x: (M, K) bf16, w: (K, Npad) bf16 (lane-padded), b: (1, Npad) f32."""
    M, K = x.shape
    Np = w.shape[1]
    tm = min(tm, M)                     # M is always a multiple of 16 here
    grid_m = pl.cdiv(M, tm)
    return pl.pallas_call(
        functools.partial(_mm_bias_act_kernel, apply_relu=apply_relu),
        out_shape=jax.ShapeDtypeStruct((M, Np), out_dtype),
        grid=(grid_m,),
        in_specs=[
            pl.BlockSpec((tm, K), lambda i: (i, 0)),
            pl.BlockSpec((K, Np), lambda i: (0, 0)),
            pl.BlockSpec((1, Np), lambda i: (0, 0)),
        ],
        out_specs=pl.BlockSpec((tm, Np), lambda i: (i, 0)),
        compiler_params=pltpu.CompilerParams(
            dimension_semantics=("parallel",)),
    )(x, w, b)


# ----------------------------------------------------------------------------
# Fused FC head kernel: classifier + discriminator in one pallas_call.
#   h1  = relu(feat @ W1 + b1)        W1 = [cls_fc1 | dis_fc1 | 0]  (768,256)
#   c2  = relu(h1 @ W2 + b2)          W2: rows 0:100 = cls_fc2      (256,128)
#   cls = c2 @ W3 + b3                W3: cols 0:10  = cls_fc3      (128,128)
#   dom = h1 @ W4 + b4                W4: rows 100:200 = dis_fc2    (256,128)
# BN folded into W1/W2, bf16 operands, f32 accumulate, intermediates in VMEM.
# ----------------------------------------------------------------------------
def _head_kernel(feat_ref, w1_ref, b1_ref, w2_ref, b2_ref,
                 w3_ref, b3_ref, w4_ref, b4_ref, cls_ref, dom_ref):
    h1 = jnp.dot(feat_ref[...], w1_ref[...],
                 preferred_element_type=jnp.float32) + b1_ref[...]
    h1 = jnp.maximum(h1, 0.0)
    h1b = h1.astype(jnp.bfloat16)

    c2 = jnp.dot(h1b, w2_ref[...],
                 preferred_element_type=jnp.float32) + b2_ref[...]
    c2 = jnp.maximum(c2, 0.0)

    cls_ref[...] = jnp.dot(c2.astype(jnp.bfloat16), w3_ref[...],
                           preferred_element_type=jnp.float32) + b3_ref[...]
    dom_ref[...] = jnp.dot(h1b, w4_ref[...],
                           preferred_element_type=jnp.float32) + b4_ref[...]


def head_call(feat_p, W1, b1, W2, b2, W3, b3, W4, b4):
    Mp = feat_p.shape[0]
    full = lambda shape: pl.BlockSpec(shape, lambda i: (0, 0))
    return pl.pallas_call(
        _head_kernel,
        out_shape=(jax.ShapeDtypeStruct((Mp, 128), jnp.float32),
                   jax.ShapeDtypeStruct((Mp, 128), jnp.float32)),
        grid=(1,),
        in_specs=[
            full((Mp, 768)),
            full((768, 256)), full((1, 256)),
            full((256, 128)), full((1, 128)),
            full((128, 128)), full((1, 128)),
            full((256, 128)), full((1, 128)),
        ],
        out_specs=(full((Mp, 128)), full((Mp, 128))),
    )(feat_p, W1, b1, W2, b2, W3, b3, W4, b4)


# ----------------------------------------------------------------------------
# JAX glue: im2col (NHWC), maxpool (NHWC), BN folding, lane padding
# ----------------------------------------------------------------------------
def bn_fold(gamma, beta, mean, var, eps=1e-5):
    s = gamma / jnp.sqrt(var + eps)
    return s, beta - mean * s


def pad_last(a, n):
    pad = n - a.shape[-1]
    if pad == 0:
        return a
    return jnp.pad(a, [(0, 0)] * (a.ndim - 1) + [(0, pad)])


def im2col_nhwc(x, kh, kw):
    """NHWC -> (B*OH*OW, KH*KW*C), K ordered (KH, KW, C)."""
    # TODO(synk): for large batches, stream patches inside the Pallas kernel
    # instead of materializing the expanded cols array in HBM.
    B, H, W, C = x.shape
    oh, ow = H - kh + 1, W - kw + 1
    cols = jnp.concatenate(
        [x[:, i:i + oh, j:j + ow, :] for i in range(kh) for j in range(kw)],
        axis=-1)                                   # (B, oh, ow, KH*KW*C)
    return cols.reshape(B * oh * ow, kh * kw * C), oh, ow


def maxpool2_nhwc(x):
    B, H, W, C = x.shape
    return x.reshape(B, H // 2, 2, W // 2, 2, C).max(axis=(2, 4))


# ----------------------------------------------------------------------------
# One-time parameter preparation: BN folding, weight reorder/transpose,
# lane padding, head-weight concatenation, bf16 casts.
# ----------------------------------------------------------------------------
def prepare_params(params, in_channels):
    # ---- conv1 (+BN1) ----
    s1, t1 = bn_fold(*params["bn1"])
    if in_channels == 1:
        # input is expanded to 3 identical channels -> fold the channel sum
        # into the weights (exact same result, 3x less im2col / MXU work).
        w1 = params["conv1_w"].sum(axis=1) * s1[:, None, None]       # (32,5,5)
        w1m = w1.transpose(1, 2, 0).reshape(25, 32)                  # (KH*KW, O)
    else:
        w1 = params["conv1_w"] * s1[:, None, None, None]             # (32,3,5,5)
        w1m = w1.transpose(2, 3, 1, 0).reshape(75, 32)               # (KH*KW*C, O)
    w1m = pad_last(w1m, 128).astype(jnp.bfloat16)
    bias1 = pad_last((params["conv1_b"] * s1 + t1).reshape(1, 32),
                     128).astype(jnp.float32)

    # ---- conv2 (+BN2) ----
    s2, t2 = bn_fold(*params["bn2"])
    w2 = params["conv2_w"] * s2[:, None, None, None]                 # (48,32,5,5)
    w2m = pad_last(w2.transpose(2, 3, 1, 0).reshape(800, 48),
                   128).astype(jnp.bfloat16)
    bias2 = pad_last((params["conv2_b"] * s2 + t2).reshape(1, 48),
                     128).astype(jnp.float32)

    # ---- FC head ----
    s_c1, t_c1 = bn_fold(*params["cls_bn1"])
    s_c2, t_c2 = bn_fold(*params["cls_bn2"])
    s_d1, t_d1 = bn_fold(*params["dis_bn1"])

    def reorder_fc1(w):
        # torch feature view is (C=48,H=4,W=4); our feature is (H,W,C).
        return w.reshape(100, 48, 4, 4).transpose(0, 2, 3, 1).reshape(100, 768).T

    w_cls1 = reorder_fc1(params["cls_fc1_w"]) * s_c1[None, :]        # (768,100)
    b_cls1 = params["cls_fc1_b"] * s_c1 + t_c1
    w_dis1 = reorder_fc1(params["dis_fc1_w"]) * s_d1[None, :]        # (768,100)
    b_dis1 = params["dis_fc1_b"] * s_d1 + t_d1

    W1 = jnp.zeros((768, 256), jnp.float32)
    W1 = W1.at[:, :100].set(w_cls1).at[:, 100:200].set(w_dis1)
    b1 = jnp.zeros((1, 256), jnp.float32)
    b1 = b1.at[0, :100].set(b_cls1).at[0, 100:200].set(b_dis1)

    W2 = jnp.zeros((256, 128), jnp.float32)
    W2 = W2.at[:100, :100].set(params["cls_fc2_w"].T * s_c2[None, :])
    b2 = jnp.zeros((1, 128), jnp.float32)
    b2 = b2.at[0, :100].set(params["cls_fc2_b"] * s_c2 + t_c2)

    W3 = jnp.zeros((128, 128), jnp.float32)
    W3 = W3.at[:100, :10].set(params["cls_fc3_w"].T)
    b3 = jnp.zeros((1, 128), jnp.float32)
    b3 = b3.at[0, :10].set(params["cls_fc3_b"])

    W4 = jnp.zeros((256, 128), jnp.float32)
    W4 = W4.at[100:200, :1].set(params["dis_fc2_w"].T)
    b4 = jnp.zeros((1, 128), jnp.float32)
    b4 = b4.at[0, :1].set(params["dis_fc2_b"])

    return dict(
        in_channels=in_channels,
        w1m=w1m, bias1=bias1, w2m=w2m, bias2=bias2,
        W1=W1.astype(jnp.bfloat16), b1=b1,
        W2=W2.astype(jnp.bfloat16), b2=b2,
        W3=W3.astype(jnp.bfloat16), b3=b3,
        W4=W4.astype(jnp.bfloat16), b4=b4,
    )


# ----------------------------------------------------------------------------
# GaninModel forward (eval mode)
# ----------------------------------------------------------------------------
def ganin_forward(prepped, x, alpha):
    del alpha  # gradient-reversal scale affects only backward; forward is identity
    B, C_in, H, W = x.shape

    if C_in == 1:
        # channel broadcast already folded into conv1 weights (K = 25)
        x_nhwc = x.transpose(0, 2, 3, 1).astype(jnp.bfloat16)        # (B,28,28,1)
    else:
        x3 = jnp.broadcast_to(x, (B, 3, H, W))
        x_nhwc = x3.transpose(0, 2, 3, 1).astype(jnp.bfloat16)       # (B,28,28,3)

    # conv1 + BN + ReLU, then 2x2 maxpool
    cols1, oh1, ow1 = im2col_nhwc(x_nhwc, 5, 5)                      # (B*576, K1)
    y1 = mm_bias_act(cols1, prepped["w1m"], prepped["bias1"], apply_relu=True)
    h = y1.reshape(B, oh1, ow1, 128)[..., :32]                       # (B,24,24,32)
    h = maxpool2_nhwc(h)                                             # (B,12,12,32)

    # conv2 + BN + (Dropout2d = identity in eval) + ReLU, then 2x2 maxpool
    cols2, oh2, ow2 = im2col_nhwc(h, 5, 5)                           # (B*64, 800)
    y2 = mm_bias_act(cols2, prepped["w2m"], prepped["bias2"], apply_relu=True)
    h = y2.reshape(B, oh2, ow2, 128)[..., :48]                       # (B,8,8,48)
    h = maxpool2_nhwc(h)                                             # (B,4,4,48)

    # feature in (H,W,C) order; fc1 weights were permuted to match
    feature = h.reshape(B, 48 * 4 * 4)                               # (B,768) bf16
    Mp = max(16, ((B + 15) // 16) * 16)                              # sublane pad
    feat_p = jnp.zeros((Mp, 768), jnp.bfloat16).at[:B].set(feature)

    cls_p, dom_p = head_call(
        feat_p,
        prepped["W1"], prepped["b1"], prepped["W2"], prepped["b2"],
        prepped["W3"], prepped["b3"], prepped["W4"], prepped["b4"])

    class_output = cls_p[:B, :10]
    domain_output = dom_p[:B, :1]
    return class_output, domain_output


# ----------------------------------------------------------------------------
# Deterministic parameter init (shapes from the PyTorch __init__)
# ----------------------------------------------------------------------------
def init_params(key):
    ks = iter(jax.random.split(key, 40))

    def nrm(shape, scale=0.05):
        return scale * jax.random.normal(next(ks), shape, jnp.float32)

    def bn_params(c):
        gamma = 1.0 + 0.1 * jax.random.normal(next(ks), (c,), jnp.float32)
        beta = 0.1 * jax.random.normal(next(ks), (c,), jnp.float32)
        mean = 0.1 * jax.random.normal(next(ks), (c,), jnp.float32)
        var = 1.0 + 0.1 * jnp.abs(jax.random.normal(next(ks), (c,), jnp.float32))
        return (gamma, beta, mean, var)

    return dict(
        conv1_w=nrm((32, 3, 5, 5)), conv1_b=nrm((32,)), bn1=bn_params(32),
        conv2_w=nrm((48, 32, 5, 5)), conv2_b=nrm((48,)), bn2=bn_params(48),
        cls_fc1_w=nrm((100, 768)), cls_fc1_b=nrm((100,)), cls_bn1=bn_params(100),
        cls_fc2_w=nrm((100, 100)), cls_fc2_b=nrm((100,)), cls_bn2=bn_params(100),
        cls_fc3_w=nrm((10, 100)), cls_fc3_b=nrm((10,)),
        dis_fc1_w=nrm((100, 768)), dis_fc1_b=nrm((100,)), dis_bn1=bn_params(100),
        dis_fc2_w=nrm((1, 100)), dis_fc2_b=nrm((1,)),
    )


if __name__ == "__main__":
    key = jax.random.PRNGKey(0)
    pkey, xkey = jax.random.split(key)
    params = init_params(pkey)

    # MNIST-like input: (B, 1, 28, 28), expanded to 3 channels per the spec.
    x = jax.random.normal(xkey, (2, 1, 28, 28), jnp.float32)
    alpha = jnp.float32(0.5)

    # One-time weight prep (BN fold, reorder, lane padding, bf16 cast).
    prepped = prepare_params(params, in_channels=x.shape[1])

    fwd = jax.jit(ganin_forward)
    class_output, domain_output = fwd(prepped, x, alpha)
    jax.block_until_ready((class_output, domain_output))

    assert class_output.shape == (2, 10) and class_output.dtype == jnp.float32
    assert domain_output.shape == (2, 1) and domain_output.dtype == jnp.float32
    print("KERNEL_OK")
</pallas_src>

<mosaic_0001>
module attributes {stable_mosaic.version = 11 : i64} {
  func.func @_mm_bias_act_kernel(%arg0: i32, %arg1: memref<512x25xbf16, #tpu.memory_space<vmem>>, %arg2: memref<25x128xbf16, #tpu.memory_space<vmem>>, %arg3: memref<1x128xf32, #tpu.memory_space<vmem>>, %arg4: memref<512x128xbf16, #tpu.memory_space<vmem>>) attributes {dimension_semantics = [#tpu.dimension_semantics<parallel>], iteration_bounds = array<i64: 3>, scalar_prefetch = 0 : i64, scratch_operands = 0 : i64, tpu.core_type = #tpu.core_type<tc>, window_params = [{transform_indices = @transform_0, window_bounds = array<i64: 512, 25>}, {pipeline_mode = #tpu.pipeline_mode<synchronous>, transform_indices = @transform_1, window_bounds = array<i64: 25, 128>}, {pipeline_mode = #tpu.pipeline_mode<synchronous>, transform_indices = @transform_2, window_bounds = array<i64: 1, 128>}, {transform_indices = @transform_3, window_bounds = array<i64: 512, 128>}]} {
    %c0 = arith.constant 0 : index
    %c0_0 = arith.constant 0 : index
    %0 = vector.load %arg1[%c0, %c0_0] : memref<512x25xbf16, #tpu.memory_space<vmem>>, vector<512x25xbf16>
    %c0_1 = arith.constant 0 : index
    %c0_2 = arith.constant 0 : index
    %1 = vector.load %arg2[%c0_1, %c0_2] : memref<25x128xbf16, #tpu.memory_space<vmem>>, vector<25x128xbf16>
    %cst = arith.constant dense<0.000000e+00> : vector<512x128xf32>
    %2 = tpu.matmul %0, %1, %cst {dimension_numbers = #tpu.dot_dimension_numbers<[1], [0], [0], [1], [0, 0, 1, 1], [], []>} : vector<512x25xbf16>, vector<25x128xbf16>, vector<512x128xf32> -> vector<512x128xf32>
    %c0_3 = arith.constant 0 : index
    %c0_4 = arith.constant 0 : index
    %3 = vector.load %arg3[%c0_3, %c0_4] : memref<1x128xf32, #tpu.memory_space<vmem>>, vector<1x128xf32>
    %4 = vector.broadcast %3 : vector<1x128xf32> to vector<512x128xf32>
    %5 = arith.addf %2, %4 : vector<512x128xf32>
    %cst_5 = arith.constant 0.000000e+00 : f32
    %6 = vector.broadcast %cst_5 : f32 to vector<512x128xf32>
    %7 = arith.maximumf %5, %6 : vector<512x128xf32>
    %8 = arith.truncf %7 : vector<512x128xf32> to vector<512x128xbf16>
    %c0_6 = arith.constant 0 : index
    %c0_7 = arith.constant 0 : index
    %9 = vector.load %arg4[%c0_6, %c0_7] : memref<512x128xbf16, #tpu.memory_space<vmem>>, vector<512x128xbf16>
    tpu.vector_store %arg4[%c0_6, %c0_7], %8 {strides = array<i32>} : memref<512x128xbf16, #tpu.memory_space<vmem>>, vector<512x128xbf16>,
    return
  }
  func.func @transform_0(%arg0: i32) -> (i32, i32) {
    %c0_i32 = arith.constant 0 : i32
    %c0_i32_0 = arith.constant 0 : i32
    return %arg0, %c0_i32 : i32, i32
  }
  func.func @transform_1(%arg0: i32) -> (i32, i32) {
    %c0_i32 = arith.constant 0 : i32
    %c0_i32_0 = arith.constant 0 : i32
    %c0_i32_1 = arith.constant 0 : i32
    return %c0_i32, %c0_i32_0 : i32, i32
  }
  func.func @transform_2(%arg0: i32) -> (i32, i32) {
    %c0_i32 = arith.constant 0 : i32
    %c0_i32_0 = arith.constant 0 : i32
    %c0_i32_1 = arith.constant 0 : i32
    return %c0_i32, %c0_i32_0 : i32, i32
  }
  func.func @transform_3(%arg0: i32) -> (i32, i32) {
    %c0_i32 = arith.constant 0 : i32
    %c0_i32_0 = arith.constant 0 : i32
    return %arg0, %c0_i32 : i32, i32
  }
}

module attributes {stable_mosaic.version = 11 : i64} {
  func.func @_mm_bias_act_kernel(%arg0: i32, %arg1: memref<128x800xbf16, #tpu.memory_space<vmem>>, %arg2: memref<800x128xbf16, #tpu.memory_space<vmem>>, %arg3: memref<1x128xf32, #tpu.memory_space<vmem>>, %arg4: memref<128x128xbf16, #tpu.memory_space<vmem>>) attributes {dimension_semantics = [#tpu.dimension_semantics<parallel>], iteration_bounds = array<i64: 1>, scalar_prefetch = 0 : i64, scratch_operands = 0 : i64, tpu.core_type = #tpu.core_type<tc>, window_params = [{transform_indices = @transform_0, window_bounds = array<i64: 128, 800>}, {pipeline_mode = #tpu.pipeline_mode<synchronous>, transform_indices = @transform_1, window_bounds = array<i64: 800, 128>}, {pipeline_mode = #tpu.pipeline_mode<synchronous>, transform_indices = @transform_2, window_bounds = array<i64: 1, 128>}, {transform_indices = @transform_3, window_bounds = array<i64: 128, 128>}]} {
    %c0 = arith.constant 0 : index
    %c0_0 = arith.constant 0 : index
    %0 = vector.load %arg1[%c0, %c0_0] : memref<128x800xbf16, #tpu.memory_space<vmem>>, vector<128x800xbf16>
    %c0_1 = arith.constant 0 : index
    %c0_2 = arith.constant 0 : index
    %1 = vector.load %arg2[%c0_1, %c0_2] : memref<800x128xbf16, #tpu.memory_space<vmem>>, vector<800x128xbf16>
    %cst = arith.constant dense<0.000000e+00> : vector<128x128xf32>
    %2 = tpu.matmul %0, %1, %cst {dimension_numbers = #tpu.dot_dimension_numbers<[1], [0], [0], [1], [0, 0, 1, 1], [], []>} : vector<128x800xbf16>, vector<800x128xbf16>, vector<128x128xf32> -> vector<128x128xf32>
    %c0_3 = arith.constant 0 : index
    %c0_4 = arith.constant 0 : index
    %3 = vector.load %arg3[%c0_3, %c0_4] : memref<1x128xf32, #tpu.memory_space<vmem>>, vector<1x128xf32>
    %4 = vector.broadcast %3 : vector<1x128xf32> to vector<128x128xf32>
    %5 = arith.addf %2, %4 : vector<128x128xf32>
    %cst_5 = arith.constant 0.000000e+00 : f32
    %6 = vector.broadcast %cst_5 : f32 to vector<128x128xf32>
    %7 = arith.maximumf %5, %6 : vector<128x128xf32>
    %8 = arith.truncf %7 : vector<128x128xf32> to vector<128x128xbf16>
    %c0_6 = arith.constant 0 : index
    %c0_7 = arith.constant 0 : index
    %9 = vector.load %arg4[%c0_6, %c0_7] : memref<128x128xbf16, #tpu.memory_space<vmem>>, vector<128x128xbf16>
    tpu.vector_store %arg4[%c0_6, %c0_7], %8 {strides = array<i32>} : memref<128x128xbf16, #tpu.memory_space<vmem>>, vector<128x128xbf16>,
    return
  }
  func.func @transform_0(%arg0: i32) -> (i32, i32) {
    %c0_i32 = arith.constant 0 : i32
    %c0_i32_0 = arith.constant 0 : i32
    return %arg0, %c0_i32 : i32, i32
  }
  func.func @transform_1(%arg0: i32) -> (i32, i32) {
    %c0_i32 = arith.constant 0 : i32
    %c0_i32_0 = arith.constant 0 : i32
    %c0_i32_1 = arith.constant 0 : i32
    return %c0_i32, %c0_i32_0 : i32, i32
  }
  func.func @transform_2(%arg0: i32) -> (i32, i32) {
    %c0_i32 = arith.constant 0 : i32
    %c0_i32_0 = arith.constant 0 : i32
    %c0_i32_1 = arith.constant 0 : i32
    return %c0_i32, %c0_i32_0 : i32, i32
  }
  func.func @transform_3(%arg0: i32) -> (i32, i32) {
    %c0_i32 = arith.constant 0 : i32
    %c0_i32_0 = arith.constant 0 : i32
    return %arg0, %c0_i32 : i32, i32
  }
}

module attributes {stable_mosaic.version = 11 : i64} {
  func.func @_head_kernel(%arg0: i32, %arg1: memref<16x768xbf16, #tpu.memory_space<vmem>>, %arg2: memref<768x256xbf16, #tpu.memory_space<vmem>>, %arg3: memref<1x256xf32, #tpu.memory_space<vmem>>, %arg4: memref<256x128xbf16, #tpu.memory_space<vmem>>, %arg5: memref<1x128xf32, #tpu.memory_space<vmem>>, %arg6: memref<128x128xbf16, #tpu.memory_space<vmem>>, %arg7: memref<1x128xf32, #tpu.memory_space<vmem>>, %arg8: memref<256x128xbf16, #tpu.memory_space<vmem>>, %arg9: memref<1x128xf32, #tpu.memory_space<vmem>>, %arg10: memref<16x128xf32, #tpu.memory_space<vmem>>, %arg11: memref<16x128xf32, #tpu.memory_space<vmem>>) attributes {dimension_semantics = [#tpu.dimension_semantics<arbitrary>], iteration_bounds = array<i64: 1>, scalar_prefetch = 0 : i64, scratch_operands = 0 : i64, tpu.core_type = #tpu.core_type<tc>, window_params = [{pipeline_mode = #tpu.pipeline_mode<synchronous>, transform_indices = @transform_0, window_bounds = array<i64: 16, 768>}, {pipeline_mode = #tpu.pipeline_mode<synchronous>, transform_indices = @transform_1, window_bounds = array<i64: 768, 256>}, {pipeline_mode = #tpu.pipeline_mode<synchronous>, transform_indices = @transform_2, window_bounds = array<i64: 1, 256>}, {pipeline_mode = #tpu.pipeline_mode<synchronous>, transform_indices = @transform_3, window_bounds = array<i64: 256, 128>}, {pipeline_mode = #tpu.pipeline_mode<synchronous>, transform_indices = @transform_4, window_bounds = array<i64: 1, 128>}, {pipeline_mode = #tpu.pipeline_mode<synchronous>, transform_indices = @transform_5, window_bounds = array<i64: 128, 128>}, {pipeline_mode = #tpu.pipeline_mode<synchronous>, transform_indices = @transform_6, window_bounds = array<i64: 1, 128>}, {pipeline_mode = #tpu.pipeline_mode<synchronous>, transform_indices = @transform_7, window_bounds = array<i64: 256, 128>}, {pipeline_mode = #tpu.pipeline_mode<synchronous>, transform_indices = @transform_8, window_bounds = array<i64: 1, 128>}, {pipeline_mode = #tpu.pipeline_mode<synchronous>, transform_indices = @transform_9, window_bounds = array<i64: 16, 128>}, {pipeline_mode = #tpu.pipeline_mode<synchronous>, transform_indices = @transform_10, window_bounds = array<i64: 16, 128>}]} {
    %c0 = arith.constant 0 : index
    %c0_0 = arith.constant 0 : index
    %0 = vector.load %arg1[%c0, %c0_0] : memref<16x768xbf16, #tpu.memory_space<vmem>>, vector<16x768xbf16>
    %c0_1 = arith.constant 0 : index
    %c0_2 = arith.constant 0 : index
    %1 = vector.load %arg2[%c0_1, %c0_2] : memref<768x256xbf16, #tpu.memory_space<vmem>>, vector<768x256xbf16>
    %cst = arith.constant dense<0.000000e+00> : vector<16x256xf32>
    %2 = tpu.matmul %0, %1, %cst {dimension_numbers = #tpu.dot_dimension_numbers<[1], [0], [0], [1], [0, 0, 1, 1], [], []>} : vector<16x768xbf16>, vector<768x256xbf16>, vector<16x256xf32> -> vector<16x256xf32>
    %c0_3 = arith.constant 0 : index
    %c0_4 = arith.constant 0 : index
    %3 = vector.load %arg3[%c0_3, %c0_4] : memref<1x256xf32, #tpu.memory_space<vmem>>, vector<1x256xf32>
    %4 = vector.broadcast %3 : vector<1x256xf32> to vector<16x256xf32>
    %5 = arith.addf %2, %4 : vector<16x256xf32>
    %cst_5 = arith.constant 0.000000e+00 : f32
    %6 = vector.broadcast %cst_5 : f32 to vector<16x256xf32>
    %7 = arith.maximumf %5, %6 : vector<16x256xf32>
    %8 = arith.truncf %7 : vector<16x256xf32> to vector<16x256xbf16>
    %c0_6 = arith.constant 0 : index
    %c0_7 = arith.constant 0 : index
    %9 = vector.load %arg4[%c0_6, %c0_7] : memref<256x128xbf16, #tpu.memory_space<vmem>>, vector<256x128xbf16>
    %cst_8 = arith.constant dense<0.000000e+00> : vector<16x128xf32>
    %10 = tpu.matmul %8, %9, %cst_8 {dimension_numbers = #tpu.dot_dimension_numbers<[1], [0], [0], [1], [0, 0, 1, 1], [], []>} : vector<16x256xbf16>, vector<256x128xbf16>, vector<16x128xf32> -> vector<16x128xf32>
    %c0_9 = arith.constant 0 : index
    %c0_10 = arith.constant 0 : index
    %11 = vector.load %arg5[%c0_9, %c0_10] : memref<1x128xf32, #tpu.memory_space<vmem>>, vector<1x128xf32>
    %12 = vector.broadcast %11 : vector<1x128xf32> to vector<16x128xf32>
    %13 = arith.addf %10, %12 : vector<16x128xf32>
    %cst_11 = arith.constant 0.000000e+00 : f32
    %14 = vector.broadcast %cst_11 : f32 to vector<16x128xf32>
    %15 = arith.maximumf %13, %14 : vector<16x128xf32>
    %16 = arith.truncf %15 : vector<16x128xf32> to vector<16x128xbf16>
    %c0_12 = arith.constant 0 : index
    %c0_13 = arith.constant 0 : index
    %17 = vector.load %arg6[%c0_12, %c0_13] : memref<128x128xbf16, #tpu.memory_space<vmem>>, vector<128x128xbf16>
    %cst_14 = arith.constant dense<0.000000e+00> : vector<16x128xf32>
    %18 = tpu.matmul %16, %17, %cst_14 {dimension_numbers = #tpu.dot_dimension_numbers<[1], [0], [0], [1], [0, 0, 1, 1], [], []>} : vector<16x128xbf16>, vector<128x128xbf16>, vector<16x128xf32> -> vector<16x128xf32>
    %c0_15 = arith.constant 0 : index
    %c0_16 = arith.constant 0 : index
    %19 = vector.load %arg7[%c0_15, %c0_16] : memref<1x128xf32, #tpu.memory_space<vmem>>, vector<1x128xf32>
    %20 = vector.broadcast %19 : vector<1x128xf32> to vector<16x128xf32>
    %21 = arith.addf %18, %20 : vector<16x128xf32>
    %c0_17 = arith.constant 0 : index
    %c0_18 = arith.constant 0 : index
    %22 = vector.load %arg10[%c0_17, %c0_18] : memref<16x128xf32, #tpu.memory_space<vmem>>, vector<16x128xf32>
    tpu.vector_store %arg10[%c0_17, %c0_18], %21 {strides = array<i32>} : memref<16x128xf32, #tpu.memory_space<vmem>>, vector<16x128xf32>,
    %c0_19 = arith.constant 0 : index
    %c0_20 = arith.constant 0 : index
    %23 = vector.load %arg8[%c0_19, %c0_20] : memref<256x128xbf16, #tpu.memory_space<vmem>>, vector<256x128xbf16>
    %cst_21 = arith.constant dense<0.000000e+00> : vector<16x128xf32>
    %24 = tpu.matmul %8, %23, %cst_21 {dimension_numbers = #tpu.dot_dimension_numbers<[1], [0], [0], [1], [0, 0, 1, 1], [], []>} : vector<16x256xbf16>, vector<256x128xbf16>, vector<16x128xf32> -> vector<16x128xf32>
    %c0_22 = arith.constant 0 : index
    %c0_23 = arith.constant 0 : index
    %25 = vector.load %arg9[%c0_22, %c0_23] : memref<1x128xf32, #tpu.memory_space<vmem>>, vector<1x128xf32>
    %26 = vector.broadcast %25 : vector<1x128xf32> to vector<16x128xf32>
    %27 = arith.addf %24, %26 : vector<16x128xf32>
    %c0_24 = arith.constant 0 : index
    %c0_25 = arith.constant 0 : index
    %28 = vector.load %arg11[%c0_24, %c0_25] : memref<16x128xf32, #tpu.memory_space<vmem>>, vector<16x128xf32>
    tpu.vector_store %arg11[%c0_24, %c0_25], %27 {strides = array<i32>} : memref<16x128xf32, #tpu.memory_space<vmem>>, vector<16x128xf32>,
    return
  }
  func.func @transform_0(%arg0: i32) -> (i32, i32) {
    %c0_i32 = arith.constant 0 : i32
    %c0_i32_0 = arith.constant 0 : i32
    %c0_i32_1 = arith.constant 0 : i32
    return %c0_i32, %c0_i32_0 : i32, i32
  }
  func.func @transform_1(%arg0: i32) -> (i32, i32) {
    %c0_i32 = arith.constant 0 : i32
    %c0_i32_0 = arith.constant 0 : i32
    %c0_i32_1 = arith.constant 0 : i32
    return %c0_i32, %c0_i32_0 : i32, i32
  }
  func.func @transform_2(%arg0: i32) -> (i32, i32) {
    %c0_i32 = arith.constant 0 : i32
    %c0_i32_0 = arith.constant 0 : i32
    %c0_i32_1 = arith.constant 0 : i32
    return %c0_i32, %c0_i32_0 : i32, i32
  }
  func.func @transform_3(%arg0: i32) -> (i32, i32) {
    %c0_i32 = arith.constant 0 : i32
    %c0_i32_0 = arith.constant 0 : i32
    %c0_i32_1 = arith.constant 0 : i32
    return %c0_i32, %c0_i32_0 : i32, i32
  }
  func.func @transform_4(%arg0: i32) -> (i32, i32) {
    %c0_i32 = arith.constant 0 : i32
    %c0_i32_0 = arith.constant 0 : i32
    %c0_i32_1 = arith.constant 0 : i32
    return %c0_i32, %c0_i32_0 : i32, i32
  }
  func.func @transform_5(%arg0: i32) -> (i32, i32) {
    %c0_i32 = arith.constant 0 : i32
    %c0_i32_0 = arith.constant 0 : i32
    %c0_i32_1 = arith.constant 0 : i32
    return %c0_i32, %c0_i32_0 : i32, i32
  }
  func.func @transform_6(%arg0: i32) -> (i32, i32) {
    %c0_i32 = arith.constant 0 : i32
    %c0_i32_0 = arith.constant 0 : i32
    %c0_i32_1 = arith.constant 0 : i32
    return %c0_i32, %c0_i32_0 : i32, i32
  }
  func.func @transform_7(%arg0: i32) -> (i32, i32) {
    %c0_i32 = arith.constant 0 : i32
    %c0_i32_0 = arith.constant 0 : i32
    %c0_i32_1 = arith.constant 0 : i32
    return %c0_i32, %c0_i32_0 : i32, i32
  }
  func.func @transform_8(%arg0: i32) -> (i32, i32) {
    %c0_i32 = arith.constant 0 : i32
    %c0_i32_0 = arith.constant 0 : i32
    %c0_i32_1 = arith.constant 0 : i32
    return %c0_i32, %c0_i32_0 : i32, i32
  }
  func.func @transform_9(%arg0: i32) -> (i32, i32) {
    %c0_i32 = arith.constant 0 : i32
    %c0_i32_0 = arith.constant 0 : i32
    %c0_i32_1 = arith.constant 0 : i32
    return %c0_i32, %c0_i32_0 : i32, i32
  }
  func.func @transform_10(%arg0: i32) -> (i32, i32) {
    %c0_i32 = arith.constant 0 : i32
    %c0_i32_0 = arith.constant 0 : i32
    %c0_i32_1 = arith.constant 0 : i32
    return %c0_i32, %c0_i32_0 : i32, i32
  }
}

</mosaic_0001>

<llo_original>
// kernel: ganin_forward.3
$region0: #{ganin_forward.3}
  #allocation0 [shape = 'u32[]', space=smem, size = 0x4, offset = 0x4, fixed_abs, tag = 'smem constant byte address 0x4 - core index']
  #allocation1 [shape = 'u32[144,128]{1,0:T(1,128)}', space=vmem, size = 0x12000, scoped, tag = 'internal scratch']
  %s0 = inlined_call_operand.vmem [shape: bf16[1152,25], index: 0, kind: input, shape index: {}]
  %s1 = inlined_call_operand.vmem [shape: bf16[25,128], index: 1, kind: input, shape index: {}]
  %s2 = inlined_call_operand.vmem [shape: f32[1,128], index: 2, kind: input, shape index: {}]
  %s3 = inlined_call_operand.vmem [shape: bf16[1152,128], index: 3, kind: output, shape index: {}]
  %s4 = sld [smem:[#allocation0]]
  $region89: #{ganin_forward.3} parent=0
    _
  %s6 = ssub.s32 1, %s4
  %s7 = scalar_select 0, %s6, %s4
  $region1: #{ganin_forward.3} parent=0
    #allocation2 [shape = 'u8[262144]{0}', space=vmem, size = 0x40000, scoped, tag = 'output window, operand 0']
    loop: start=0, step=1, limit=5
    $region2: #{ganin_forward.3} parent=1 // loop_pre_header
      _
    $region3: #{ganin_forward.3} parent=1 // loop_header
      %s9 = sphi 0, %s13
      %p10 = scmp.ge.s32.totalorder %s9, 5
      %s19 = sphi 0, %s21
      %s22 = sphi 0, %s19
      %s23 = sphi 0, %s22
      %s39 = sphi 0, %s23
      %s43 = sphi 0, %s43
      %s45 = sphi 0, %s43
      %s46 = sphi 0, %s45
      %s60 = sphi 0, %s46
      %s64 = sphi 0, %s64
      %s66 = sphi 0, %s64
      %s67 = sphi 0, %s66
      %s81 = sphi 0, %s67
      %s87 = sphi 0, %s89
      %s90 = sphi 0, %s87
      %s91 = sphi 0, %s90
      %s107 = sphi 0, %s91
    $region4: #{ganin_forward.3} parent=1 // loop_header_branch
      %12 = sbr.rel (%p10) target = $region8
    $region5: #{ganin_forward.3} parent=1 // loop_body
      %s14 = ssub.s32 %s9, 1
      %s15 = ssub.s32 %s9, 2
      %s16 = sadd.s32 %s9, 1
      %s17 = ssub.s32 %s9, %s16
      %p18 = scmp.eq.s32.totalorder %s17, 0
      %s20 = sadd.s32 %s19, 1
      %s21 = scalar_select %p18, %s19, %s20
      %p24 = pneg %p18
      %p25 = scmp.eq.s32.totalorder %s9, 2
      %p26 = por %p24, %p25
      %p27 = scmp.ne.s32.totalorder %s19, %s22
      %p28 = scmp.eq.s32.totalorder %s9, 0
      %p29 = por %p27, %p28
      %p30 = scmp.ne.s32.totalorder %s19, %s22
      %p31 = scmp.eq.s32.totalorder %s14, 2
      %p32 = por %p30, %p31
      %p33 = scmp.ne.s32.totalorder %s22, %s23
      %p34 = scmp.eq.s32.totalorder %s14, 0
      %p35 = por %p33, %p34
      %p36 = scmp.ne.s32.totalorder %s22, %s23
      %p37 = scmp.eq.s32.totalorder %s15, 2
      %p38 = por %p36, %p37
      %p40 = scmp.ne.s32.totalorder %s23, %s39
      %p41 = scmp.eq.s32.totalorder %s15, 0
      %p42 = por %p40, %p41
      %s44 = sadd.s32 %s43, 1
      %p47 = scmp.eq.s32.totalorder %s9, 2
      %p48 = scmp.ne.s32.totalorder %s43, %s45
      %p49 = scmp.eq.s32.totalorder %s9, 0
      %p50 = por %p48, %p49
      %p51 = scmp.ne.s32.totalorder %s43, %s45
      %p52 = scmp.eq.s32.totalorder %s14, 2
      %p53 = por %p51, %p52
      %p54 = scmp.ne.s32.totalorder %s45, %s46
      %p55 = scmp.eq.s32.totalorder %s14, 0
      %p56 = por %p54, %p55
      %p57 = scmp.ne.s32.totalorder %s45, %s46
      %p58 = scmp.eq.s32.totalorder %s15, 2
      %p59 = por %p57, %p58
      %p61 = scmp.ne.s32.totalorder %s46, %s60
      %p62 = scmp.eq.s32.totalorder %s15, 0
      %p63 = por %p61, %p62
      %s65 = sadd.s32 %s64, 1
      %p68 = scmp.eq.s32.totalorder %s9, 2
      %p69 = scmp.ne.s32.totalorder %s64, %s66
      %p70 = scmp.eq.s32.totalorder %s9, 0
      %p71 = por %p69, %p70
      %p72 = scmp.ne.s32.totalorder %s64, %s66
      %p73 = scmp.eq.s32.totalorder %s14, 2
      %p74 = por %p72, %p73
      %p75 = scmp.ne.s32.totalorder %s66, %s67
      %p76 = scmp.eq.s32.totalorder %s14, 0
      %p77 = por %p75, %p76
      %p78 = scmp.ne.s32.totalorder %s66, %s67
      %p79 = scmp.eq.s32.totalorder %s15, 2
      %p80 = por %p78, %p79
      %p82 = scmp.ne.s32.totalorder %s67, %s81
      %p83 = scmp.eq.s32.totalorder %s15, 0
      %p84 = por %p82, %p83
      %s85 = ssub.s32 %s9, %s16
      %p86 = scmp.eq.s32.totalorder %s85, 0
      %s88 = sadd.s32 %s87, 1
      %s89 = scalar_select %p86, %s87, %s88
      %p92 = pneg %p86
      %p93 = scmp.eq.s32.totalorder %s9, 2
      %p94 = por %p92, %p93
      %p95 = scmp.ne.s32.totalorder %s87, %s90
      %p96 = scmp.eq.s32.totalorder %s9, 0
      %p97 = por %p95, %p96
      %p98 = scmp.ne.s32.totalorder %s87, %s90
      %p99 = scmp.eq.s32.totalorder %s14, 2
      %p100 = por %p98, %p99
      %p101 = scmp.ne.s32.totalorder %s90, %s91
      %p102 = scmp.eq.s32.totalorder %s14, 0
      %p103 = por %p101, %p102
      %p104 = scmp.ne.s32.totalorder %s90, %s91
      %p105 = scmp.eq.s32.totalorder %s15, 2
      %p106 = por %p104, %p105
      %p108 = scmp.ne.s32.totalorder %s91, %s107
      %p109 = scmp.eq.s32.totalorder %s15, 0
      %p110 = por %p108, %p109
      %p111 = scmp.le.s32.totalorder 1, %s9
      %p112 = scmp.lt.s32.totalorder %s9, 4
      %p113 = pnand %p111, %p112
      %p114 = pneg %p113
      // Predicated region
      $region9: #{ganin_forward.3} parent=5 // pred_check
        _
      $region10: #{ganin_forward.3} parent=5 // pred_check_branch
        %116 = sbr.rel (%p113) target = $region12
      $region11: #{ganin_forward.3} parent=5 // pred_region
        %s117 = ssub.s32 %s9, 1
        // Predicated region
        $region13: #{ganin_forward.3} parent=11 // pred_check
          %p118 = pneg %p56
        $region14: #{ganin_forward.3} parent=11 // pred_check_branch
          %120 = sbr.rel (%p118) target = $region16
        $region15: #{ganin_forward.3} parent=11 // pred_region
          _
        $region16: #{ganin_forward.3} parent=11 // pred_fallthru
          _
        // Predicated region
        $region17: #{ganin_forward.3} parent=11 // pred_check
          %p121 = pneg %p77
        $region18: #{ganin_forward.3} parent=11 // pred_check_branch
          %123 = sbr.rel (%p121) target = $region20
        $region19: #{ganin_forward.3} parent=11 // pred_region
          _
        $region20: #{ganin_forward.3} parent=11 // pred_fallthru
          _
      $region12: #{ganin_forward.3} parent=5 // pred_fallthru
        _
      %p124 = scmp.lt.s32.totalorder %s9, 3
      // Predicated region
      $region21: #{ganin_forward.3} parent=5 // pred_check
        %p125 = pneg %p124
      $region22: #{ganin_forward.3} parent=5 // pred_check_branch
        %127 = sbr.rel (%p125) target = $region24
      $region23: #{ganin_forward.3} parent=5 // pred_region
        // Predicated region
        $region25: #{ganin_forward.3} parent=23 // pred_check
          %p128 = pneg %p29
        $region26: #{ganin_forward.3} parent=23 // pred_check_branch
          %130 = sbr.rel (%p128) target = $region28
        $region27: #{ganin_forward.3} parent=23 // pred_region
          %s131 = smul.u32 64, %s9
          %s132 = ssub.s32 144, %s131
          %p133 = scmp.lt.s32.totalorder %s132, 64
          %s134 = scalar_select %p133, %s132, 64
          %s135 = smul.u32 64, %s134
          %p136 = scmp.lt.s32.totalorder %s131, 143
          %s137 = scalar_select %p136, %s131, 143
          %s138 = smul.addr %s137, 4
          %s139 = scalar_lea.vmem %s0, %s138
          %s140 = smul.u32 64, %s9
          %s141 = ssub.s32 144, %s140
          %p142 = scmp.lt.s32.totalorder %s141, 64
          %s143 = scalar_select %p142, %s141, 64
          %s144 = smul.u32 64, %s143
        $region28: #{ganin_forward.3} parent=23 // pred_fallthru
          _
      $region24: #{ganin_forward.3} parent=5 // pred_fallthru
        _
      %p145 = scmp.le.s32.totalorder 1, %s9
      %p146 = scmp.lt.s32.totalorder %s9, 4
      %p147 = pnand %p145, %p146
      %p148 = pneg %p147
      // Predicated region
      $region29: #{ganin_forward.3} parent=5 // pred_check
        _
      $region30: #{ganin_forward.3} parent=5 // pred_check_branch
        %150 = sbr.rel (%p147) target = $region32
      $region31: #{ganin_forward.3} parent=5 // pred_region
        %s151 = ssub.s32 %s9, 1
        %s152 = smul.u32 64, %s14
        %s153 = ssub.s32 144, %s152
        %p154 = scmp.lt.s32.totalorder %s153, 64
        %s155 = scalar_select %p154, %s153, 64
        %s156 = smul.u32 64, %s155
        %p157 = scmp.lt.s32.totalorder %s152, 143
        %s158 = scalar_select %p157, %s152, 143
        %s159 = smul.addr %s158, 4
        %s160 = scalar_lea.vmem %s0, %s159
        %p161 = pneg %p35
        %p162 = pneg %p32
        %p163 = pneg %p56
        %p164 = pneg %p53
        %p165 = pneg %p77
        %p166 = pneg %p74
        %p167 = pneg %p103
        %p168 = pneg %p100
        %s169 = sand.u32 %s90, 1
        %s170 = sand.u32 %s90, 1
        %s171 = smul.addr %s170, 256
        %s172 = scalar_lea.vmem [#allocation2], %s171
        %s173 = smul.u32 64, %s14
        %s174 = ssub.s32 144, %s173
        %p175 = scmp.lt.s32.totalorder %s174, 64
        %s176 = scalar_select %p175, %s174, 64
        %s177 = smul.u32 64, %s176
        %p178 = scmp.lt.s32.totalorder %s173, 143
        %s179 = scalar_select %p178, %s173, 143
        %s180 = smul.addr %s179, 4
        %s181 = scalar_lea.vmem %s0, %s180
        %s182 = smul.u32 64, %s14
        %s183 = ssub.s32 144, %s182
        %p184 = scmp.lt.s32.totalorder %s183, 64
        %s185 = scalar_select %p184, %s183, 64
        %s186 = smul.u32 64, %s185
        %s187 = smul.u32 64, %s14
        %s188 = ssub.s32 144, %s187
        %p189 = scmp.lt.s32.totalorder %s188, 64
        %s190 = scalar_select %p189, %s188, 64
        %s191 = smul.u32 64, %s190
        %v193 = vld [vmem:[%s181] sm:$0xf]
        %v194 = vld [vmem:[%s181 + $0x4] sm:$0xf]
        %v195 = vld [vmem:[%s181 + $0x8] sm:$0xf]
        %v196 = vld [vmem:[%s181 + $0xc] sm:$0xf]
        %v197 = vld [vmem:[%s181 + $0x10] sm:$0xf]
        %v198 = vld [vmem:[%s181 + $0x14] sm:$0xf]
        %v199 = vld [vmem:[%s181 + $0x18] sm:$0xf]
        %v200 = vld [vmem:[%s181 + $0x1c] sm:$0xf]
        %v201 = vld [vmem:[%s181 + $0x20] sm:$0xf]
        %v202 = vld [vmem:[%s181 + $0x24] sm:$0xf]
        %v203 = vld [vmem:[%s181 + $0x28] sm:$0xf]
        %v204 = vld [vmem:[%s181 + $0x2c] sm:$0xf]
        %v205 = vld [vmem:[%s181 + $0x30] sm:$0xf]
        %v206 = vld [vmem:[%s181 + $0x34] sm:$0xf]
        %v207 = vld [vmem:[%s181 + $0x38] sm:$0xf]
        %v208 = vld [vmem:[%s181 + $0x3c] sm:$0xf]
        %v209 = vld [vmem:[%s181 + $0x40] sm:$0xf]
        %v210 = vld [vmem:[%s181 + $0x44] sm:$0xf]
        %v211 = vld [vmem:[%s181 + $0x48] sm:$0xf]
        %v212 = vld [vmem:[%s181 + $0x4c] sm:$0xf]
        %v213 = vld [vmem:[%s181 + $0x50] sm:$0xf]
        %v214 = vld [vmem:[%s181 + $0x54] sm:$0xf]
        %v215 = vld [vmem:[%s181 + $0x58] sm:$0xf]
        %v216 = vld [vmem:[%s181 + $0x5c] sm:$0xf]
        %v217 = vld [vmem:[%s181 + $0x60] sm:$0xf]
        %v218 = vld [vmem:[%s181 + $0x64] sm:$0xf]
        %v219 = vld [vmem:[%s181 + $0x68] sm:$0xf]
        %v220 = vld [vmem:[%s181 + $0x6c] sm:$0xf]
        %v221 = vld [vmem:[%s181 + $0x70] sm:$0xf]
        %v222 = vld [vmem:[%s181 + $0x74] sm:$0xf]
        %v223 = vld [vmem:[%s181 + $0x78] sm:$0xf]
        %v224 = vld [vmem:[%s181 + $0x7c] sm:$0xf]
        %v225 = vld [vmem:[%s181 + $0x80] sm:$0xf]
        %v226 = vld [vmem:[%s181 + $0x84] sm:$0xf]
        %v227 = vld [vmem:[%s181 + $0x88] sm:$0xf]
        %v228 = vld [vmem:[%s181 + $0x8c] sm:$0xf]
        %v229 = vld [vmem:[%s181 + $0x90] sm:$0xf]
        %v230 = vld [vmem:[%s181 + $0x94] sm:$0xf]
        %v231 = vld [vmem:[%s181 + $0x98] sm:$0xf]
        %v232 = vld [vmem:[%s181 + $0x9c] sm:$0xf]
        %v233 = vld [vmem:[%s181 + $0xa0] sm:$0xf]
        %v234 = vld [vmem:[%s181 + $0xa4] sm:$0xf]
        %v235 = vld [vmem:[%s181 + $0xa8] sm:$0xf]
        %v236 = vld [vmem:[%s181 + $0xac] sm:$0xf]
        %v237 = vld [vmem:[%s181 + $0xb0] sm:$0xf]
        %v238 = vld [vmem:[%s181 + $0xb4] sm:$0xf]
        %v239 = vld [vmem:[%s181 + $0xb8] sm:$0xf]
        %v240 = vld [vmem:[%s181 + $0xbc] sm:$0xf]
        %v241 = vld [vmem:[%s181 + $0xc0] sm:$0xf]
        %v242 = vld [vmem:[%s181 + $0xc4] sm:$0xf]
        %v243 = vld [vmem:[%s181 + $0xc8] sm:$0xf]
        %v244 = vld [vmem:[%s181 + $0xcc] sm:$0xf]
        %v245 = vld [vmem:[%s181 + $0xd0] sm:$0xf]
        %v246 = vld [vmem:[%s181 + $0xd4] sm:$0xf]
        %v247 = vld [vmem:[%s181 + $0xd8] sm:$0xf]
        %v248 = vld [vmem:[%s181 + $0xdc] sm:$0xf]
        %v249 = vld [vmem:[%s181 + $0xe0] sm:$0xf]
        %v250 = vld [vmem:[%s181 + $0xe4] sm:$0xf]
        %v251 = vld [vmem:[%s181 + $0xe8] sm:$0xf]
        %v252 = vld [vmem:[%s181 + $0xec] sm:$0xf]
        %v253 = vld [vmem:[%s181 + $0xf0] sm:$0xf]
        %v254 = vld [vmem:[%s181 + $0xf4] sm:$0xf]
        %v255 = vld [vmem:[%s181 + $0xf8] sm:$0xf]
        %v256 = vld [vmem:[%s181 + $0xfc] sm:$0xf]
        %v257 = vld [vmem:[%s1] sm:$0xf]
        %v258 = vld [vmem:[%s1 + $0x4] sm:$0xf]
        %v259 = vld [vmem:[%s1 + $0x8] sm:$0xf]
        %v260 = vld [vmem:[%s1 + $0xc] sm:$0x1]
        %v261 = vld [vmem:[%s2] sm:$0x1]
        %v263 = vlaneseq
        %v264 = vshrl.u32 %v263, 7
        %v265 = vsub.s32 0, %v264
        %v266 = vrot.slane %v261, %v265
        %v332 = vunpack.c.l.b16 %v193
        %v333 = vunpack.c.l.b16 %v194
        %v334 = vunpack.c.l.b16 %v195
        %v335 = vunpack.c.l.b16 %v196
        %v336 = vunpack.c.l.b16 %v197
        %v337 = vunpack.c.l.b16 %v198
        %v338 = vunpack.c.l.b16 %v199
        %v339 = vunpack.c.l.b16 %v200
        %v340 = vunpack.c.l.b16 %v201
        %v341 = vunpack.c.l.b16 %v202
        %v342 = vunpack.c.l.b16 %v203
        %v343 = vunpack.c.l.b16 %v204
        %v344 = vunpack.c.l.b16 %v205
        %v345 = vunpack.c.l.b16 %v206
        %v346 = vunpack.c.l.b16 %v207
        %v347 = vunpack.c.l.b16 %v208
        %v348 = vunpack.c.l.b16 %v209
        %v349 = vunpack.c.l.b16 %v210
        %v350 = vunpack.c.l.b16 %v211
        %v351 = vunpack.c.l.b16 %v212
        %v352 = vunpack.c.l.b16 %v213
        %v353 = vunpack.c.l.b16 %v214
        %v354 = vunpack.c.l.b16 %v215
        %v355 = vunpack.c.l.b16 %v216
        %v356 = vunpack.c.l.b16 %v217
        %v357 = vunpack.c.l.b16 %v218
        %v358 = vunpack.c.l.b16 %v219
        %v359 = vunpack.c.l.b16 %v220
        %v360 = vunpack.c.l.b16 %v221
        %v361 = vunpack.c.l.b16 %v222
        %v362 = vunpack.c.l.b16 %v223
        %v363 = vunpack.c.l.b16 %v224
        %v364 = vunpack.c.l.b16 %v225
        %v365 = vunpack.c.l.b16 %v226
        %v366 = vunpack.c.l.b16 %v227
        %v367 = vunpack.c.l.b16 %v228
        %v368 = vunpack.c.l.b16 %v229
        %v369 = vunpack.c.l.b16 %v230
        %v370 = vunpack.c.l.b16 %v231
        %v371 = vunpack.c.l.b16 %v232
        %v372 = vunpack.c.l.b16 %v233
        %v373 = vunpack.c.l.b16 %v234
        %v374 = vunpack.c.l.b16 %v235
        %v375 = vunpack.c.l.b16 %v236
        %v376 = vunpack.c.l.b16 %v237
        %v377 = vunpack.c.l.b16 %v238
        %v378 = vunpack.c.l.b16 %v239
        %v379 = vunpack.c.l.b16 %v240
        %v380 = vunpack.c.l.b16 %v241
        %v381 = vunpack.c.l.b16 %v242
        %v382 = vunpack.c.l.b16 %v243
        %v383 = vunpack.c.l.b16 %v244
        %v384 = vunpack.c.l.b16 %v245
        %v385 = vunpack.c.l.b16 %v246
        %v386 = vunpack.c.l.b16 %v247
        %v387 = vunpack.c.l.b16 %v248
        %v388 = vunpack.c.l.b16 %v249
        %v389 = vunpack.c.l.b16 %v250
        %v390 = vunpack.c.l.b16 %v251
        %v391 = vunpack.c.l.b16 %v252
        %v392 = vunpack.c.l.b16 %v253
        %v393 = vunpack.c.l.b16 %v254
        %v394 = vunpack.c.l.b16 %v255
        %v395 = vunpack.c.l.b16 %v256
        %v396 = vpack.c.b16 %v333, %v332
        %v397 = vpack.c.b16 %v335, %v334
        %v398 = vpack.c.b16 %v337, %v336
        %v399 = vpack.c.b16 %v339, %v338
        %v400 = vpack.c.b16 %v341, %v340
        %v401 = vpack.c.b16 %v343, %v342
        %v402 = vpack.c.b16 %v345, %v344
        %v403 = vpack.c.b16 %v347, %v346
        %v404 = vpack.c.b16 %v349, %v348
        %v405 = vpack.c.b16 %v351, %v350
        %v406 = vpack.c.b16 %v353, %v352
        %v407 = vpack.c.b16 %v355, %v354
        %v408 = vpack.c.b16 %v357, %v356
        %v409 = vpack.c.b16 %v359, %v358
        %v410 = vpack.c.b16 %v361, %v360
        %v411 = vpack.c.b16 %v363, %v362
        %v412 = vpack.c.b16 %v365, %v364
        %v413 = vpack.c.b16 %v367, %v366
        %v414 = vpack.c.b16 %v369, %v368
        %v415 = vpack.c.b16 %v371, %v370
        %v416 = vpack.c.b16 %v373, %v372
        %v417 = vpack.c.b16 %v375, %v374
        %v418 = vpack.c.b16 %v377, %v376
        %v419 = vpack.c.b16 %v379, %v378
        %v420 = vpack.c.b16 %v381, %v380
        %v421 = vpack.c.b16 %v383, %v382
        %v422 = vpack.c.b16 %v385, %v384
        %v423 = vpack.c.b16 %v387, %v386
        %v424 = vpack.c.b16 %v389, %v388
        %v425 = vpack.c.b16 %v391, %v390
        %v426 = vpack.c.b16 %v393, %v392
        %v427 = vpack.c.b16 %v395, %v394
        %v432 = vunpack.c.l.b16 %v257
        %v433 = vunpack.c.l.b16 %v258
        %v434 = vunpack.c.l.b16 %v259
        %v435 = vunpack.c.l.b16 %v260
        %v436 = vpack.c.b16 %v433, %v432
        %v437 = vpack.c.b16 %v435, %v434
        %vm439 = vcmask 203776
        %v441 = vsel %vm439, %v396, 0
        %v444 = vsel %vm439, %v397, 0
        %v447 = vsel %vm439, %v398, 0
        %v450 = vsel %vm439, %v399, 0
        %v453 = vsel %vm439, %v400, 0
        %v456 = vsel %vm439, %v401, 0
        %v459 = vsel %vm439, %v402, 0
        %v462 = vsel %vm439, %v403, 0
        %v465 = vsel %vm439, %v404, 0
        %v468 = vsel %vm439, %v405, 0
        %v471 = vsel %vm439, %v406, 0
        %v474 = vsel %vm439, %v407, 0
        %v477 = vsel %vm439, %v408, 0
        %v480 = vsel %vm439, %v409, 0
        %v483 = vsel %vm439, %v410, 0
        %v486 = vsel %vm439, %v411, 0
        %v489 = vsel %vm439, %v412, 0
        %v492 = vsel %vm439, %v413, 0
        %v495 = vsel %vm439, %v414, 0
        %v498 = vsel %vm439, %v415, 0
        %v501 = vsel %vm439, %v416, 0
        %v504 = vsel %vm439, %v417, 0
        %v507 = vsel %vm439, %v418, 0
        %v510 = vsel %vm439, %v419, 0
        %v513 = vsel %vm439, %v420, 0
        %v516 = vsel %vm439, %v421, 0
        %v519 = vsel %vm439, %v422, 0
        %v522 = vsel %vm439, %v423, 0
        %v525 = vsel %vm439, %v424, 0
        %v528 = vsel %vm439, %v425, 0
        %v531 = vsel %vm439, %v426, 0
        %v534 = vsel %vm439, %v427, 0
        %vm536 = vcmask 1043456
        %vm537 = vcmask 1044480
        %v538 = vsel %vm536, 4294967295, 65535
        %v539 = vsel %vm537, %v538, 0
        %v541 = vand.u32 %v437, %v539
        %543 = vmatprep.subr.bf16.mxu0 0
        %544 = vmatpush1.bf16.msra.mxu0 0
        %545 = vmatprep.subr.bf16.mxu0 0
        %546 = vmatpush1.bf16.msra.mxu0 0
        %547 = vmatprep.subr.bf16.mxu0 0
        %548 = vmatpush1.bf16.msra.mxu0 0
        %549 = vmatprep.subr.bf16.mxu0 0
        %550 = vmatpush1.bf16.msra.mxu0 0
        %551 = vmatprep.subr.bf16.mxu0 0
        %552 = vmatpush1.bf16.msra.mxu0 0
        %553 = vmatprep.subr.bf16.mxu0 0
        %554 = vmatpush1.bf16.msra.mxu0 0
        %555 = vmatprep.subr.bf16.mxu0 0
        %556 = vmatpush1.bf16.msra.mxu0 %v541
        %557 = vmatprep.subr.bf16.mxu0 0
        %558 = vmatpush1.bf16.msra.mxu0 %v436
        %559 = vmatprep.subr.bf16.mxu0 0
        %560 = vmatpush2.bf16.msra.mxu0 0
        %561 = vmatprep.subr.bf16.mxu0 0
        %562 = vmatpush2.bf16.msra.mxu0 0
        %563 = vmatprep.subr.bf16.mxu0 0
        %564 = vmatpush2.bf16.msra.mxu0 0
        %565 = vmatprep.subr.bf16.mxu0 0
        %566 = vmatpush2.bf16.msra.mxu0 0
        %567 = vmatprep.subr.bf16.mxu0 0
        %568 = vmatpush2.bf16.msra.mxu0 0
        %569 = vmatprep.subr.bf16.mxu0 0
        %570 = vmatpush2.bf16.msra.mxu0 0
        %571 = vmatprep.subr.bf16.mxu0 0
        %572 = vmatpush2.bf16.msra.mxu0 0
        %573 = vmatprep.subr.bf16.mxu0 0
        %574 = vmatpush2.bf16.msra.mxu0 0
        %575 = vmatprep.mubr.bf16.mxu0 0
        %576 = vmatmul.mubr.bf16.gmra.mxu0 %v441
        %v577 = vpop.f32.mrf.mxu0
        %v578 = vadd.f32 %v266, %v577
        %v579 = vpop.f32.mrf.mxu0
        %v580 = vpop.f32.mrf.mxu0
        %v581 = vadd.f32 %v266, %v580
        %v582 = vpop.f32.mrf.mxu0
        %583 = vmatprep.mubr.bf16.mxu0 0
        %584 = vmatmul.mubr.bf16.gmra.mxu0 %v444
        %v585 = vpop.f32.mrf.mxu0
        %v586 = vadd.f32 %v266, %v585
        %v587 = vpop.f32.mrf.mxu0
        %v588 = vpop.f32.mrf.mxu0
        %v589 = vadd.f32 %v266, %v588
        %v590 = vpop.f32.mrf.mxu0
        %591 = vmatprep.mubr.bf16.mxu0 0
        %592 = vmatmul.mubr.bf16.gmra.mxu0 %v447
        %v593 = vpop.f32.mrf.mxu0
        %v594 = vadd.f32 %v266, %v593
        %v595 = vpop.f32.mrf.mxu0
        %v596 = vpop.f32.mrf.mxu0
        %v597 = vadd.f32 %v266, %v596
        %v598 = vpop.f32.mrf.mxu0
        %599 = vmatprep.mubr.bf16.mxu0 0
        %600 = vmatmul.mubr.bf16.gmra.mxu0 %v450
        %v601 = vpop.f32.mrf.mxu0
        %v602 = vadd.f32 %v266, %v601
        %v603 = vpop.f32.mrf.mxu0
        %v604 = vpop.f32.mrf.mxu0
        %v605 = vadd.f32 %v266, %v604
        %v606 = vpop.f32.mrf.mxu0
        %607 = vmatprep.mubr.bf16.mxu0 0
        %608 = vmatmul.mubr.bf16.gmra.mxu0 %v453
        %v609 = vpop.f32.mrf.mxu0
        %v610 = vadd.f32 %v266, %v609
        %v611 = vpop.f32.mrf.mxu0
        %v612 = vpop.f32.mrf.mxu0
        %v613 = vadd.f32 %v266, %v612
        %v614 = vpop.f32.mrf.mxu0
        %615 = vmatprep.mubr.bf16.mxu0 0
        %616 = vmatmul.mubr.bf16.gmra.mxu0 %v456
        %v617 = vpop.f32.mrf.mxu0
        %v618 = vadd.f32 %v266, %v617
        %v619 = vpop.f32.mrf.mxu0
        %v620 = vpop.f32.mrf.mxu0
        %v621 = vadd.f32 %v266, %v620
        %v622 = vpop.f32.mrf.mxu0
        %623 = vmatprep.mubr.bf16.mxu0 0
        %624 = vmatmul.mubr.bf16.gmra.mxu0 %v459
        %v625 = vpop.f32.mrf.mxu0
        %v626 = vadd.f32 %v266, %v625
        %v627 = vpop.f32.mrf.mxu0
        %v628 = vpop.f32.mrf.mxu0
        %v629 = vadd.f32 %v266, %v628
        %v630 = vpop.f32.mrf.mxu0
        %631 = vmatprep.mubr.bf16.mxu0 0
        %632 = vmatmul.mubr.bf16.gmra.mxu0 %v462
        %v633 = vpop.f32.mrf.mxu0
        %v634 = vadd.f32 %v266, %v633
        %v635 = vpop.f32.mrf.mxu0
        %v636 = vpop.f32.mrf.mxu0
        %v637 = vadd.f32 %v266, %v636
        %v638 = vpop.f32.mrf.mxu0
        %639 = vmatprep.mubr.bf16.mxu0 0
        %640 = vmatmul.mubr.bf16.gmra.mxu0 %v465
        %v641 = vpop.f32.mrf.mxu0
        %v642 = vadd.f32 %v266, %v641
        %v643 = vpop.f32.mrf.mxu0
        %v644 = vpop.f32.mrf.mxu0
        %v645 = vadd.f32 %v266, %v644
        %v646 = vpop.f32.mrf.mxu0
        %647 = vmatprep.mubr.bf16.mxu0 0
        %648 = vmatmul.mubr.bf16.gmra.mxu0 %v468
        %v649 = vpop.f32.mrf.mxu0
        %v650 = vadd.f32 %v266, %v649
        %v651 = vpop.f32.mrf.mxu0
        %v652 = vpop.f32.mrf.mxu0
        %v653 = vadd.f32 %v266, %v652
        %v654 = vpop.f32.mrf.mxu0
        %655 = vmatprep.mubr.bf16.mxu0 0
        %656 = vmatmul.mubr.bf16.gmra.mxu0 %v471
        %v657 = vpop.f32.mrf.mxu0
        %v658 = vadd.f32 %v266, %v657
        %v659 = vpop.f32.mrf.mxu0
        %v660 = vpop.f32.mrf.mxu0
        %v661 = vadd.f32 %v266, %v660
        %v662 = vpop.f32.mrf.mxu0
        %663 = vmatprep.mubr.bf16.mxu0 0
        %664 = vmatmul.mubr.bf16.gmra.mxu0 %v474
        %v665 = vpop.f32.mrf.mxu0
        %v666 = vadd.f32 %v266, %v665
        %v667 = vpop.f32.mrf.mxu0
        %v668 = vpop.f32.mrf.mxu0
        %v669 = vadd.f32 %v266, %v668
        %v670 = vpop.f32.mrf.mxu0
        %671 = vmatprep.mubr.bf16.mxu0 0
        %672 = vmatmul.mubr.bf16.gmra.mxu0 %v477
        %v673 = vpop.f32.mrf.mxu0
        %v674 = vadd.f32 %v266, %v673
        %v675 = vpop.f32.mrf.mxu0
        %v676 = vpop.f32.mrf.mxu0
        %v677 = vadd.f32 %v266, %v676
        %v678 = vpop.f32.mrf.mxu0
        %679 = vmatprep.mubr.bf16.mxu0 0
        %680 = vmatmul.mubr.bf16.gmra.mxu0 %v480
        %v681 = vpop.f32.mrf.mxu0
        %v682 = vadd.f32 %v266, %v681
        %v683 = vpop.f32.mrf.mxu0
        %v684 = vpop.f32.mrf.mxu0
        %v685 = vadd.f32 %v266, %v684
        %v686 = vpop.f32.mrf.mxu0
        %687 = vmatprep.mubr.bf16.mxu0 0
        %688 = vmatmul.mubr.bf16.gmra.mxu0 %v483
        %v689 = vpop.f32.mrf.mxu0
        %v690 = vadd.f32 %v266, %v689
        %v691 = vpop.f32.mrf.mxu0
        %v692 = vpop.f32.mrf.mxu0
        %v693 = vadd.f32 %v266, %v692
        %v694 = vpop.f32.mrf.mxu0
        %695 = vmatprep.mubr.bf16.mxu0 0
        %696 = vmatmul.mubr.bf16.gmra.mxu0 %v486
        %v697 = vpop.f32.mrf.mxu0
        %v698 = vadd.f32 %v266, %v697
        %v699 = vpop.f32.mrf.mxu0
        %v700 = vpop.f32.mrf.mxu0
        %v701 = vadd.f32 %v266, %v700
        %v702 = vpop.f32.mrf.mxu0
        %703 = vmatprep.mubr.bf16.mxu0 0
        %704 = vmatmul.mubr.bf16.gmra.mxu0 %v489
        %v705 = vpop.f32.mrf.mxu0
        %v706 = vadd.f32 %v266, %v705
        %v707 = vpop.f32.mrf.mxu0
        %v708 = vpop.f32.mrf.mxu0
        %v709 = vadd.f32 %v266, %v708
        %v710 = vpop.f32.mrf.mxu0
        %711 = vmatprep.mubr.bf16.mxu0 0
        %712 = vmatmul.mubr.bf16.gmra.mxu0 %v492
        %v713 = vpop.f32.mrf.mxu0
        %v714 = vadd.f32 %v266, %v713
        %v715 = vpop.f32.mrf.mxu0
        %v716 = vpop.f32.mrf.mxu0
        %v717 = vadd.f32 %v266, %v716
        %v718 = vpop.f32.mrf.mxu0
        %719 = vmatprep.mubr.bf16.mxu0 0
        %720 = vmatmul.mubr.bf16.gmra.mxu0 %v495
        %v721 = vpop.f32.mrf.mxu0
        %v722 = vadd.f32 %v266, %v721
        %v723 = vpop.f32.mrf.mxu0
        %v724 = vpop.f32.mrf.mxu0
        %v725 = vadd.f32 %v266, %v724
        %v726 = vpop.f32.mrf.mxu0
        %727 = vmatprep.mubr.bf16.mxu0 0
        %728 = vmatmul.mubr.bf16.gmra.mxu0 %v498
        %v729 = vpop.f32.mrf.mxu0
        %v730 = vadd.f32 %v266, %v729
        %v731 = vpop.f32.mrf.mxu0
        %v732 = vpop.f32.mrf.mxu0
        %v733 = vadd.f32 %v266, %v732
        %v734 = vpop.f32.mrf.mxu0
        %735 = vmatprep.mubr.bf16.mxu0 0
        %736 = vmatmul.mubr.bf16.gmra.mxu0 %v501
        %v737 = vpop.f32.mrf.mxu0
        %v738 = vadd.f32 %v266, %v737
        %v739 = vpop.f32.mrf.mxu0
        %v740 = vpop.f32.mrf.mxu0
        %v741 = vadd.f32 %v266, %v740
        %v742 = vpop.f32.mrf.mxu0
        %743 = vmatprep.mubr.bf16.mxu0 0
        %744 = vmatmul.mubr.bf16.gmra.mxu0 %v504
        %v745 = vpop.f32.mrf.mxu0
        %v746 = vadd.f32 %v266, %v745
        %v747 = vpop.f32.mrf.mxu0
        %v748 = vpop.f32.mrf.mxu0
        %v749 = vadd.f32 %v266, %v748
        %v750 = vpop.f32.mrf.mxu0
        %751 = vmatprep.mubr.bf16.mxu0 0
        %752 = vmatmul.mubr.bf16.gmra.mxu0 %v507
        %v753 = vpop.f32.mrf.mxu0
        %v754 = vadd.f32 %v266, %v753
        %v755 = vpop.f32.mrf.mxu0
        %v756 = vpop.f32.mrf.mxu0
        %v757 = vadd.f32 %v266, %v756
        %v758 = vpop.f32.mrf.mxu0
        %759 = vmatprep.mubr.bf16.mxu0 0
        %760 = vmatmul.mubr.bf16.gmra.mxu0 %v510
        %v761 = vpop.f32.mrf.mxu0
        %v762 = vadd.f32 %v266, %v761
        %v763 = vpop.f32.mrf.mxu0
        %v764 = vpop.f32.mrf.mxu0
        %v765 = vadd.f32 %v266, %v764
        %v766 = vpop.f32.mrf.mxu0
        %767 = vmatprep.mubr.bf16.mxu0 0
        %768 = vmatmul.mubr.bf16.gmra.mxu0 %v513
        %v769 = vpop.f32.mrf.mxu0
        %v770 = vadd.f32 %v266, %v769
        %v771 = vpop.f32.mrf.mxu0
        %v772 = vpop.f32.mrf.mxu0
        %v773 = vadd.f32 %v266, %v772
        %v774 = vpop.f32.mrf.mxu0
        %775 = vmatprep.mubr.bf16.mxu0 0
        %776 = vmatmul.mubr.bf16.gmra.mxu0 %v516
        %v777 = vpop.f32.mrf.mxu0
        %v778 = vadd.f32 %v266, %v777
        %v779 = vpop.f32.mrf.mxu0
        %v780 = vpop.f32.mrf.mxu0
        %v781 = vadd.f32 %v266, %v780
        %v782 = vpop.f32.mrf.mxu0
        %783 = vmatprep.mubr.bf16.mxu0 0
        %784 = vmatmul.mubr.bf16.gmra.mxu0 %v519
        %v785 = vpop.f32.mrf.mxu0
        %v786 = vadd.f32 %v266, %v785
        %v787 = vpop.f32.mrf.mxu0
        %v788 = vpop.f32.mrf.mxu0
        %v789 = vadd.f32 %v266, %v788
        %v790 = vpop.f32.mrf.mxu0
        %791 = vmatprep.mubr.bf16.mxu0 0
        %792 = vmatmul.mubr.bf16.gmra.mxu0 %v522
        %v793 = vpop.f32.mrf.mxu0
        %v794 = vadd.f32 %v266, %v793
        %v795 = vpop.f32.mrf.mxu0
        %v796 = vpop.f32.mrf.mxu0
        %v797 = vadd.f32 %v266, %v796
        %v798 = vpop.f32.mrf.mxu0
        %799 = vmatprep.mubr.bf16.mxu0 0
        %800 = vmatmul.mubr.bf16.gmra.mxu0 %v525
        %v801 = vpop.f32.mrf.mxu0
        %v802 = vadd.f32 %v266, %v801
        %v803 = vpop.f32.mrf.mxu0
        %v804 = vpop.f32.mrf.mxu0
        %v805 = vadd.f32 %v266, %v804
        %v806 = vpop.f32.mrf.mxu0
        %807 = vmatprep.mubr.bf16.mxu0 0
        %808 = vmatmul.mubr.bf16.gmra.mxu0 %v528
        %v809 = vpop.f32.mrf.mxu0
        %v810 = vadd.f32 %v266, %v809
        %v811 = vpop.f32.mrf.mxu0
        %v812 = vpop.f32.mrf.mxu0
        %v813 = vadd.f32 %v266, %v812
        %v814 = vpop.f32.mrf.mxu0
        %815 = vmatprep.mubr.bf16.mxu0 0
        %816 = vmatmul.mubr.bf16.gmra.mxu0 %v531
        %v817 = vpop.f32.mrf.mxu0
        %v818 = vadd.f32 %v266, %v817
        %v819 = vpop.f32.mrf.mxu0
        %v820 = vpop.f32.mrf.mxu0
        %v821 = vadd.f32 %v266, %v820
        %v822 = vpop.f32.mrf.mxu0
        %823 = vmatprep.mubr.bf16.mxu0 0
        %824 = vmatmul.mubr.bf16.gmra.mxu0 %v534
        %v825 = vpop.f32.mrf.mxu0
        %v826 = vadd.f32 %v266, %v825
        %v827 = vpop.f32.mrf.mxu0
        %v828 = vpop.f32.mrf.mxu0
        %v829 = vadd.f32 %v266, %v828
        %v830 = vpop.f32.mrf.mxu0
        %831 = vdwg.mxu0
        %v832 = vmax.f32 %v578, 0.0
        %v833 = vmax.f32 %v581, 0.0
        %v834 = vmax.f32 %v586, 0.0
        %v835 = vmax.f32 %v589, 0.0
        %v836 = vmax.f32 %v594, 0.0
        %v837 = vmax.f32 %v597, 0.0
        %v838 = vmax.f32 %v602, 0.0
        %v839 = vmax.f32 %v605, 0.0
        %v840 = vmax.f32 %v610, 0.0
        %v841 = vmax.f32 %v613, 0.0
        %v842 = vmax.f32 %v618, 0.0
        %v843 = vmax.f32 %v621, 0.0
        %v844 = vmax.f32 %v626, 0.0
        %v845 = vmax.f32 %v629, 0.0
        %v846 = vmax.f32 %v634, 0.0
        %v847 = vmax.f32 %v637, 0.0
        %v848 = vmax.f32 %v642, 0.0
        %v849 = vmax.f32 %v645, 0.0
        %v850 = vmax.f32 %v650, 0.0
        %v851 = vmax.f32 %v653, 0.0
        %v852 = vmax.f32 %v658, 0.0
        %v853 = vmax.f32 %v661, 0.0
        %v854 = vmax.f32 %v666, 0.0
        %v855 = vmax.f32 %v669, 0.0
        %v856 = vmax.f32 %v674, 0.0
        %v857 = vmax.f32 %v677, 0.0
        %v858 = vmax.f32 %v682, 0.0
        %v859 = vmax.f32 %v685, 0.0
        %v860 = vmax.f32 %v690, 0.0
        %v861 = vmax.f32 %v693, 0.0
        %v862 = vmax.f32 %v698, 0.0
        %v863 = vmax.f32 %v701, 0.0
        %v864 = vmax.f32 %v706, 0.0
        %v865 = vmax.f32 %v709, 0.0
        %v866 = vmax.f32 %v714, 0.0
        %v867 = vmax.f32 %v717, 0.0
        %v868 = vmax.f32 %v722, 0.0
        %v869 = vmax.f32 %v725, 0.0
        %v870 = vmax.f32 %v730, 0.0
        %v871 = vmax.f32 %v733, 0.0
        %v872 = vmax.f32 %v738, 0.0
        %v873 = vmax.f32 %v741, 0.0
        %v874 = vmax.f32 %v746, 0.0
        %v875 = vmax.f32 %v749, 0.0
        %v876 = vmax.f32 %v754, 0.0
        %v877 = vmax.f32 %v757, 0.0
        %v878 = vmax.f32 %v762, 0.0
        %v879 = vmax.f32 %v765, 0.0
        %v880 = vmax.f32 %v770, 0.0
        %v881 = vmax.f32 %v773, 0.0
        %v882 = vmax.f32 %v778, 0.0
        %v883 = vmax.f32 %v781, 0.0
        %v884 = vmax.f32 %v786, 0.0
        %v885 = vmax.f32 %v789, 0.0
        %v886 = vmax.f32 %v794, 0.0
        %v887 = vmax.f32 %v797, 0.0
        %v888 = vmax.f32 %v802, 0.0
        %v889 = vmax.f32 %v805, 0.0
        %v890 = vmax.f32 %v810, 0.0
        %v891 = vmax.f32 %v813, 0.0
        %v892 = vmax.f32 %v818, 0.0
        %v893 = vmax.f32 %v821, 0.0
        %v894 = vmax.f32 %v826, 0.0
        %v895 = vmax.f32 %v829, 0.0
        %v896 = vpack.c.bf16 %v833, %v832
        %v897 = vpack.c.bf16 %v835, %v834
        %v898 = vpack.c.bf16 %v837, %v836
        %v899 = vpack.c.bf16 %v839, %v838
        %v900 = vpack.c.bf16 %v841, %v840
        %v901 = vpack.c.bf16 %v843, %v842
        %v902 = vpack.c.bf16 %v845, %v844
        %v903 = vpack.c.bf16 %v847, %v846
        %v904 = vpack.c.bf16 %v849, %v848
        %v905 = vpack.c.bf16 %v851, %v850
        %v906 = vpack.c.bf16 %v853, %v852
        %v907 = vpack.c.bf16 %v855, %v854
        %v908 = vpack.c.bf16 %v857, %v856
        %v909 = vpack.c.bf16 %v859, %v858
        %v910 = vpack.c.bf16 %v861, %v860
        %v911 = vpack.c.bf16 %v863, %v862
        %v912 = vpack.c.bf16 %v865, %v864
        %v913 = vpack.c.bf16 %v867, %v866
        %v914 = vpack.c.bf16 %v869, %v868
        %v915 = vpack.c.bf16 %v871, %v870
        %v916 = vpack.c.bf16 %v873, %v872
        %v917 = vpack.c.bf16 %v875, %v874
        %v918 = vpack.c.bf16 %v877, %v876
        %v919 = vpack.c.bf16 %v879, %v878
        %v920 = vpack.c.bf16 %v881, %v880
        %v921 = vpack.c.bf16 %v883, %v882
        %v922 = vpack.c.bf16 %v885, %v884
        %v923 = vpack.c.bf16 %v887, %v886
        %v924 = vpack.c.bf16 %v889, %v888
        %v925 = vpack.c.bf16 %v891, %v890
        %v926 = vpack.c.bf16 %v893, %v892
        %v927 = vpack.c.bf16 %v895, %v894
        %v960 = vunpack.c.l.b16 %v896
        %v961 = vunpack.c.h.b16 %v896
        %v962 = vunpack.c.l.b16 %v897
        %v963 = vunpack.c.h.b16 %v897
        %v964 = vunpack.c.l.b16 %v898
        %v965 = vunpack.c.h.b16 %v898
        %v966 = vunpack.c.l.b16 %v899
        %v967 = vunpack.c.h.b16 %v899
        %v968 = vunpack.c.l.b16 %v900
        %v969 = vunpack.c.h.b16 %v900
        %v970 = vunpack.c.l.b16 %v901
        %v971 = vunpack.c.h.b16 %v901
        %v972 = vunpack.c.l.b16 %v902
        %v973 = vunpack.c.h.b16 %v902
        %v974 = vunpack.c.l.b16 %v903
        %v975 = vunpack.c.h.b16 %v903
        %v976 = vunpack.c.l.b16 %v904
        %v977 = vunpack.c.h.b16 %v904
        %v978 = vunpack.c.l.b16 %v905
        %v979 = vunpack.c.h.b16 %v905
        %v980 = vunpack.c.l.b16 %v906
        %v981 = vunpack.c.h.b16 %v906
        %v982 = vunpack.c.l.b16 %v907
        %v983 = vunpack.c.h.b16 %v907
        %v984 = vunpack.c.l.b16 %v908
        %v985 = vunpack.c.h.b16 %v908
        %v986 = vunpack.c.l.b16 %v909
        %v987 = vunpack.c.h.b16 %v909
        %v988 = vunpack.c.l.b16 %v910
        %v989 = vunpack.c.h.b16 %v910
        %v990 = vunpack.c.l.b16 %v911
        %v991 = vunpack.c.h.b16 %v911
        %v992 = vunpack.c.l.b16 %v912
        %v993 = vunpack.c.h.b16 %v912
        %v994 = vunpack.c.l.b16 %v913
        %v995 = vunpack.c.h.b16 %v913
        %v996 = vunpack.c.l.b16 %v914
        %v997 = vunpack.c.h.b16 %v914
        %v998 = vunpack.c.l.b16 %v915
        %v999 = vunpack.c.h.b16 %v915
        %v1000 = vunpack.c.l.b16 %v916
        %v1001 = vunpack.c.h.b16 %v916
        %v1002 = vunpack.c.l.b16 %v917
        %v1003 = vunpack.c.h.b16 %v917
        %v1004 = vunpack.c.l.b16 %v918
        %v1005 = vunpack.c.h.b16 %v918
        %v1006 = vunpack.c.l.b16 %v919
        %v1007 = vunpack.c.h.b16 %v919
        %v1008 = vunpack.c.l.b16 %v920
        %v1009 = vunpack.c.h.b16 %v920
        %v1010 = vunpack.c.l.b16 %v921
        %v1011 = vunpack.c.h.b16 %v921
        %v1012 = vunpack.c.l.b16 %v922
        %v1013 = vunpack.c.h.b16 %v922
        %v1014 = vunpack.c.l.b16 %v923
        %v1015 = vunpack.c.h.b16 %v923
        %v1016 = vunpack.c.l.b16 %v924
        %v1017 = vunpack.c.h.b16 %v924
        %v1018 = vunpack.c.l.b16 %v925
        %v1019 = vunpack.c.h.b16 %v925
        %v1020 = vunpack.c.l.b16 %v926
        %v1021 = vunpack.c.h.b16 %v926
        %v1022 = vunpack.c.l.b16 %v927
        %v1023 = vunpack.c.h.b16 %v927
        %v1024 = vpack.c.b16 %v960, %v960
        %v1025 = vpack.c.b16 %v961, %v961
        %v1026 = vpack.c.b16 %v962, %v962
        %v1027 = vpack.c.b16 %v963, %v963
        %v1028 = vpack.c.b16 %v964, %v964
        %v1029 = vpack.c.b16 %v965, %v965
        %v1030 = vpack.c.b16 %v966, %v966
        %v1031 = vpack.c.b16 %v967, %v967
        %v1032 = vpack.c.b16 %v968, %v968
        %v1033 = vpack.c.b16 %v969, %v969
        %v1034 = vpack.c.b16 %v970, %v970
        %v1035 = vpack.c.b16 %v971, %v971
        %v1036 = vpack.c.b16 %v972, %v972
        %v1037 = vpack.c.b16 %v973, %v973
        %v1038 = vpack.c.b16 %v974, %v974
        %v1039 = vpack.c.b16 %v975, %v975
        %v1040 = vpack.c.b16 %v976, %v976
        %v1041 = vpack.c.b16 %v977, %v977
        %v1042 = vpack.c.b16 %v978, %v978
        %v1043 = vpack.c.b16 %v979, %v979
        %v1044 = vpack.c.b16 %v980, %v980
        %v1045 = vpack.c.b16 %v981, %v981
        %v1046 = vpack.c.b16 %v982, %v982
        %v1047 = vpack.c.b16 %v983, %v983
        %v1048 = vpack.c.b16 %v984, %v984
        %v1049 = vpack.c.b16 %v985, %v985
        %v1050 = vpack.c.b16 %v986, %v986
        %v1051 = vpack.c.b16 %v987, %v987
        %v1052 = vpack.c.b16 %v988, %v988
        %v1053 = vpack.c.b16 %v989, %v989
        %v1054 = vpack.c.b16 %v990, %v990
        %v1055 = vpack.c.b16 %v991, %v991
        %v1056 = vpack.c.b16 %v992, %v992
        %v1057 = vpack.c.b16 %v993, %v993
        %v1058 = vpack.c.b16 %v994, %v994
        %v1059 = vpack.c.b16 %v995, %v995
        %v1060 = vpack.c.b16 %v996, %v996
        %v1061 = vpack.c.b16 %v997, %v997
        %v1062 = vpack.c.b16 %v998, %v998
        %v1063 = vpack.c.b16 %v999, %v999
        %v1064 = vpack.c.b16 %v1000, %v1000
        %v1065 = vpack.c.b16 %v1001, %v1001
        %v1066 = vpack.c.b16 %v1002, %v1002
        %v1067 = vpack.c.b16 %v1003, %v1003
        %v1068 = vpack.c.b16 %v1004, %v1004
        %v1069 = vpack.c.b16 %v1005, %v1005
        %v1070 = vpack.c.b16 %v1006, %v1006
        %v1071 = vpack.c.b16 %v1007, %v1007
        %v1072 = vpack.c.b16 %v1008, %v1008
        %v1073 = vpack.c.b16 %v1009, %v1009
        %v1074 = vpack.c.b16 %v1010, %v1010
        %v1075 = vpack.c.b16 %v1011, %v1011
        %v1076 = vpack.c.b16 %v1012, %v1012
        %v1077 = vpack.c.b16 %v1013, %v1013
        %v1078 = vpack.c.b16 %v1014, %v1014
        %v1079 = vpack.c.b16 %v1015, %v1015
        %v1080 = vpack.c.b16 %v1016, %v1016
        %v1081 = vpack.c.b16 %v1017, %v1017
        %v1082 = vpack.c.b16 %v1018, %v1018
        %v1083 = vpack.c.b16 %v1019, %v1019
        %v1084 = vpack.c.b16 %v1020, %v1020
        %v1085 = vpack.c.b16 %v1021, %v1021
        %v1086 = vpack.c.b16 %v1022, %v1022
        %v1087 = vpack.c.b16 %v1023, %v1023
        %1152 = vst [vmem:[%s172] sm:$0xf] %v1024
        %1153 = vst [vmem:[%s172 + $0x4] sm:$0xf] %v1025
        %1154 = vst [vmem:[%s172 + $0x8] sm:$0xf] %v1026
        %1155 = vst [vmem:[%s172 + $0xc] sm:$0xf] %v1027
        %1156 = vst [vmem:[%s172 + $0x10] sm:$0xf] %v1028
        %1157 = vst [vmem:[%s172 + $0x14] sm:$0xf] %v1029
        %1158 = vst [vmem:[%s172 + $0x18] sm:$0xf] %v1030
        %1159 = vst [vmem:[%s172 + $0x1c] sm:$0xf] %v1031
        %1160 = vst [vmem:[%s172 + $0x20] sm:$0xf] %v1032
        %1161 = vst [vmem:[%s172 + $0x24] sm:$0xf] %v1033
        %1162 = vst [vmem:[%s172 + $0x28] sm:$0xf] %v1034
        %1163 = vst [vmem:[%s172 + $0x2c] sm:$0xf] %v1035
        %1164 = vst [vmem:[%s172 + $0x30] sm:$0xf] %v1036
        %1165 = vst [vmem:[%s172 + $0x34] sm:$0xf] %v1037
        %1166 = vst [vmem:[%s172 + $0x38] sm:$0xf] %v1038
        %1167 = vst [vmem:[%s172 + $0x3c] sm:$0xf] %v1039
        %1168 = vst [vmem:[%s172 + $0x40] sm:$0xf] %v1040
        %1169 = vst [vmem:[%s172 + $0x44] sm:$0xf] %v1041
        %1170 = vst [vmem:[%s172 + $0x48] sm:$0xf] %v1042
        %1171 = vst [vmem:[%s172 + $0x4c] sm:$0xf] %v1043
        %1172 = vst [vmem:[%s172 + $0x50] sm:$0xf] %v1044
        %1173 = vst [vmem:[%s172 + $0x54] sm:$0xf] %v1045
        %1174 = vst [vmem:[%s172 + $0x58] sm:$0xf] %v1046
        %1175 = vst [vmem:[%s172 + $0x5c] sm:$0xf] %v1047
        %1176 = vst [vmem:[%s172 + $0x60] sm:$0xf] %v1048
        %1177 = vst [vmem:[%s172 + $0x64] sm:$0xf] %v1049
        %1178 = vst [vmem:[%s172 + $0x68] sm:$0xf] %v1050
        %1179 = vst [vmem:[%s172 + $0x6c] sm:$0xf] %v1051
        %1180 = vst [vmem:[%s172 + $0x70] sm:$0xf] %v1052
        %1181 = vst [vmem:[%s172 + $0x74] sm:$0xf] %v1053
        %1182 = vst [vmem:[%s172 + $0x78] sm:$0xf] %v1054
        %1183 = vst [vmem:[%s172 + $0x7c] sm:$0xf] %v1055
        %1184 = vst [vmem:[%s172 + $0x80] sm:$0xf] %v1056
        %1185 = vst [vmem:[%s172 + $0x84] sm:$0xf] %v1057
        %1186 = vst [vmem:[%s172 + $0x88] sm:$0xf] %v1058
        %1187 = vst [vmem:[%s172 + $0x8c] sm:$0xf] %v1059
        %1188 = vst [vmem:[%s172 + $0x90] sm:$0xf] %v1060
        %1189 = vst [vmem:[%s172 + $0x94] sm:$0xf] %v1061
        %1190 = vst [vmem:[%s172 + $0x98] sm:$0xf] %v1062
        %1191 = vst [vmem:[%s172 + $0x9c] sm:$0xf] %v1063
        %1192 = vst [vmem:[%s172 + $0xa0] sm:$0xf] %v1064
        %1193 = vst [vmem:[%s172 + $0xa4] sm:$0xf] %v1065
        %1194 = vst [vmem:[%s172 + $0xa8] sm:$0xf] %v1066
        %1195 = vst [vmem:[%s172 + $0xac] sm:$0xf] %v1067
        %1196 = vst [vmem:[%s172 + $0xb0] sm:$0xf] %v1068
        %1197 = vst [vmem:[%s172 + $0xb4] sm:$0xf] %v1069
        %1198 = vst [vmem:[%s172 + $0xb8] sm:$0xf] %v1070
        %1199 = vst [vmem:[%s172 + $0xbc] sm:$0xf] %v1071
        %1200 = vst [vmem:[%s172 + $0xc0] sm:$0xf] %v1072
        %1201 = vst [vmem:[%s172 + $0xc4] sm:$0xf] %v1073
        %1202 = vst [vmem:[%s172 + $0xc8] sm:$0xf] %v1074
        %1203 = vst [vmem:[%s172 + $0xcc] sm:$0xf] %v1075
        %1204 = vst [vmem:[%s172 + $0xd0] sm:$0xf] %v1076
        %1205 = vst [vmem:[%s172 + $0xd4] sm:$0xf] %v1077
        %1206 = vst [vmem:[%s172 + $0xd8] sm:$0xf] %v1078
        %1207 = vst [vmem:[%s172 + $0xdc] sm:$0xf] %v1079
        %1208 = vst [vmem:[%s172 + $0xe0] sm:$0xf] %v1080
        %1209 = vst [vmem:[%s172 + $0xe4] sm:$0xf] %v1081
        %1210 = vst [vmem:[%s172 + $0xe8] sm:$0xf] %v1082
        %1211 = vst [vmem:[%s172 + $0xec] sm:$0xf] %v1083
        %1212 = vst [vmem:[%s172 + $0xf0] sm:$0xf] %v1084
        %1213 = vst [vmem:[%s172 + $0xf4] sm:$0xf] %v1085
        %1214 = vst [vmem:[%s172 + $0xf8] sm:$0xf] %v1086
        %1215 = vst [vmem:[%s172 + $0xfc] sm:$0xf] %v1087
        %s1216 = sand.u32 %s90, 1
        %s1217 = sand.u32 %s90, 1
        %s1218 = smul.addr %s1217, 256
        %s1219 = scalar_lea.vmem [#allocation2], %s1218
        // Predicated region
        $region33: #{ganin_forward.3} parent=31 // pred_check
          %p1220 = pneg %p100
        $region34: #{ganin_forward.3} parent=31 // pred_check_branch
          %1222 = sbr.rel (%p1220) target = $region36
        $region35: #{ganin_forward.3} parent=31 // pred_region
          %s1223 = smul.u32 64, %s14
          %s1224 = ssub.s32 144, %s1223
          %p1225 = scmp.lt.s32.totalorder %s1224, 64
          %s1226 = scalar_select %p1225, %s1224, 64
          %s1227 = smul.u32 64, %s1226
          %p1228 = scmp.ne.s32.totalorder 0, %s1227
          %s1229 = smul.addr %s1223, 4
          %s1230 = scalar_lea.vmem %s3, %s1229
          // Predicated region
          $region37: #{ganin_forward.3} parent=35 // pred_check
            %p1231 = pneg %p1228
          $region38: #{ganin_forward.3} parent=35 // pred_check_branch
            %1233 = sbr.rel (%p1231) target = $region40
          $region39: #{ganin_forward.3} parent=35 // pred_region
            // Predicated region
            $region41: #{ganin_forward.3} parent=39 // pred_check
              _
            $region42: #{ganin_forward.3} parent=39 // pred_check_branch
              %1235 = sbr.rel target = $region44
            $region43: #{ganin_forward.3} parent=39 // pred_region
              // Predicated region
              $region63: #{ganin_forward.3} parent=43 // pred_check
                _
              $region64: #{ganin_forward.3} parent=43 // pred_check_branch
                %1411 = sbr.rel (0) target = $region66
              $region65: #{ganin_forward.3} parent=43 // pred_region
                %s1413 = ssub.s32 16, 1
                %s1414 = sshrl.u32 %s1226, 6
                // While loop
                $region67: #{ganin_forward.3} parent=65 // loop_pre_header
                  _
                $region68: #{ganin_forward.3} parent=65 // loop_header
                  %s1416 = sphi 0, %s1418
                  %p1417 = scmp.ge.s32.totalorder %s1416, %s1414
                  %s1421 = sphi 0, %s1554
                  %s1422 = sphi %s1219, %s1557
                  %s1423 = sphi %s1230, %s1558
                $region69: #{ganin_forward.3} parent=65 // loop_header_branch
                  %1420 = sbr.rel (%p1417) target = $region73
                $region70: #{ganin_forward.3} parent=65 // loop_body
                  %v1424 = vld [vmem:[%s1422] sm:%s1413]
                  %1425 = vst [vmem:[%s1423] sm:%s1413] %v1424
                  %v1426 = vld [vmem:[%s1422 + $0x4] sm:%s1413]
                  %1427 = vst [vmem:[%s1423 + $0x4] sm:%s1413] %v1426
                  %v1428 = vld [vmem:[%s1422 + $0x8] sm:%s1413]
                  %1429 = vst [vmem:[%s1423 + $0x8] sm:%s1413] %v1428
                  %v1430 = vld [vmem:[%s1422 + $0xc] sm:%s1413]
                  %1431 = vst [vmem:[%s1423 + $0xc] sm:%s1413] %v1430
                  %v1432 = vld [vmem:[%s1422 + $0x10] sm:%s1413]
                  %1433 = vst [vmem:[%s1423 + $0x10] sm:%s1413] %v1432
                  %v1434 = vld [vmem:[%s1422 + $0x14] sm:%s1413]
                  %1435 = vst [vmem:[%s1423 + $0x14] sm:%s1413] %v1434
                  %v1436 = vld [vmem:[%s1422 + $0x18] sm:%s1413]
                  %1437 = vst [vmem:[%s1423 + $0x18] sm:%s1413] %v1436
                  %v1438 = vld [vmem:[%s1422 + $0x1c] sm:%s1413]
                  %1439 = vst [vmem:[%s1423 + $0x1c] sm:%s1413] %v1438
                  %v1440 = vld [vmem:[%s1422 + $0x20] sm:%s1413]
                  %1441 = vst [vmem:[%s1423 + $0x20] sm:%s1413] %v1440
                  %v1442 = vld [vmem:[%s1422 + $0x24] sm:%s1413]
                  %1443 = vst [vmem:[%s1423 + $0x24] sm:%s1413] %v1442
                  %v1444 = vld [vmem:[%s1422 + $0x28] sm:%s1413]
                  %1445 = vst [vmem:[%s1423 + $0x28] sm:%s1413] %v1444
                  %v1446 = vld [vmem:[%s1422 + $0x2c] sm:%s1413]
                  %1447 = vst [vmem:[%s1423 + $0x2c] sm:%s1413] %v1446
                  %v1448 = vld [vmem:[%s1422 + $0x30] sm:%s1413]
                  %1449 = vst [vmem:[%s1423 + $0x30] sm:%s1413] %v1448
                  %v1450 = vld [vmem:[%s1422 + $0x34] sm:%s1413]
                  %1451 = vst [vmem:[%s1423 + $0x34] sm:%s1413] %v1450
                  %v1452 = vld [vmem:[%s1422 + $0x38] sm:%s1413]
                  %1453 = vst [vmem:[%s1423 + $0x38] sm:%s1413] %v1452
                  %v1454 = vld [vmem:[%s1422 + $0x3c] sm:%s1413]
                  %1455 = vst [vmem:[%s1423 + $0x3c] sm:%s1413] %v1454
                  %v1456 = vld [vmem:[%s1422 + $0x40] sm:%s1413]
                  %1457 = vst [vmem:[%s1423 + $0x40] sm:%s1413] %v1456
                  %v1458 = vld [vmem:[%s1422 + $0x44] sm:%s1413]
                  %1459 = vst [vmem:[%s1423 + $0x44] sm:%s1413] %v1458
                  %v1460 = vld [vmem:[%s1422 + $0x48] sm:%s1413]
                  %1461 = vst [vmem:[%s1423 + $0x48] sm:%s1413] %v1460
                  %v1462 = vld [vmem:[%s1422 + $0x4c] sm:%s1413]
                  %1463 = vst [vmem:[%s1423 + $0x4c] sm:%s1413] %v1462
                  %v1464 = vld [vmem:[%s1422 + $0x50] sm:%s1413]
                  %1465 = vst [vmem:[%s1423 + $0x50] sm:%s1413] %v1464
                  %v1466 = vld [vmem:[%s1422 + $0x54] sm:%s1413]
                  %1467 = vst [vmem:[%s1423 + $0x54] sm:%s1413] %v1466
                  %v1468 = vld [vmem:[%s1422 + $0x58] sm:%s1413]
                  %1469 = vst [vmem:[%s1423 + $0x58] sm:%s1413] %v1468
                  %v1470 = vld [vmem:[%s1422 + $0x5c] sm:%s1413]
                  %1471 = vst [vmem:[%s1423 + $0x5c] sm:%s1413] %v1470
                  %v1472 = vld [vmem:[%s1422 + $0x60] sm:%s1413]
                  %1473 = vst [vmem:[%s1423 + $0x60] sm:%s1413] %v1472
                  %v1474 = vld [vmem:[%s1422 + $0x64] sm:%s1413]
                  %1475 = vst [vmem:[%s1423 + $0x64] sm:%s1413] %v1474
                  %v1476 = vld [vmem:[%s1422 + $0x68] sm:%s1413]
                  %1477 = vst [vmem:[%s1423 + $0x68] sm:%s1413] %v1476
                  %v1478 = vld [vmem:[%s1422 + $0x6c] sm:%s1413]
                  %1479 = vst [vmem:[%s1423 + $0x6c] sm:%s1413] %v1478
                  %v1480 = vld [vmem:[%s1422 + $0x70] sm:%s1413]
                  %1481 = vst [vmem:[%s1423 + $0x70] sm:%s1413] %v1480
                  %v1482 = vld [vmem:[%s1422 + $0x74] sm:%s1413]
                  %1483 = vst [vmem:[%s1423 + $0x74] sm:%s1413] %v1482
                  %v1484 = vld [vmem:[%s1422 + $0x78] sm:%s1413]
                  %1485 = vst [vmem:[%s1423 + $0x78] sm:%s1413] %v1484
                  %v1486 = vld [vmem:[%s1422 + $0x7c] sm:%s1413]
                  %1487 = vst [vmem:[%s1423 + $0x7c] sm:%s1413] %v1486
                  %v1488 = vld [vmem:[%s1422 + $0x80] sm:%s1413]
                  %1489 = vst [vmem:[%s1423 + $0x80] sm:%s1413] %v1488
                  %v1490 = vld [vmem:[%s1422 + $0x84] sm:%s1413]
                  %1491 = vst [vmem:[%s1423 + $0x84] sm:%s1413] %v1490
                  %v1492 = vld [vmem:[%s1422 + $0x88] sm:%s1413]
                  %1493 = vst [vmem:[%s1423 + $0x88] sm:%s1413] %v1492
                  %v1494 = vld [vmem:[%s1422 + $0x8c] sm:%s1413]
                  %1495 = vst [vmem:[%s1423 + $0x8c] sm:%s1413] %v1494
                  %v1496 = vld [vmem:[%s1422 + $0x90] sm:%s1413]
                  %1497 = vst [vmem:[%s1423 + $0x90] sm:%s1413] %v1496
                  %v1498 = vld [vmem:[%s1422 + $0x94] sm:%s1413]
                  %1499 = vst [vmem:[%s1423 + $0x94] sm:%s1413] %v1498
                  %v1500 = vld [vmem:[%s1422 + $0x98] sm:%s1413]
                  %1501 = vst [vmem:[%s1423 + $0x98] sm:%s1413] %v1500
                  %v1502 = vld [vmem:[%s1422 + $0x9c] sm:%s1413]
                  %1503 = vst [vmem:[%s1423 + $0x9c] sm:%s1413] %v1502
                  %v1504 = vld [vmem:[%s1422 + $0xa0] sm:%s1413]
                  %1505 = vst [vmem:[%s1423 + $0xa0] sm:%s1413] %v1504
                  %v1506 = vld [vmem:[%s1422 + $0xa4] sm:%s1413]
                  %1507 = vst [vmem:[%s1423 + $0xa4] sm:%s1413] %v1506
                  %v1508 = vld [vmem:[%s1422 + $0xa8] sm:%s1413]
                  %1509 = vst [vmem:[%s1423 + $0xa8] sm:%s1413] %v1508
                  %v1510 = vld [vmem:[%s1422 + $0xac] sm:%s1413]
                  %1511 = vst [vmem:[%s1423 + $0xac] sm:%s1413] %v1510
                  %v1512 = vld [vmem:[%s1422 + $0xb0] sm:%s1413]
                  %1513 = vst [vmem:[%s1423 + $0xb0] sm:%s1413] %v1512
                  %v1514 = vld [vmem:[%s1422 + $0xb4] sm:%s1413]
                  %1515 = vst [vmem:[%s1423 + $0xb4] sm:%s1413] %v1514
                  %v1516 = vld [vmem:[%s1422 + $0xb8] sm:%s1413]
                  %1517 = vst [vmem:[%s1423 + $0xb8] sm:%s1413] %v1516
                  %v1518 = vld [vmem:[%s1422 + $0xbc] sm:%s1413]
                  %1519 = vst [vmem:[%s1423 + $0xbc] sm:%s1413] %v1518
                  %v1520 = vld [vmem:[%s1422 + $0xc0] sm:%s1413]
                  %1521 = vst [vmem:[%s1423 + $0xc0] sm:%s1413] %v1520
                  %v1522 = vld [vmem:[%s1422 + $0xc4] sm:%s1413]
                  %1523 = vst [vmem:[%s1423 + $0xc4] sm:%s1413] %v1522
                  %v1524 = vld [vmem:[%s1422 + $0xc8] sm:%s1413]
                  %1525 = vst [vmem:[%s1423 + $0xc8] sm:%s1413] %v1524
                  %v1526 = vld [vmem:[%s1422 + $0xcc] sm:%s1413]
                  %1527 = vst [vmem:[%s1423 + $0xcc] sm:%s1413] %v1526
                  %v1528 = vld [vmem:[%s1422 + $0xd0] sm:%s1413]
                  %1529 = vst [vmem:[%s1423 + $0xd0] sm:%s1413] %v1528
                  %v1530 = vld [vmem:[%s1422 + $0xd4] sm:%s1413]
                  %1531 = vst [vmem:[%s1423 + $0xd4] sm:%s1413] %v1530
                  %v1532 = vld [vmem:[%s1422 + $0xd8] sm:%s1413]
                  %1533 = vst [vmem:[%s1423 + $0xd8] sm:%s1413] %v1532
                  %v1534 = vld [vmem:[%s1422 + $0xdc] sm:%s1413]
                  %1535 = vst [vmem:[%s1423 + $0xdc] sm:%s1413] %v1534
                  %v1536 = vld [vmem:[%s1422 + $0xe0] sm:%s1413]
                  %1537 = vst [vmem:[%s1423 + $0xe0] sm:%s1413] %v1536
                  %v1538 = vld [vmem:[%s1422 + $0xe4] sm:%s1413]
                  %1539 = vst [vmem:[%s1423 + $0xe4] sm:%s1413] %v1538
                  %v1540 = vld [vmem:[%s1422 + $0xe8] sm:%s1413]
                  %1541 = vst [vmem:[%s1423 + $0xe8] sm:%s1413] %v1540
                  %v1542 = vld [vmem:[%s1422 + $0xec] sm:%s1413]
                  %1543 = vst [vmem:[%s1423 + $0xec] sm:%s1413] %v1542
                  %v1544 = vld [vmem:[%s1422 + $0xf0] sm:%s1413]
                  %1545 = vst [vmem:[%s1423 + $0xf0] sm:%s1413] %v1544
                  %v1546 = vld [vmem:[%s1422 + $0xf4] sm:%s1413]
                  %1547 = vst [vmem:[%s1423 + $0xf4] sm:%s1413] %v1546
                  %v1548 = vld [vmem:[%s1422 + $0xf8] sm:%s1413]
                  %1549 = vst [vmem:[%s1423 + $0xf8] sm:%s1413] %v1548
                  %v1550 = vld [vmem:[%s1422 + $0xfc] sm:%s1413]
                  %1551 = vst [vmem:[%s1423 + $0xfc] sm:%s1413] %v1550
                  %s1552 = sadd.s32 1, %s1421
                  %p1553 = scmp.ge.s32.totalorder %s1552, %s1414
                  %s1554 = scalar_select %p1553, 0, %s1552
                  %s1555 = smul.u32 %s1554, 256
                  %s1556 = smul.u32 %s1554, 256
                  %s1557 = scalar_lea.vmem %s1219, %s1555 [#allocation2]
                  %s1558 = scalar_lea.vmem %s1230, %s1556
                $region71: #{ganin_forward.3} parent=65 // loop_footer
                  %s1418 = sadd.s32 %s1416, 1
                $region72: #{ganin_forward.3} parent=65 // loop_footer_branch
                  %1415 = sbr.rel target = $region68
                $region73: #{ganin_forward.3} parent=65 // loop_exit
                  _
                %s1559 = sshrl.u32 %s1226, 6
                %s1560 = sand.u32 %s1226, 63
                %s1561 = smul.u32 %s1559, 64
                %s1562 = smul.u32 4, %s1561
                %s1563 = scalar_lea.vmem %s1219, %s1562 [#allocation2]
                %s1564 = smul.u32 4, %s1561
                %s1565 = scalar_lea.vmem %s1230, %s1564
                // While loop
                $region74: #{ganin_forward.3} parent=65 // loop_pre_header
                  _
                $region75: #{ganin_forward.3} parent=65 // loop_header
                  %s1567 = sphi 0, %s1569
                  %p1568 = scmp.ge.s32.totalorder %s1567, %s1560
                  %s1572 = sphi 0, %s1579
                  %s1573 = sphi %s1563, %s1582
                  %s1574 = sphi %s1565, %s1583
                $region76: #{ganin_forward.3} parent=65 // loop_header_branch
                  %1571 = sbr.rel (%p1568) target = $region80
                $region77: #{ganin_forward.3} parent=65 // loop_body
                  %v1575 = vld [vmem:[%s1573] sm:%s1413]
                  %1576 = vst [vmem:[%s1574] sm:%s1413] %v1575
                  %s1577 = sadd.s32 1, %s1572
                  %p1578 = scmp.ge.s32.totalorder %s1577, %s1560
                  %s1579 = scalar_select %p1578, 0, %s1577
                  %s1580 = smul.u32 %s1579, 4
                  %s1581 = smul.u32 %s1579, 4
                  %s1582 = scalar_lea.vmem %s1563, %s1580 [#allocation2]
                  %s1583 = scalar_lea.vmem %s1565, %s1581
                $region78: #{ganin_forward.3} parent=65 // loop_footer
                  %s1569 = sadd.s32 %s1567, 1
                $region79: #{ganin_forward.3} parent=65 // loop_footer_branch
                  %1566 = sbr.rel target = $region75
                $region80: #{ganin_forward.3} parent=65 // loop_exit
                  _
              $region66: #{ganin_forward.3} parent=43 // pred_fallthru
                _
            $region44: #{ganin_forward.3} parent=39 // pred_fallthru
              _
            // Predicated region
            $region45: #{ganin_forward.3} parent=39 // pred_check
              _
            $region46: #{ganin_forward.3} parent=39 // pred_check_branch
              %1237 = sbr.rel (0) target = $region48
            $region47: #{ganin_forward.3} parent=39 // pred_region
              %s1239 = ssub.s32 16, 1
              %s1240 = sshrl.u32 %s1226, 6
              // While loop
              $region49: #{ganin_forward.3} parent=47 // loop_pre_header
                _
              $region50: #{ganin_forward.3} parent=47 // loop_header
                %s1242 = sphi 0, %s1244
                %p1243 = scmp.ge.s32.totalorder %s1242, %s1240
                %s1247 = sphi 0, %s1380
                %s1248 = sphi %s1219, %s1383
                %s1249 = sphi %s1230, %s1384
              $region51: #{ganin_forward.3} parent=47 // loop_header_branch
                %1246 = sbr.rel (%p1243) target = $region55
              $region52: #{ganin_forward.3} parent=47 // loop_body
                %v1250 = vld [vmem:[%s1248] sm:%s1239]
                %1251 = vst [vmem:[%s1249] sm:%s1239] %v1250
                %v1252 = vld [vmem:[%s1248 + $0x4] sm:%s1239]
                %1253 = vst [vmem:[%s1249 + $0x4] sm:%s1239] %v1252
                %v1254 = vld [vmem:[%s1248 + $0x8] sm:%s1239]
                %1255 = vst [vmem:[%s1249 + $0x8] sm:%s1239] %v1254
                %v1256 = vld [vmem:[%s1248 + $0xc] sm:%s1239]
                %1257 = vst [vmem:[%s1249 + $0xc] sm:%s1239] %v1256
                %v1258 = vld [vmem:[%s1248 + $0x10] sm:%s1239]
                %1259 = vst [vmem:[%s1249 + $0x10] sm:%s1239] %v1258
                %v1260 = vld [vmem:[%s1248 + $0x14] sm:%s1239]
                %1261 = vst [vmem:[%s1249 + $0x14] sm:%s1239] %v1260
                %v1262 = vld [vmem:[%s1248 + $0x18] sm:%s1239]
                %1263 = vst [vmem:[%s1249 + $0x18] sm:%s1239] %v1262
                %v1264 = vld [vmem:[%s1248 + $0x1c] sm:%s1239]
                %1265 = vst [vmem:[%s1249 + $0x1c] sm:%s1239] %v1264
                %v1266 = vld [vmem:[%s1248 + $0x20] sm:%s1239]
                %1267 = vst [vmem:[%s1249 + $0x20] sm:%s1239] %v1266
                %v1268 = vld [vmem:[%s1248 + $0x24] sm:%s1239]
                %1269 = vst [vmem:[%s1249 + $0x24] sm:%s1239] %v1268
                %v1270 = vld [vmem:[%s1248 + $0x28] sm:%s1239]
                %1271 = vst [vmem:[%s1249 + $0x28] sm:%s1239] %v1270
                %v1272 = vld [vmem:[%s1248 + $0x2c] sm:%s1239]
                %1273 = vst [vmem:[%s1249 + $0x2c] sm:%s1239] %v1272
                %v1274 = vld [vmem:[%s1248 + $0x30] sm:%s1239]
                %1275 = vst [vmem:[%s1249 + $0x30] sm:%s1239] %v1274
                %v1276 = vld [vmem:[%s1248 + $0x34] sm:%s1239]
                %1277 = vst [vmem:[%s1249 + $0x34] sm:%s1239] %v1276
                %v1278 = vld [vmem:[%s1248 + $0x38] sm:%s1239]
                %1279 = vst [vmem:[%s1249 + $0x38] sm:%s1239] %v1278
                %v1280 = vld [vmem:[%s1248 + $0x3c] sm:%s1239]
                %1281 = vst [vmem:[%s1249 + $0x3c] sm:%s1239] %v1280
                %v1282 = vld [vmem:[%s1248 + $0x40] sm:%s1239]
                %1283 = vst [vmem:[%s1249 + $0x40] sm:%s1239] %v1282
                %v1284 = vld [vmem:[%s1248 + $0x44] sm:%s1239]
                %1285 = vst [vmem:[%s1249 + $0x44] sm:%s1239] %v1284
                %v1286 = vld [vmem:[%s1248 + $0x48] sm:%s1239]
                %1287 = vst [vmem:[%s1249 + $0x48] sm:%s1239] %v1286
                %v1288 = vld [vmem:[%s1248 + $0x4c] sm:%s1239]
                %1289 = vst [vmem:[%s1249 + $0x4c] sm:%s1239] %v1288
                %v1290 = vld [vmem:[%s1248 + $0x50] sm:%s1239]
                %1291 = vst [vmem:[%s1249 + $0x50] sm:%s1239] %v1290
                %v1292 = vld [vmem:[%s1248 + $0x54] sm:%s1239]
                %1293 = vst [vmem:[%s1249 + $0x54] sm:%s1239] %v1292
                %v1294 = vld [vmem:[%s1248 + $0x58] sm:%s1239]
                %1295 = vst [vmem:[%s1249 + $0x58] sm:%s1239] %v1294
                %v1296 = vld [vmem:[%s1248 + $0x5c] sm:%s1239]
                %1297 = vst [vmem:[%s1249 + $0x5c] sm:%s1239] %v1296
                %v1298 = vld [vmem:[%s1248 + $0x60] sm:%s1239]
                %1299 = vst [vmem:[%s1249 + $0x60] sm:%s1239] %v1298
                %v1300 = vld [vmem:[%s1248 + $0x64] sm:%s1239]
                %1301 = vst [vmem:[%s1249 + $0x64] sm:%s1239] %v1300
                %v1302 = vld [vmem:[%s1248 + $0x68] sm:%s1239]
                %1303 = vst [vmem:[%s1249 + $0x68] sm:%s1239] %v1302
                %v1304 = vld [vmem:[%s1248 + $0x6c] sm:%s1239]
                %1305 = vst [vmem:[%s1249 + $0x6c] sm:%s1239] %v1304
                %v1306 = vld [vmem:[%s1248 + $0x70] sm:%s1239]
                %1307 = vst [vmem:[%s1249 + $0x70] sm:%s1239] %v1306
                %v1308 = vld [vmem:[%s1248 + $0x74] sm:%s1239]
                %1309 = vst [vmem:[%s1249 + $0x74] sm:%s1239] %v1308
                %v1310 = vld [vmem:[%s1248 + $0x78] sm:%s1239]
                %1311 = vst [vmem:[%s1249 + $0x78] sm:%s1239] %v1310
                %v1312 = vld [vmem:[%s1248 + $0x7c] sm:%s1239]
                %1313 = vst [vmem:[%s1249 + $0x7c] sm:%s1239] %v1312
                %v1314 = vld [vmem:[%s1248 + $0x80] sm:%s1239]
                %1315 = vst [vmem:[%s1249 + $0x80] sm:%s1239] %v1314
                %v1316 = vld [vmem:[%s1248 + $0x84] sm:%s1239]
                %1317 = vst [vmem:[%s1249 + $0x84] sm:%s1239] %v1316
                %v1318 = vld [vmem:[%s1248 + $0x88] sm:%s1239]
                %1319 = vst [vmem:[%s1249 + $0x88] sm:%s1239] %v1318
                %v1320 = vld [vmem:[%s1248 + $0x8c] sm:%s1239]
                %1321 = vst [vmem:[%s1249 + $0x8c] sm:%s1239] %v1320
                %v1322 = vld [vmem:[%s1248 + $0x90] sm:%s1239]
                %1323 = vst [vmem:[%s1249 + $0x90] sm:%s1239] %v1322
                %v1324 = vld [vmem:[%s1248 + $0x94] sm:%s1239]
                %1325 = vst [vmem:[%s1249 + $0x94] sm:%s1239] %v1324
                %v1326 = vld [vmem:[%s1248 + $0x98] sm:%s1239]
                %1327 = vst [vmem:[%s1249 + $0x98] sm:%s1239] %v1326
                %v1328 = vld [vmem:[%s1248 + $0x9c] sm:%s1239]
                %1329 = vst [vmem:[%s1249 + $0x9c] sm:%s1239] %v1328
                %v1330 = vld [vmem:[%s1248 + $0xa0] sm:%s1239]
                %1331 = vst [vmem:[%s1249 + $0xa0] sm:%s1239] %v1330
                %v1332 = vld [vmem:[%s1248 + $0xa4] sm:%s1239]
                %1333 = vst [vmem:[%s1249 + $0xa4] sm:%s1239] %v1332
                %v1334 = vld [vmem:[%s1248 + $0xa8] sm:%s1239]
                %1335 = vst [vmem:[%s1249 + $0xa8] sm:%s1239] %v1334
                %v1336 = vld [vmem:[%s1248 + $0xac] sm:%s1239]
                %1337 = vst [vmem:[%s1249 + $0xac] sm:%s1239] %v1336
                %v1338 = vld [vmem:[%s1248 + $0xb0] sm:%s1239]
                %1339 = vst [vmem:[%s1249 + $0xb0] sm:%s1239] %v1338
                %v1340 = vld [vmem:[%s1248 + $0xb4] sm:%s1239]
                %1341 = vst [vmem:[%s1249 + $0xb4] sm:%s1239] %v1340
                %v1342 = vld [vmem:[%s1248 + $0xb8] sm:%s1239]
                %1343 = vst [vmem:[%s1249 + $0xb8] sm:%s1239] %v1342
                %v1344 = vld [vmem:[%s1248 + $0xbc] sm:%s1239]
                %1345 = vst [vmem:[%s1249 + $0xbc] sm:%s1239] %v1344
                %v1346 = vld [vmem:[%s1248 + $0xc0] sm:%s1239]
                %1347 = vst [vmem:[%s1249 + $0xc0] sm:%s1239] %v1346
                %v1348 = vld [vmem:[%s1248 + $0xc4] sm:%s1239]
                %1349 = vst [vmem:[%s1249 + $0xc4] sm:%s1239] %v1348
                %v1350 = vld [vmem:[%s1248 + $0xc8] sm:%s1239]
                %1351 = vst [vmem:[%s1249 + $0xc8] sm:%s1239] %v1350
                %v1352 = vld [vmem:[%s1248 + $0xcc] sm:%s1239]
                %1353 = vst [vmem:[%s1249 + $0xcc] sm:%s1239] %v1352
                %v1354 = vld [vmem:[%s1248 + $0xd0] sm:%s1239]
                %1355 = vst [vmem:[%s1249 + $0xd0] sm:%s1239] %v1354
                %v1356 = vld [vmem:[%s1248 + $0xd4] sm:%s1239]
                %1357 = vst [vmem:[%s1249 + $0xd4] sm:%s1239] %v1356
                %v1358 = vld [vmem:[%s1248 + $0xd8] sm:%s1239]
                %1359 = vst [vmem:[%s1249 + $0xd8] sm:%s1239] %v1358
                %v1360 = vld [vmem:[%s1248 + $0xdc] sm:%s1239]
                %1361 = vst [vmem:[%s1249 + $0xdc] sm:%s1239] %v1360
                %v1362 = vld [vmem:[%s1248 + $0xe0] sm:%s1239]
                %1363 = vst [vmem:[%s1249 + $0xe0] sm:%s1239] %v1362
                %v1364 = vld [vmem:[%s1248 + $0xe4] sm:%s1239]
                %1365 = vst [vmem:[%s1249 + $0xe4] sm:%s1239] %v1364
                %v1366 = vld [vmem:[%s1248 + $0xe8] sm:%s1239]
                %1367 = vst [vmem:[%s1249 + $0xe8] sm:%s1239] %v1366
                %v1368 = vld [vmem:[%s1248 + $0xec] sm:%s1239]
                %1369 = vst [vmem:[%s1249 + $0xec] sm:%s1239] %v1368
                %v1370 = vld [vmem:[%s1248 + $0xf0] sm:%s1239]
                %1371 = vst [vmem:[%s1249 + $0xf0] sm:%s1239] %v1370
                %v1372 = vld [vmem:[%s1248 + $0xf4] sm:%s1239]
                %1373 = vst [vmem:[%s1249 + $0xf4] sm:%s1239] %v1372
                %v1374 = vld [vmem:[%s1248 + $0xf8] sm:%s1239]
                %1375 = vst [vmem:[%s1249 + $0xf8] sm:%s1239] %v1374
                %v1376 = vld [vmem:[%s1248 + $0xfc] sm:%s1239]
                %1377 = vst [vmem:[%s1249 + $0xfc] sm:%s1239] %v1376
                %s1378 = sadd.s32 1, %s1247
                %p1379 = scmp.ge.s32.totalorder %s1378, %s1240
                %s1380 = scalar_select %p1379, 0, %s1378
                %s1381 = smul.u32 %s1380, 256
                %s1382 = smul.u32 %s1380, 256
                %s1383 = scalar_lea.vmem %s1219, %s1381 [#allocation2]
                %s1384 = scalar_lea.vmem %s1230, %s1382
              $region53: #{ganin_forward.3} parent=47 // loop_footer
                %s1244 = sadd.s32 %s1242, 1
              $region54: #{ganin_forward.3} parent=47 // loop_footer_branch
                %1241 = sbr.rel target = $region50
              $region55: #{ganin_forward.3} parent=47 // loop_exit
                _
              %s1385 = sshrl.u32 %s1226, 6
              %s1386 = sand.u32 %s1226, 63
              %s1387 = smul.u32 %s1385, 64
              %s1388 = smul.u32 4, %s1387
              %s1389 = scalar_lea.vmem %s1219, %s1388 [#allocation2]
              %s1390 = smul.u32 4, %s1387
              %s1391 = scalar_lea.vmem %s1230, %s1390
              // While loop
              $region56: #{ganin_forward.3} parent=47 // loop_pre_header
                _
              $region57: #{ganin_forward.3} parent=47 // loop_header
                %s1393 = sphi 0, %s1395
                %p1394 = scmp.ge.s32.totalorder %s1393, %s1386
                %s1398 = sphi 0, %s1405
                %s1399 = sphi %s1389, %s1408
                %s1400 = sphi %s1391, %s1409
              $region58: #{ganin_forward.3} parent=47 // loop_header_branch
                %1397 = sbr.rel (%p1394) target = $region62
              $region59: #{ganin_forward.3} parent=47 // loop_body
                %v1401 = vld [vmem:[%s1399] sm:%s1239]
                %1402 = vst [vmem:[%s1400] sm:%s1239] %v1401
                %s1403 = sadd.s32 1, %s1398
                %p1404 = scmp.ge.s32.totalorder %s1403, %s1386
                %s1405 = scalar_select %p1404, 0, %s1403
                %s1406 = smul.u32 %s1405, 4
                %s1407 = smul.u32 %s1405, 4
                %s1408 = scalar_lea.vmem %s1389, %s1406 [#allocation2]
                %s1409 = scalar_lea.vmem %s1391, %s1407
              $region60: #{ganin_forward.3} parent=47 // loop_footer
                %s1395 = sadd.s32 %s1393, 1
              $region61: #{ganin_forward.3} parent=47 // loop_footer_branch
                %1392 = sbr.rel target = $region57
              $region62: #{ganin_forward.3} parent=47 // loop_exit
                _
            $region48: #{ganin_forward.3} parent=39 // pred_fallthru
              _
          $region40: #{ganin_forward.3} parent=35 // pred_fallthru
            _
          %1584 = vnop
        $region36: #{ganin_forward.3} parent=31 // pred_fallthru
          _
      $region32: #{ganin_forward.3} parent=5 // pred_fallthru
        _
      %p1585 = scmp.le.s32.totalorder 2, %s9
      // Predicated region
      $region81: #{ganin_forward.3} parent=5 // pred_check
        %p1586 = pneg %p1585
      $region82: #{ganin_forward.3} parent=5 // pred_check_branch
        %1588 = sbr.rel (%p1586) target = $region84
      $region83: #{ganin_forward.3} parent=5 // pred_region
        %s1589 = ssub.s32 %s9, 2
        // Predicated region
        $region85: #{ganin_forward.3} parent=83 // pred_check
          %p1590 = pneg %p106
        $region86: #{ganin_forward.3} parent=83 // pred_check_branch
          %1592 = sbr.rel (%p1590) target = $region88
        $region87: #{ganin_forward.3} parent=83 // pred_region
          %s1593 = sand.u32 %s91, 1
          %s1594 = sand.u32 %s91, 1
          %s1595 = smul.addr %s1594, 256
          %s1596 = scalar_lea.vmem [#allocation2], %s1595
        $region88: #{ganin_forward.3} parent=83 // pred_fallthru
          _
      $region84: #{ganin_forward.3} parent=5 // pred_fallthru
        _
    $region6: #{ganin_forward.3} parent=1 // loop_footer
      %s13 = sadd.s32 1, %s9
    $region7: #{ganin_forward.3} parent=1 // loop_footer_branch
      %8 = sbr.rel target = $region3
    $region8: #{ganin_forward.3} parent=1 // loop_exit
      _

// kernel: ganin_forward.4
$region0: #{ganin_forward.4}
  #allocation0 [shape = 'u32[]', space=smem, size = 0x4, offset = 0x4, fixed_abs, tag = 'smem constant byte address 0x4 - core index']
  #allocation1 [shape = 'u32[144,128]{1,0:T(1,128)}', space=vmem, size = 0x12000, scoped, tag = 'internal scratch']
  %s0 = inlined_call_operand.vmem [shape: bf16[128,800], index: 0, kind: input, shape index: {}]
  %s1 = inlined_call_operand.vmem [shape: bf16[800,128], index: 1, kind: input, shape index: {}]
  %s2 = inlined_call_operand.vmem [shape: f32[1,128], index: 2, kind: input, shape index: {}]
  %s3 = inlined_call_operand.vmem [shape: bf16[128,128], index: 3, kind: output, shape index: {}]
  %s4 = sld [smem:[#allocation0]]
  $region22: #{ganin_forward.4} parent=0
    _
  %s6 = ssub.s32 1, %s4
  %s7 = scalar_select 0, %s6, %s4
  // Predicated region
  $region2: #{ganin_forward.4} parent=0 // pred_check
    _
  $region3: #{ganin_forward.4} parent=0 // pred_check_branch
    %9 = sbr.rel (0) target = $region5
  $region4: #{ganin_forward.4} parent=0 // pred_region
    _
  $region5: #{ganin_forward.4} parent=0 // pred_fallthru
    _
  // Predicated region
  $region6: #{ganin_forward.4} parent=0 // pred_check
    _
  $region7: #{ganin_forward.4} parent=0 // pred_check_branch
    %11 = sbr.rel (0) target = $region9
  $region8: #{ganin_forward.4} parent=0 // pred_region
    _
  $region9: #{ganin_forward.4} parent=0 // pred_fallthru
    _
  // Predicated region
  $region10: #{ganin_forward.4} parent=0 // pred_check
    _
  $region11: #{ganin_forward.4} parent=0 // pred_check_branch
    %13 = sbr.rel (0) target = $region13
  $region12: #{ganin_forward.4} parent=0 // pred_region
    _
  $region13: #{ganin_forward.4} parent=0 // pred_fallthru
    _
  %v15 = vld [vmem:[%s0] sm:$0xff]
  %v16 = vld [vmem:[%s0 + $0x8] sm:$0xff]
  %v17 = vld [vmem:[%s0 + $0x10] sm:$0xff]
  %v18 = vld [vmem:[%s0 + $0x18] sm:$0xf]
  %v19 = vld [vmem:[%s0 + $0x1c] sm:$0xff]
  %v20 = vld [vmem:[%s0 + $0x24] sm:$0xff]
  %v21 = vld [vmem:[%s0 + $0x2c] sm:$0xff]
  %v22 = vld [vmem:[%s0 + $0x34] sm:$0xf]
  %v23 = vld [vmem:[%s0 + $0x38] sm:$0xff]
  %v24 = vld [vmem:[%s0 + $0x40] sm:$0xff]
  %v25 = vld [vmem:[%s0 + $0x48] sm:$0xff]
  %v26 = vld [vmem:[%s0 + $0x50] sm:$0xf]
  %v27 = vld [vmem:[%s0 + $0x54] sm:$0xff]
  %v28 = vld [vmem:[%s0 + $0x5c] sm:$0xff]
  %v29 = vld [vmem:[%s0 + $0x64] sm:$0xff]
  %v30 = vld [vmem:[%s0 + $0x6c] sm:$0xf]
  %v31 = vld [vmem:[%s0 + $0x70] sm:$0xff]
  %v32 = vld [vmem:[%s0 + $0x78] sm:$0xff]
  %v33 = vld [vmem:[%s0 + $0x80] sm:$0xff]
  %v34 = vld [vmem:[%s0 + $0x88] sm:$0xf]
  %v35 = vld [vmem:[%s0 + $0x8c] sm:$0xff]
  %v36 = vld [vmem:[%s0 + $0x94] sm:$0xff]
  %v37 = vld [vmem:[%s0 + $0x9c] sm:$0xff]
  %v38 = vld [vmem:[%s0 + $0xa4] sm:$0xf]
  %v39 = vld [vmem:[%s0 + $0xa8] sm:$0xff]
  %v40 = vld [vmem:[%s0 + $0xb0] sm:$0xff]
  %v41 = vld [vmem:[%s0 + $0xb8] sm:$0xff]
  %v42 = vld [vmem:[%s0 + $0xc0] sm:$0xf]
  %v43 = vld [vmem:[%s0 + $0xc4] sm:$0xff]
  %v44 = vld [vmem:[%s0 + $0xcc] sm:$0xff]
  %v45 = vld [vmem:[%s0 + $0xd4] sm:$0xff]
  %v46 = vld [vmem:[%s0 + $0xdc] sm:$0xf]
  %v47 = vld [vmem:[%s0 + $0xe0] sm:$0xff]
  %v48 = vld [vmem:[%s0 + $0xe8] sm:$0xff]
  %v49 = vld [vmem:[%s0 + $0xf0] sm:$0xff]
  %v50 = vld [vmem:[%s0 + $0xf8] sm:$0xf]
  %v51 = vld [vmem:[%s0 + $0xfc] sm:$0xff]
  %v52 = vld [vmem:[%s0 + $0x104] sm:$0xff]
  %v53 = vld [vmem:[%s0 + $0x10c] sm:$0xff]
  %v54 = vld [vmem:[%s0 + $0x114] sm:$0xf]
  %v55 = vld [vmem:[%s0 + $0x118] sm:$0xff]
  %v56 = vld [vmem:[%s0 + $0x120] sm:$0xff]
  %v57 = vld [vmem:[%s0 + $0x128] sm:$0xff]
  %v58 = vld [vmem:[%s0 + $0x130] sm:$0xf]
  %v59 = vld [vmem:[%s0 + $0x134] sm:$0xff]
  %v60 = vld [vmem:[%s0 + $0x13c] sm:$0xff]
  %v61 = vld [vmem:[%s0 + $0x144] sm:$0xff]
  %v62 = vld [vmem:[%s0 + $0x14c] sm:$0xf]
  %v63 = vld [vmem:[%s0 + $0x150] sm:$0xff]
  %v64 = vld [vmem:[%s0 + $0x158] sm:$0xff]
  %v65 = vld [vmem:[%s0 + $0x160] sm:$0xff]
  %v66 = vld [vmem:[%s0 + $0x168] sm:$0xf]
  %v67 = vld [vmem:[%s0 + $0x16c] sm:$0xff]
  %v68 = vld [vmem:[%s0 + $0x174] sm:$0xff]
  %v69 = vld [vmem:[%s0 + $0x17c] sm:$0xff]
  %v70 = vld [vmem:[%s0 + $0x184] sm:$0xf]
  %v71 = vld [vmem:[%s0 + $0x188] sm:$0xff]
  %v72 = vld [vmem:[%s0 + $0x190] sm:$0xff]
  %v73 = vld [vmem:[%s0 + $0x198] sm:$0xff]
  %v74 = vld [vmem:[%s0 + $0x1a0] sm:$0xf]
  %v75 = vld [vmem:[%s0 + $0x1a4] sm:$0xff]
  %v76 = vld [vmem:[%s0 + $0x1ac] sm:$0xff]
  %v77 = vld [vmem:[%s0 + $0x1b4] sm:$0xff]
  %v78 = vld [vmem:[%s0 + $0x1bc] sm:$0xf]
  %v79 = vld [vmem:[%s1] sm:$0xf]
  %v80 = vld [vmem:[%s1 + $0x4] sm:$0xf]
  %v81 = vld [vmem:[%s1 + $0x8] sm:$0xf]
  %v82 = vld [vmem:[%s1 + $0xc] sm:$0xf]
  %v83 = vld [vmem:[%s1 + $0x10] sm:$0xf]
  %v84 = vld [vmem:[%s1 + $0x14] sm:$0xf]
  %v85 = vld [vmem:[%s1 + $0x18] sm:$0xf]
  %v86 = vld [vmem:[%s1 + $0x1c] sm:$0xf]
  %v87 = vld [vmem:[%s1 + $0x20] sm:$0xf]
  %v88 = vld [vmem:[%s1 + $0x24] sm:$0xf]
  %v89 = vld [vmem:[%s1 + $0x28] sm:$0xf]
  %v90 = vld [vmem:[%s1 + $0x2c] sm:$0xf]
  %v91 = vld [vmem:[%s1 + $0x30] sm:$0xf]
  %v92 = vld [vmem:[%s1 + $0x34] sm:$0xf]
  %v93 = vld [vmem:[%s1 + $0x38] sm:$0xf]
  %v94 = vld [vmem:[%s1 + $0x3c] sm:$0xf]
  %v95 = vld [vmem:[%s1 + $0x40] sm:$0xf]
  %v96 = vld [vmem:[%s1 + $0x44] sm:$0xf]
  %v97 = vld [vmem:[%s1 + $0x48] sm:$0xf]
  %v98 = vld [vmem:[%s1 + $0x4c] sm:$0xf]
  %v99 = vld [vmem:[%s1 + $0x50] sm:$0xf]
  %v100 = vld [vmem:[%s1 + $0x54] sm:$0xf]
  %v101 = vld [vmem:[%s1 + $0x58] sm:$0xf]
  %v102 = vld [vmem:[%s1 + $0x5c] sm:$0xf]
  %v103 = vld [vmem:[%s1 + $0x60] sm:$0xf]
  %v104 = vld [vmem:[%s1 + $0x64] sm:$0xf]
  %v105 = vld [vmem:[%s1 + $0x68] sm:$0xf]
  %v106 = vld [vmem:[%s1 + $0x6c] sm:$0xf]
  %v107 = vld [vmem:[%s1 + $0x70] sm:$0xf]
  %v108 = vld [vmem:[%s1 + $0x74] sm:$0xf]
  %v109 = vld [vmem:[%s1 + $0x78] sm:$0xf]
  %v110 = vld [vmem:[%s1 + $0x7c] sm:$0xf]
  %v111 = vld [vmem:[%s1 + $0x80] sm:$0xf]
  %v112 = vld [vmem:[%s1 + $0x84] sm:$0xf]
  %v113 = vld [vmem:[%s1 + $0x88] sm:$0xf]
  %v114 = vld [vmem:[%s1 + $0x8c] sm:$0xf]
  %v115 = vld [vmem:[%s1 + $0x90] sm:$0xf]
  %v116 = vld [vmem:[%s1 + $0x94] sm:$0xf]
  %v117 = vld [vmem:[%s1 + $0x98] sm:$0xf]
  %v118 = vld [vmem:[%s1 + $0x9c] sm:$0xf]
  %v119 = vld [vmem:[%s1 + $0xa0] sm:$0xf]
  %v120 = vld [vmem:[%s1 + $0xa4] sm:$0xf]
  %v121 = vld [vmem:[%s1 + $0xa8] sm:$0xf]
  %v122 = vld [vmem:[%s1 + $0xac] sm:$0xf]
  %v123 = vld [vmem:[%s1 + $0xb0] sm:$0xf]
  %v124 = vld [vmem:[%s1 + $0xb4] sm:$0xf]
  %v125 = vld [vmem:[%s1 + $0xb8] sm:$0xf]
  %v126 = vld [vmem:[%s1 + $0xbc] sm:$0xf]
  %v127 = vld [vmem:[%s1 + $0xc0] sm:$0xf]
  %v128 = vld [vmem:[%s1 + $0xc4] sm:$0xf]
  %v129 = vld [vmem:[%s1 + $0xc8] sm:$0xf]
  %v130 = vld [vmem:[%s1 + $0xcc] sm:$0xf]
  %v131 = vld [vmem:[%s1 + $0xd0] sm:$0xf]
  %v132 = vld [vmem:[%s1 + $0xd4] sm:$0xf]
  %v133 = vld [vmem:[%s1 + $0xd8] sm:$0xf]
  %v134 = vld [vmem:[%s1 + $0xdc] sm:$0xf]
  %v135 = vld [vmem:[%s1 + $0xe0] sm:$0xf]
  %v136 = vld [vmem:[%s1 + $0xe4] sm:$0xf]
  %v137 = vld [vmem:[%s1 + $0xe8] sm:$0xf]
  %v138 = vld [vmem:[%s1 + $0xec] sm:$0xf]
  %v139 = vld [vmem:[%s1 + $0xf0] sm:$0xf]
  %v140 = vld [vmem:[%s1 + $0xf4] sm:$0xf]
  %v141 = vld [vmem:[%s1 + $0xf8] sm:$0xf]
  %v142 = vld [vmem:[%s1 + $0xfc] sm:$0xf]
  %v143 = vld [vmem:[%s1 + $0x100] sm:$0xf]
  %v144 = vld [vmem:[%s1 + $0x104] sm:$0xf]
  %v145 = vld [vmem:[%s1 + $0x108] sm:$0xf]
  %v146 = vld [vmem:[%s1 + $0x10c] sm:$0xf]
  %v147 = vld [vmem:[%s1 + $0x110] sm:$0xf]
  %v148 = vld [vmem:[%s1 + $0x114] sm:$0xf]
  %v149 = vld [vmem:[%s1 + $0x118] sm:$0xf]
  %v150 = vld [vmem:[%s1 + $0x11c] sm:$0xf]
  %v151 = vld [vmem:[%s1 + $0x120] sm:$0xf]
  %v152 = vld [vmem:[%s1 + $0x124] sm:$0xf]
  %v153 = vld [vmem:[%s1 + $0x128] sm:$0xf]
  %v154 = vld [vmem:[%s1 + $0x12c] sm:$0xf]
  %v155 = vld [vmem:[%s1 + $0x130] sm:$0xf]
  %v156 = vld [vmem:[%s1 + $0x134] sm:$0xf]
  %v157 = vld [vmem:[%s1 + $0x138] sm:$0xf]
  %v158 = vld [vmem:[%s1 + $0x13c] sm:$0xf]
  %v159 = vld [vmem:[%s1 + $0x140] sm:$0xf]
  %v160 = vld [vmem:[%s1 + $0x144] sm:$0xf]
  %v161 = vld [vmem:[%s1 + $0x148] sm:$0xf]
  %v162 = vld [vmem:[%s1 + $0x14c] sm:$0xf]
  %v163 = vld [vmem:[%s1 + $0x150] sm:$0xf]
  %v164 = vld [vmem:[%s1 + $0x154] sm:$0xf]
  %v165 = vld [vmem:[%s1 + $0x158] sm:$0xf]
  %v166 = vld [vmem:[%s1 + $0x15c] sm:$0xf]
  %v167 = vld [vmem:[%s1 + $0x160] sm:$0xf]
  %v168 = vld [vmem:[%s1 + $0x164] sm:$0xf]
  %v169 = vld [vmem:[%s1 + $0x168] sm:$0xf]
  %v170 = vld [vmem:[%s1 + $0x16c] sm:$0xf]
  %v171 = vld [vmem:[%s1 + $0x170] sm:$0xf]
  %v172 = vld [vmem:[%s1 + $0x174] sm:$0xf]
  %v173 = vld [vmem:[%s1 + $0x178] sm:$0xf]
  %v174 = vld [vmem:[%s1 + $0x17c] sm:$0xf]
  %v175 = vld [vmem:[%s1 + $0x180] sm:$0xf]
  %v176 = vld [vmem:[%s1 + $0x184] sm:$0xf]
  %v177 = vld [vmem:[%s1 + $0x188] sm:$0xf]
  %v178 = vld [vmem:[%s1 + $0x18c] sm:$0xf]
  %v179 = vld [vmem:[%s2] sm:$0x1]
  %v181 = vlaneseq
  %v182 = vshrl.u32 %v181, 7
  %v183 = vsub.s32 0, %v182
  %v184 = vrot.slane %v179, %v183
  %v250 = vunpack.c.l.b16 %v15
  %v251 = vunpack.c.h.b16 %v15
  %v252 = vunpack.c.l.b16 %v16
  %v253 = vunpack.c.h.b16 %v16
  %v254 = vunpack.c.l.b16 %v17
  %v255 = vunpack.c.h.b16 %v17
  %v256 = vunpack.c.l.b16 %v18
  %v257 = vunpack.c.l.b16 %v19
  %v258 = vunpack.c.h.b16 %v19
  %v259 = vunpack.c.l.b16 %v20
  %v260 = vunpack.c.h.b16 %v20
  %v261 = vunpack.c.l.b16 %v21
  %v262 = vunpack.c.h.b16 %v21
  %v263 = vunpack.c.l.b16 %v22
  %v264 = vunpack.c.l.b16 %v23
  %v265 = vunpack.c.h.b16 %v23
  %v266 = vunpack.c.l.b16 %v24
  %v267 = vunpack.c.h.b16 %v24
  %v268 = vunpack.c.l.b16 %v25
  %v269 = vunpack.c.h.b16 %v25
  %v270 = vunpack.c.l.b16 %v26
  %v271 = vunpack.c.l.b16 %v27
  %v272 = vunpack.c.h.b16 %v27
  %v273 = vunpack.c.l.b16 %v28
  %v274 = vunpack.c.h.b16 %v28
  %v275 = vunpack.c.l.b16 %v29
  %v276 = vunpack.c.h.b16 %v29
  %v277 = vunpack.c.l.b16 %v30
  %v278 = vunpack.c.l.b16 %v31
  %v279 = vunpack.c.h.b16 %v31
  %v280 = vunpack.c.l.b16 %v32
  %v281 = vunpack.c.h.b16 %v32
  %v282 = vunpack.c.l.b16 %v33
  %v283 = vunpack.c.h.b16 %v33
  %v284 = vunpack.c.l.b16 %v34
  %v285 = vunpack.c.l.b16 %v35
  %v286 = vunpack.c.h.b16 %v35
  %v287 = vunpack.c.l.b16 %v36
  %v288 = vunpack.c.h.b16 %v36
  %v289 = vunpack.c.l.b16 %v37
  %v290 = vunpack.c.h.b16 %v37
  %v291 = vunpack.c.l.b16 %v38
  %v292 = vunpack.c.l.b16 %v39
  %v293 = vunpack.c.h.b16 %v39
  %v294 = vunpack.c.l.b16 %v40
  %v295 = vunpack.c.h.b16 %v40
  %v296 = vunpack.c.l.b16 %v41
  %v297 = vunpack.c.h.b16 %v41
  %v298 = vunpack.c.l.b16 %v42
  %v299 = vunpack.c.l.b16 %v43
  %v300 = vunpack.c.h.b16 %v43
  %v301 = vunpack.c.l.b16 %v44
  %v302 = vunpack.c.h.b16 %v44
  %v303 = vunpack.c.l.b16 %v45
  %v304 = vunpack.c.h.b16 %v45
  %v305 = vunpack.c.l.b16 %v46
  %v306 = vunpack.c.l.b16 %v47
  %v307 = vunpack.c.h.b16 %v47
  %v308 = vunpack.c.l.b16 %v48
  %v309 = vunpack.c.h.b16 %v48
  %v310 = vunpack.c.l.b16 %v49
  %v311 = vunpack.c.h.b16 %v49
  %v312 = vunpack.c.l.b16 %v50
  %v313 = vunpack.c.l.b16 %v51
  %v314 = vunpack.c.h.b16 %v51
  %v315 = vunpack.c.l.b16 %v52
  %v316 = vunpack.c.h.b16 %v52
  %v317 = vunpack.c.l.b16 %v53
  %v318 = vunpack.c.h.b16 %v53
  %v319 = vunpack.c.l.b16 %v54
  %v320 = vunpack.c.l.b16 %v55
  %v321 = vunpack.c.h.b16 %v55
  %v322 = vunpack.c.l.b16 %v56
  %v323 = vunpack.c.h.b16 %v56
  %v324 = vunpack.c.l.b16 %v57
  %v325 = vunpack.c.h.b16 %v57
  %v326 = vunpack.c.l.b16 %v58
  %v327 = vunpack.c.l.b16 %v59
  %v328 = vunpack.c.h.b16 %v59
  %v329 = vunpack.c.l.b16 %v60
  %v330 = vunpack.c.h.b16 %v60
  %v331 = vunpack.c.l.b16 %v61
  %v332 = vunpack.c.h.b16 %v61
  %v333 = vunpack.c.l.b16 %v62
  %v334 = vunpack.c.l.b16 %v63
  %v335 = vunpack.c.h.b16 %v63
  %v336 = vunpack.c.l.b16 %v64
  %v337 = vunpack.c.h.b16 %v64
  %v338 = vunpack.c.l.b16 %v65
  %v339 = vunpack.c.h.b16 %v65
  %v340 = vunpack.c.l.b16 %v66
  %v341 = vunpack.c.l.b16 %v67
  %v342 = vunpack.c.h.b16 %v67
  %v343 = vunpack.c.l.b16 %v68
  %v344 = vunpack.c.h.b16 %v68
  %v345 = vunpack.c.l.b16 %v69
  %v346 = vunpack.c.h.b16 %v69
  %v347 = vunpack.c.l.b16 %v70
  %v348 = vunpack.c.l.b16 %v71
  %v349 = vunpack.c.h.b16 %v71
  %v350 = vunpack.c.l.b16 %v72
  %v351 = vunpack.c.h.b16 %v72
  %v352 = vunpack.c.l.b16 %v73
  %v353 = vunpack.c.h.b16 %v73
  %v354 = vunpack.c.l.b16 %v74
  %v355 = vunpack.c.l.b16 %v75
  %v356 = vunpack.c.h.b16 %v75
  %v357 = vunpack.c.l.b16 %v76
  %v358 = vunpack.c.h.b16 %v76
  %v359 = vunpack.c.l.b16 %v77
  %v360 = vunpack.c.h.b16 %v77
  %v361 = vunpack.c.l.b16 %v78
  %v362 = vpack.c.b16 %v257, %v250
  %v363 = vpack.c.b16 %v258, %v251
  %v364 = vpack.c.b16 %v259, %v252
  %v365 = vpack.c.b16 %v260, %v253
  %v366 = vpack.c.b16 %v261, %v254
  %v367 = vpack.c.b16 %v262, %v255
  %v368 = vpack.c.b16 %v263, %v256
  %v369 = vpack.c.b16 %v271, %v264
  %v370 = vpack.c.b16 %v272, %v265
  %v371 = vpack.c.b16 %v273, %v266
  %v372 = vpack.c.b16 %v274, %v267
  %v373 = vpack.c.b16 %v275, %v268
  %v374 = vpack.c.b16 %v276, %v269
  %v375 = vpack.c.b16 %v277, %v270
  %v376 = vpack.c.b16 %v285, %v278
  %v377 = vpack.c.b16 %v286, %v279
  %v378 = vpack.c.b16 %v287, %v280
  %v379 = vpack.c.b16 %v288, %v281
  %v380 = vpack.c.b16 %v289, %v282
  %v381 = vpack.c.b16 %v290, %v283
  %v382 = vpack.c.b16 %v291, %v284
  %v383 = vpack.c.b16 %v299, %v292
  %v384 = vpack.c.b16 %v300, %v293
  %v385 = vpack.c.b16 %v301, %v294
  %v386 = vpack.c.b16 %v302, %v295
  %v387 = vpack.c.b16 %v303, %v296
  %v388 = vpack.c.b16 %v304, %v297
  %v389 = vpack.c.b16 %v305, %v298
  %v390 = vpack.c.b16 %v313, %v306
  %v391 = vpack.c.b16 %v314, %v307
  %v392 = vpack.c.b16 %v315, %v308
  %v393 = vpack.c.b16 %v316, %v309
  %v394 = vpack.c.b16 %v317, %v310
  %v395 = vpack.c.b16 %v318, %v311
  %v396 = vpack.c.b16 %v319, %v312
  %v397 = vpack.c.b16 %v327, %v320
  %v398 = vpack.c.b16 %v328, %v321
  %v399 = vpack.c.b16 %v329, %v322
  %v400 = vpack.c.b16 %v330, %v323
  %v401 = vpack.c.b16 %v331, %v324
  %v402 = vpack.c.b16 %v332, %v325
  %v403 = vpack.c.b16 %v333, %v326
  %v404 = vpack.c.b16 %v341, %v334
  %v405 = vpack.c.b16 %v342, %v335
  %v406 = vpack.c.b16 %v343, %v336
  %v407 = vpack.c.b16 %v344, %v337
  %v408 = vpack.c.b16 %v345, %v338
  %v409 = vpack.c.b16 %v346, %v339
  %v410 = vpack.c.b16 %v347, %v340
  %v411 = vpack.c.b16 %v355, %v348
  %v412 = vpack.c.b16 %v356, %v349
  %v413 = vpack.c.b16 %v357, %v350
  %v414 = vpack.c.b16 %v358, %v351
  %v415 = vpack.c.b16 %v359, %v352
  %v416 = vpack.c.b16 %v360, %v353
  %v417 = vpack.c.b16 %v361, %v354
  %v566 = vunpack.c.l.b16 %v79
  %v567 = vunpack.c.l.b16 %v80
  %v568 = vunpack.c.l.b16 %v81
  %v569 = vunpack.c.l.b16 %v82
  %v570 = vunpack.c.l.b16 %v83
  %v571 = vunpack.c.l.b16 %v84
  %v572 = vunpack.c.l.b16 %v85
  %v573 = vunpack.c.l.b16 %v86
  %v574 = vunpack.c.l.b16 %v87
  %v575 = vunpack.c.l.b16 %v88
  %v576 = vunpack.c.l.b16 %v89
  %v577 = vunpack.c.l.b16 %v90
  %v578 = vunpack.c.l.b16 %v91
  %v579 = vunpack.c.l.b16 %v92
  %v580 = vunpack.c.l.b16 %v93
  %v581 = vunpack.c.l.b16 %v94
  %v582 = vunpack.c.l.b16 %v95
  %v583 = vunpack.c.l.b16 %v96
  %v584 = vunpack.c.l.b16 %v97
  %v585 = vunpack.c.l.b16 %v98
  %v586 = vunpack.c.l.b16 %v99
  %v587 = vunpack.c.l.b16 %v100
  %v588 = vunpack.c.l.b16 %v101
  %v589 = vunpack.c.l.b16 %v102
  %v590 = vunpack.c.l.b16 %v103
  %v591 = vunpack.c.l.b16 %v104
  %v592 = vunpack.c.l.b16 %v105
  %v593 = vunpack.c.l.b16 %v106
  %v594 = vunpack.c.l.b16 %v107
  %v595 = vunpack.c.l.b16 %v108
  %v596 = vunpack.c.l.b16 %v109
  %v597 = vunpack.c.l.b16 %v110
  %v598 = vunpack.c.l.b16 %v111
  %v599 = vunpack.c.l.b16 %v112
  %v600 = vunpack.c.l.b16 %v113
  %v601 = vunpack.c.l.b16 %v114
  %v602 = vunpack.c.l.b16 %v115
  %v603 = vunpack.c.l.b16 %v116
  %v604 = vunpack.c.l.b16 %v117
  %v605 = vunpack.c.l.b16 %v118
  %v606 = vunpack.c.l.b16 %v119
  %v607 = vunpack.c.l.b16 %v120
  %v608 = vunpack.c.l.b16 %v121
  %v609 = vunpack.c.l.b16 %v122
  %v610 = vunpack.c.l.b16 %v123
  %v611 = vunpack.c.l.b16 %v124
  %v612 = vunpack.c.l.b16 %v125
  %v613 = vunpack.c.l.b16 %v126
  %v614 = vunpack.c.l.b16 %v127
  %v615 = vunpack.c.l.b16 %v128
  %v616 = vunpack.c.l.b16 %v129
  %v617 = vunpack.c.l.b16 %v130
  %v618 = vunpack.c.l.b16 %v131
  %v619 = vunpack.c.l.b16 %v132
  %v620 = vunpack.c.l.b16 %v133
  %v621 = vunpack.c.l.b16 %v134
  %v622 = vunpack.c.l.b16 %v135
  %v623 = vunpack.c.l.b16 %v136
  %v624 = vunpack.c.l.b16 %v137
  %v625 = vunpack.c.l.b16 %v138
  %v626 = vunpack.c.l.b16 %v139
  %v627 = vunpack.c.l.b16 %v140
  %v628 = vunpack.c.l.b16 %v141
  %v629 = vunpack.c.l.b16 %v142
  %v630 = vunpack.c.l.b16 %v143
  %v631 = vunpack.c.l.b16 %v144
  %v632 = vunpack.c.l.b16 %v145
  %v633 = vunpack.c.l.b16 %v146
  %v634 = vunpack.c.l.b16 %v147
  %v635 = vunpack.c.l.b16 %v148
  %v636 = vunpack.c.l.b16 %v149
  %v637 = vunpack.c.l.b16 %v150
  %v638 = vunpack.c.l.b16 %v151
  %v639 = vunpack.c.l.b16 %v152
  %v640 = vunpack.c.l.b16 %v153
  %v641 = vunpack.c.l.b16 %v154
  %v642 = vunpack.c.l.b16 %v155
  %v643 = vunpack.c.l.b16 %v156
  %v644 = vunpack.c.l.b16 %v157
  %v645 = vunpack.c.l.b16 %v158
  %v646 = vunpack.c.l.b16 %v159
  %v647 = vunpack.c.l.b16 %v160
  %v648 = vunpack.c.l.b16 %v161
  %v649 = vunpack.c.l.b16 %v162
  %v650 = vunpack.c.l.b16 %v163
  %v651 = vunpack.c.l.b16 %v164
  %v652 = vunpack.c.l.b16 %v165
  %v653 = vunpack.c.l.b16 %v166
  %v654 = vunpack.c.l.b16 %v167
  %v655 = vunpack.c.l.b16 %v168
  %v656 = vunpack.c.l.b16 %v169
  %v657 = vunpack.c.l.b16 %v170
  %v658 = vunpack.c.l.b16 %v171
  %v659 = vunpack.c.l.b16 %v172
  %v660 = vunpack.c.l.b16 %v173
  %v661 = vunpack.c.l.b16 %v174
  %v662 = vunpack.c.l.b16 %v175
  %v663 = vunpack.c.l.b16 %v176
  %v664 = vunpack.c.l.b16 %v177
  %v665 = vunpack.c.l.b16 %v178
  %v666 = vpack.c.b16 %v567, %v566
  %v667 = vpack.c.b16 %v569, %v568
  %v668 = vpack.c.b16 %v571, %v570
  %v669 = vpack.c.b16 %v573, %v572
  %v670 = vpack.c.b16 %v575, %v574
  %v671 = vpack.c.b16 %v577, %v576
  %v672 = vpack.c.b16 %v579, %v578
  %v673 = vpack.c.b16 %v581, %v580
  %v674 = vpack.c.b16 %v583, %v582
  %v675 = vpack.c.b16 %v585, %v584
  %v676 = vpack.c.b16 %v587, %v586
  %v677 = vpack.c.b16 %v589, %v588
  %v678 = vpack.c.b16 %v591, %v590
  %v679 = vpack.c.b16 %v593, %v592
  %v680 = vpack.c.b16 %v595, %v594
  %v681 = vpack.c.b16 %v597, %v596
  %v682 = vpack.c.b16 %v599, %v598
  %v683 = vpack.c.b16 %v601, %v600
  %v684 = vpack.c.b16 %v603, %v602
  %v685 = vpack.c.b16 %v605, %v604
  %v686 = vpack.c.b16 %v607, %v606
  %v687 = vpack.c.b16 %v609, %v608
  %v688 = vpack.c.b16 %v611, %v610
  %v689 = vpack.c.b16 %v613, %v612
  %v690 = vpack.c.b16 %v615, %v614
  %v691 = vpack.c.b16 %v617, %v616
  %v692 = vpack.c.b16 %v619, %v618
  %v693 = vpack.c.b16 %v621, %v620
  %v694 = vpack.c.b16 %v623, %v622
  %v695 = vpack.c.b16 %v625, %v624
  %v696 = vpack.c.b16 %v627, %v626
  %v697 = vpack.c.b16 %v629, %v628
  %v698 = vpack.c.b16 %v631, %v630
  %v699 = vpack.c.b16 %v633, %v632
  %v700 = vpack.c.b16 %v635, %v634
  %v701 = vpack.c.b16 %v637, %v636
  %v702 = vpack.c.b16 %v639, %v638
  %v703 = vpack.c.b16 %v641, %v640
  %v704 = vpack.c.b16 %v643, %v642
  %v705 = vpack.c.b16 %v645, %v644
  %v706 = vpack.c.b16 %v647, %v646
  %v707 = vpack.c.b16 %v649, %v648
  %v708 = vpack.c.b16 %v651, %v650
  %v709 = vpack.c.b16 %v653, %v652
  %v710 = vpack.c.b16 %v655, %v654
  %v711 = vpack.c.b16 %v657, %v656
  %v712 = vpack.c.b16 %v659, %v658
  %v713 = vpack.c.b16 %v661, %v660
  %v714 = vpack.c.b16 %v663, %v662
  %v715 = vpack.c.b16 %v665, %v664
  %vm766 = vcmask 261120
  %v768 = vsel %vm766, %v368, 0
  %v771 = vsel %vm766, %v375, 0
  %v774 = vsel %vm766, %v382, 0
  %v777 = vsel %vm766, %v389, 0
  %v780 = vsel %vm766, %v396, 0
  %v783 = vsel %vm766, %v403, 0
  %v786 = vsel %vm766, %v410, 0
  %v789 = vsel %vm766, %v417, 0
  %791 = vmatprep.subr.bf16.mxu0 0
  %792 = vmatpush1.bf16.msra.mxu0 %v673
  %793 = vmatprep.subr.bf16.mxu0 0
  %794 = vmatpush1.bf16.msra.mxu0 %v672
  %795 = vmatprep.subr.bf16.mxu0 0
  %796 = vmatpush1.bf16.msra.mxu0 %v671
  %797 = vmatprep.subr.bf16.mxu0 0
  %798 = vmatpush1.bf16.msra.mxu0 %v670
  %799 = vmatprep.subr.bf16.mxu0 0
  %800 = vmatpush1.bf16.msra.mxu0 %v669
  %801 = vmatprep.subr.bf16.mxu0 0
  %802 = vmatpush1.bf16.msra.mxu0 %v668
  %803 = vmatprep.subr.bf16.mxu0 0
  %804 = vmatpush1.bf16.msra.mxu0 %v667
  %805 = vmatprep.subr.bf16.mxu0 0
  %806 = vmatpush1.bf16.msra.mxu0 %v666
  %807 = vmatprep.subr.bf16.mxu0 0
  %808 = vmatpush2.bf16.msra.mxu0 %v681
  %809 = vmatprep.subr.bf16.mxu0 0
  %810 = vmatpush2.bf16.msra.mxu0 %v680
  %811 = vmatprep.subr.bf16.mxu0 0
  %812 = vmatpush2.bf16.msra.mxu0 %v679
  %813 = vmatprep.subr.bf16.mxu0 0
  %814 = vmatpush2.bf16.msra.mxu0 %v678
  %815 = vmatprep.subr.bf16.mxu0 0
  %816 = vmatpush2.bf16.msra.mxu0 %v677
  %817 = vmatprep.subr.bf16.mxu0 0
  %818 = vmatpush2.bf16.msra.mxu0 %v676
  %819 = vmatprep.subr.bf16.mxu0 0
  %820 = vmatpush2.bf16.msra.mxu0 %v675
  %821 = vmatprep.subr.bf16.mxu0 0
  %822 = vmatpush2.bf16.msra.mxu0 %v674
  %823 = vmatprep.mubr.bf16.mxu0 %v363
  %824 = vmatmul.mubr.bf16.gmra.mxu0 %v362
  %v825 = vpop.f32.mrf.mxu0
  %v826 = vadd.f32 %v184, %v825
  %v827 = vpop.f32.mrf.mxu0
  %v828 = vpop.f32.mrf.mxu0
  %v829 = vadd.f32 %v184, %v828
  %v830 = vpop.f32.mrf.mxu0
  %831 = vmatprep.mubr.bf16.mxu0 %v370
  %832 = vmatmul.mubr.bf16.gmra.mxu0 %v369
  %v833 = vpop.f32.mrf.mxu0
  %v834 = vadd.f32 %v184, %v833
  %v835 = vpop.f32.mrf.mxu0
  %v836 = vpop.f32.mrf.mxu0
  %v837 = vadd.f32 %v184, %v836
  %v838 = vpop.f32.mrf.mxu0
  %839 = vmatprep.mubr.bf16.mxu0 %v377
  %840 = vmatmul.mubr.bf16.gmra.mxu0 %v376
  %v841 = vpop.f32.mrf.mxu0
  %v842 = vadd.f32 %v184, %v841
  %v843 = vpop.f32.mrf.mxu0
  %v844 = vpop.f32.mrf.mxu0
  %v845 = vadd.f32 %v184, %v844
  %v846 = vpop.f32.mrf.mxu0
  %847 = vmatprep.mubr.bf16.mxu0 %v384
  %848 = vmatmul.mubr.bf16.gmra.mxu0 %v383
  %v849 = vpop.f32.mrf.mxu0
  %v850 = vadd.f32 %v184, %v849
  %v851 = vpop.f32.mrf.mxu0
  %v852 = vpop.f32.mrf.mxu0
  %v853 = vadd.f32 %v184, %v852
  %v854 = vpop.f32.mrf.mxu0
  %855 = vmatprep.mubr.bf16.mxu0 %v391
  %856 = vmatmul.mubr.bf16.gmra.mxu0 %v390
  %v857 = vpop.f32.mrf.mxu0
  %v858 = vadd.f32 %v184, %v857
  %v859 = vpop.f32.mrf.mxu0
  %v860 = vpop.f32.mrf.mxu0
  %v861 = vadd.f32 %v184, %v860
  %v862 = vpop.f32.mrf.mxu0
  %863 = vmatprep.mubr.bf16.mxu0 %v398
  %864 = vmatmul.mubr.bf16.gmra.mxu0 %v397
  %v865 = vpop.f32.mrf.mxu0
  %v866 = vadd.f32 %v184, %v865
  %v867 = vpop.f32.mrf.mxu0
  %v868 = vpop.f32.mrf.mxu0
  %v869 = vadd.f32 %v184, %v868
  %v870 = vpop.f32.mrf.mxu0
  %871 = vmatprep.mubr.bf16.mxu0 %v405
  %872 = vmatmul.mubr.bf16.gmra.mxu0 %v404
  %v873 = vpop.f32.mrf.mxu0
  %v874 = vadd.f32 %v184, %v873
  %v875 = vpop.f32.mrf.mxu0
  %v876 = vpop.f32.mrf.mxu0
  %v877 = vadd.f32 %v184, %v876
  %v878 = vpop.f32.mrf.mxu0
  %879 = vmatprep.mubr.bf16.mxu0 %v412
  %880 = vmatmul.mubr.bf16.gmra.mxu0 %v411
  %v881 = vpop.f32.mrf.mxu0
  %v882 = vadd.f32 %v184, %v881
  %v883 = vpop.f32.mrf.mxu0
  %v884 = vpop.f32.mrf.mxu0
  %v885 = vadd.f32 %v184, %v884
  %v886 = vpop.f32.mrf.mxu0
  %887 = vdwg.mxu0
  %888 = vmatprep.subr.bf16.mxu0 0
  %889 = vmatpush1.bf16.msra.mxu0 %v689
  %890 = vmatprep.subr.bf16.mxu0 0
  %891 = vmatpush1.bf16.msra.mxu0 %v688
  %892 = vmatprep.subr.bf16.mxu0 0
  %893 = vmatpush1.bf16.msra.mxu0 %v687
  %894 = vmatprep.subr.bf16.mxu0 0
  %895 = vmatpush1.bf16.msra.mxu0 %v686
  %896 = vmatprep.subr.bf16.mxu0 0
  %897 = vmatpush1.bf16.msra.mxu0 %v685
  %898 = vmatprep.subr.bf16.mxu0 0
  %899 = vmatpush1.bf16.msra.mxu0 %v684
  %900 = vmatprep.subr.bf16.mxu0 0
  %901 = vmatpush1.bf16.msra.mxu0 %v683
  %902 = vmatprep.subr.bf16.mxu0 0
  %903 = vmatpush1.bf16.msra.mxu0 %v682
  %904 = vmatprep.subr.bf16.mxu0 0
  %905 = vmatpush2.bf16.msra.mxu0 %v697
  %906 = vmatprep.subr.bf16.mxu0 0
  %907 = vmatpush2.bf16.msra.mxu0 %v696
  %908 = vmatprep.subr.bf16.mxu0 0
  %909 = vmatpush2.bf16.msra.mxu0 %v695
  %910 = vmatprep.subr.bf16.mxu0 0
  %911 = vmatpush2.bf16.msra.mxu0 %v694
  %912 = vmatprep.subr.bf16.mxu0 0
  %913 = vmatpush2.bf16.msra.mxu0 %v693
  %914 = vmatprep.subr.bf16.mxu0 0
  %915 = vmatpush2.bf16.msra.mxu0 %v692
  %916 = vmatprep.subr.bf16.mxu0 0
  %917 = vmatpush2.bf16.msra.mxu0 %v691
  %918 = vmatprep.subr.bf16.mxu0 0
  %919 = vmatpush2.bf16.msra.mxu0 %v690
  %920 = vmatprep.mubr.bf16.mxu0 %v365
  %921 = vmatmul.mubr.bf16.gmra.mxu0 %v364
  %v922 = vpop.f32.mrf.mxu0
  %v923 = vadd.f32 %v826, %v922
  %v924 = vpop.f32.mrf.mxu0
  %v925 = vpop.f32.mrf.mxu0
  %v926 = vadd.f32 %v829, %v925
  %v927 = vpop.f32.mrf.mxu0
  %928 = vmatprep.mubr.bf16.mxu0 %v372
  %929 = vmatmul.mubr.bf16.gmra.mxu0 %v371
  %v930 = vpop.f32.mrf.mxu0
  %v931 = vadd.f32 %v834, %v930
  %v932 = vpop.f32.mrf.mxu0
  %v933 = vpop.f32.mrf.mxu0
  %v934 = vadd.f32 %v837, %v933
  %v935 = vpop.f32.mrf.mxu0
  %936 = vmatprep.mubr.bf16.mxu0 %v379
  %937 = vmatmul.mubr.bf16.gmra.mxu0 %v378
  %v938 = vpop.f32.mrf.mxu0
  %v939 = vadd.f32 %v842, %v938
  %v940 = vpop.f32.mrf.mxu0
  %v941 = vpop.f32.mrf.mxu0
  %v942 = vadd.f32 %v845, %v941
  %v943 = vpop.f32.mrf.mxu0
  %944 = vmatprep.mubr.bf16.mxu0 %v386
  %945 = vmatmul.mubr.bf16.gmra.mxu0 %v385
  %v946 = vpop.f32.mrf.mxu0
  %v947 = vadd.f32 %v850, %v946
  %v948 = vpop.f32.mrf.mxu0
  %v949 = vpop.f32.mrf.mxu0
  %v950 = vadd.f32 %v853, %v949
  %v951 = vpop.f32.mrf.mxu0
  %952 = vmatprep.mubr.bf16.mxu0 %v393
  %953 = vmatmul.mubr.bf16.gmra.mxu0 %v392
  %v954 = vpop.f32.mrf.mxu0
  %v955 = vadd.f32 %v858, %v954
  %v956 = vpop.f32.mrf.mxu0
  %v957 = vpop.f32.mrf.mxu0
  %v958 = vadd.f32 %v861, %v957
  %v959 = vpop.f32.mrf.mxu0
  %960 = vmatprep.mubr.bf16.mxu0 %v400
  %961 = vmatmul.mubr.bf16.gmra.mxu0 %v399
  %v962 = vpop.f32.mrf.mxu0
  %v963 = vadd.f32 %v866, %v962
  %v964 = vpop.f32.mrf.mxu0
  %v965 = vpop.f32.mrf.mxu0
  %v966 = vadd.f32 %v869, %v965
  %v967 = vpop.f32.mrf.mxu0
  %968 = vmatprep.mubr.bf16.mxu0 %v407
  %969 = vmatmul.mubr.bf16.gmra.mxu0 %v406
  %v970 = vpop.f32.mrf.mxu0
  %v971 = vadd.f32 %v874, %v970
  %v972 = vpop.f32.mrf.mxu0
  %v973 = vpop.f32.mrf.mxu0
  %v974 = vadd.f32 %v877, %v973
  %v975 = vpop.f32.mrf.mxu0
  %976 = vmatprep.mubr.bf16.mxu0 %v414
  %977 = vmatmul.mubr.bf16.gmra.mxu0 %v413
  %v978 = vpop.f32.mrf.mxu0
  %v979 = vadd.f32 %v882, %v978
  %v980 = vpop.f32.mrf.mxu0
  %v981 = vpop.f32.mrf.mxu0
  %v982 = vadd.f32 %v885, %v981
  %v983 = vpop.f32.mrf.mxu0
  %984 = vdwg.mxu0
  %985 = vmatprep.subr.bf16.mxu0 0
  %986 = vmatpush1.bf16.msra.mxu0 %v705
  %987 = vmatprep.subr.bf16.mxu0 0
  %988 = vmatpush1.bf16.msra.mxu0 %v704
  %989 = vmatprep.subr.bf16.mxu0 0
  %990 = vmatpush1.bf16.msra.mxu0 %v703
  %991 = vmatprep.subr.bf16.mxu0 0
  %992 = vmatpush1.bf16.msra.mxu0 %v702
  %993 = vmatprep.subr.bf16.mxu0 0
  %994 = vmatpush1.bf16.msra.mxu0 %v701
  %995 = vmatprep.subr.bf16.mxu0 0
  %996 = vmatpush1.bf16.msra.mxu0 %v700
  %997 = vmatprep.subr.bf16.mxu0 0
  %998 = vmatpush1.bf16.msra.mxu0 %v699
  %999 = vmatprep.subr.bf16.mxu0 0
  %1000 = vmatpush1.bf16.msra.mxu0 %v698
  %1001 = vmatprep.subr.bf16.mxu0 0
  %1002 = vmatpush2.bf16.msra.mxu0 %v713
  %1003 = vmatprep.subr.bf16.mxu0 0
  %1004 = vmatpush2.bf16.msra.mxu0 %v712
  %1005 = vmatprep.subr.bf16.mxu0 0
  %1006 = vmatpush2.bf16.msra.mxu0 %v711
  %1007 = vmatprep.subr.bf16.mxu0 0
  %1008 = vmatpush2.bf16.msra.mxu0 %v710
  %1009 = vmatprep.subr.bf16.mxu0 0
  %1010 = vmatpush2.bf16.msra.mxu0 %v709
  %1011 = vmatprep.subr.bf16.mxu0 0
  %1012 = vmatpush2.bf16.msra.mxu0 %v708
  %1013 = vmatprep.subr.bf16.mxu0 0
  %1014 = vmatpush2.bf16.msra.mxu0 %v707
  %1015 = vmatprep.subr.bf16.mxu0 0
  %1016 = vmatpush2.bf16.msra.mxu0 %v706
  %1017 = vmatprep.mubr.bf16.mxu0 %v367
  %1018 = vmatmul.mubr.bf16.gmra.mxu0 %v366
  %v1019 = vpop.f32.mrf.mxu0
  %v1020 = vadd.f32 %v923, %v1019
  %v1021 = vpop.f32.mrf.mxu0
  %v1022 = vpop.f32.mrf.mxu0
  %v1023 = vadd.f32 %v926, %v1022
  %v1024 = vpop.f32.mrf.mxu0
  %1025 = vmatprep.mubr.bf16.mxu0 %v374
  %1026 = vmatmul.mubr.bf16.gmra.mxu0 %v373
  %v1027 = vpop.f32.mrf.mxu0
  %v1028 = vadd.f32 %v931, %v1027
  %v1029 = vpop.f32.mrf.mxu0
  %v1030 = vpop.f32.mrf.mxu0
  %v1031 = vadd.f32 %v934, %v1030
  %v1032 = vpop.f32.mrf.mxu0
  %1033 = vmatprep.mubr.bf16.mxu0 %v381
  %1034 = vmatmul.mubr.bf16.gmra.mxu0 %v380
  %v1035 = vpop.f32.mrf.mxu0
  %v1036 = vadd.f32 %v939, %v1035
  %v1037 = vpop.f32.mrf.mxu0
  %v1038 = vpop.f32.mrf.mxu0
  %v1039 = vadd.f32 %v942, %v1038
  %v1040 = vpop.f32.mrf.mxu0
  %1041 = vmatprep.mubr.bf16.mxu0 %v388
  %1042 = vmatmul.mubr.bf16.gmra.mxu0 %v387
  %v1043 = vpop.f32.mrf.mxu0
  %v1044 = vadd.f32 %v947, %v1043
  %v1045 = vpop.f32.mrf.mxu0
  %v1046 = vpop.f32.mrf.mxu0
  %v1047 = vadd.f32 %v950, %v1046
  %v1048 = vpop.f32.mrf.mxu0
  %1049 = vmatprep.mubr.bf16.mxu0 %v395
  %1050 = vmatmul.mubr.bf16.gmra.mxu0 %v394
  %v1051 = vpop.f32.mrf.mxu0
  %v1052 = vadd.f32 %v955, %v1051
  %v1053 = vpop.f32.mrf.mxu0
  %v1054 = vpop.f32.mrf.mxu0
  %v1055 = vadd.f32 %v958, %v1054
  %v1056 = vpop.f32.mrf.mxu0
  %1057 = vmatprep.mubr.bf16.mxu0 %v402
  %1058 = vmatmul.mubr.bf16.gmra.mxu0 %v401
  %v1059 = vpop.f32.mrf.mxu0
  %v1060 = vadd.f32 %v963, %v1059
  %v1061 = vpop.f32.mrf.mxu0
  %v1062 = vpop.f32.mrf.mxu0
  %v1063 = vadd.f32 %v966, %v1062
  %v1064 = vpop.f32.mrf.mxu0
  %1065 = vmatprep.mubr.bf16.mxu0 %v409
  %1066 = vmatmul.mubr.bf16.gmra.mxu0 %v408
  %v1067 = vpop.f32.mrf.mxu0
  %v1068 = vadd.f32 %v971, %v1067
  %v1069 = vpop.f32.mrf.mxu0
  %v1070 = vpop.f32.mrf.mxu0
  %v1071 = vadd.f32 %v974, %v1070
  %v1072 = vpop.f32.mrf.mxu0
  %1073 = vmatprep.mubr.bf16.mxu0 %v416
  %1074 = vmatmul.mubr.bf16.gmra.mxu0 %v415
  %v1075 = vpop.f32.mrf.mxu0
  %v1076 = vadd.f32 %v979, %v1075
  %v1077 = vpop.f32.mrf.mxu0
  %v1078 = vpop.f32.mrf.mxu0
  %v1079 = vadd.f32 %v982, %v1078
  %v1080 = vpop.f32.mrf.mxu0
  %1081 = vdwg.mxu0
  %1082 = vmatprep.subr.bf16.mxu0 0
  %1083 = vmatpush1.bf16.msra.mxu0 0
  %1084 = vmatprep.subr.bf16.mxu0 0
  %1085 = vmatpush1.bf16.msra.mxu0 0
  %1086 = vmatprep.subr.bf16.mxu0 0
  %1087 = vmatpush1.bf16.msra.mxu0 0
  %1088 = vmatprep.subr.bf16.mxu0 0
  %1089 = vmatpush1.bf16.msra.mxu0 0
  %1090 = vmatprep.subr.bf16.mxu0 0
  %1091 = vmatpush1.bf16.msra.mxu0 0
  %1092 = vmatprep.subr.bf16.mxu0 0
  %1093 = vmatpush1.bf16.msra.mxu0 0
  %1094 = vmatprep.subr.bf16.mxu0 0
  %1095 = vmatpush1.bf16.msra.mxu0 %v715
  %1096 = vmatprep.subr.bf16.mxu0 0
  %1097 = vmatpush1.bf16.msra.mxu0 %v714
  %1098 = vmatprep.subr.bf16.mxu0 0
  %1099 = vmatpush2.bf16.msra.mxu0 0
  %1100 = vmatprep.subr.bf16.mxu0 0
  %1101 = vmatpush2.bf16.msra.mxu0 0
  %1102 = vmatprep.subr.bf16.mxu0 0
  %1103 = vmatpush2.bf16.msra.mxu0 0
  %1104 = vmatprep.subr.bf16.mxu0 0
  %1105 = vmatpush2.bf16.msra.mxu0 0
  %1106 = vmatprep.subr.bf16.mxu0 0
  %1107 = vmatpush2.bf16.msra.mxu0 0
  %1108 = vmatprep.subr.bf16.mxu0 0
  %1109 = vmatpush2.bf16.msra.mxu0 0
  %1110 = vmatprep.subr.bf16.mxu0 0
  %1111 = vmatpush2.bf16.msra.mxu0 0
  %1112 = vmatprep.subr.bf16.mxu0 0
  %1113 = vmatpush2.bf16.msra.mxu0 0
  %1114 = vmatprep.mubr.bf16.mxu0 0
  %1115 = vmatmul.mubr.bf16.gmra.mxu0 %v768
  %v1116 = vpop.f32.mrf.mxu0
  %v1117 = vadd.f32 %v1020, %v1116
  %v1118 = vpop.f32.mrf.mxu0
  %v1119 = vpop.f32.mrf.mxu0
  %v1120 = vadd.f32 %v1023, %v1119
  %v1121 = vpop.f32.mrf.mxu0
  %1122 = vmatprep.mubr.bf16.mxu0 0
  %1123 = vmatmul.mubr.bf16.gmra.mxu0 %v771
  %v1124 = vpop.f32.mrf.mxu0
  %v1125 = vadd.f32 %v1028, %v1124
  %v1126 = vpop.f32.mrf.mxu0
  %v1127 = vpop.f32.mrf.mxu0
  %v1128 = vadd.f32 %v1031, %v1127
  %v1129 = vpop.f32.mrf.mxu0
  %1130 = vmatprep.mubr.bf16.mxu0 0
  %1131 = vmatmul.mubr.bf16.gmra.mxu0 %v774
  %v1132 = vpop.f32.mrf.mxu0
  %v1133 = vadd.f32 %v1036, %v1132
  %v1134 = vpop.f32.mrf.mxu0
  %v1135 = vpop.f32.mrf.mxu0
  %v1136 = vadd.f32 %v1039, %v1135
  %v1137 = vpop.f32.mrf.mxu0
  %1138 = vmatprep.mubr.bf16.mxu0 0
  %1139 = vmatmul.mubr.bf16.gmra.mxu0 %v777
  %v1140 = vpop.f32.mrf.mxu0
  %v1141 = vadd.f32 %v1044, %v1140
  %v1142 = vpop.f32.mrf.mxu0
  %v1143 = vpop.f32.mrf.mxu0
  %v1144 = vadd.f32 %v1047, %v1143
  %v1145 = vpop.f32.mrf.mxu0
  %1146 = vmatprep.mubr.bf16.mxu0 0
  %1147 = vmatmul.mubr.bf16.gmra.mxu0 %v780
  %v1148 = vpop.f32.mrf.mxu0
  %v1149 = vadd.f32 %v1052, %v1148
  %v1150 = vpop.f32.mrf.mxu0
  %v1151 = vpop.f32.mrf.mxu0
  %v1152 = vadd.f32 %v1055, %v1151
  %v1153 = vpop.f32.mrf.mxu0
  %1154 = vmatprep.mubr.bf16.mxu0 0
  %1155 = vmatmul.mubr.bf16.gmra.mxu0 %v783
  %v1156 = vpop.f32.mrf.mxu0
  %v1157 = vadd.f32 %v1060, %v1156
  %v1158 = vpop.f32.mrf.mxu0
  %v1159 = vpop.f32.mrf.mxu0
  %v1160 = vadd.f32 %v1063, %v1159
  %v1161 = vpop.f32.mrf.mxu0
  %1162 = vmatprep.mubr.bf16.mxu0 0
  %1163 = vmatmul.mubr.bf16.gmra.mxu0 %v786
  %v1164 = vpop.f32.mrf.mxu0
  %v1165 = vadd.f32 %v1068, %v1164
  %v1166 = vpop.f32.mrf.mxu0
  %v1167 = vpop.f32.mrf.mxu0
  %v1168 = vadd.f32 %v1071, %v1167
  %v1169 = vpop.f32.mrf.mxu0
  %1170 = vmatprep.mubr.bf16.mxu0 0
  %1171 = vmatmul.mubr.bf16.gmra.mxu0 %v789
  %v1172 = vpop.f32.mrf.mxu0
  %v1173 = vadd.f32 %v1076, %v1172
  %v1174 = vpop.f32.mrf.mxu0
  %v1175 = vpop.f32.mrf.mxu0
  %v1176 = vadd.f32 %v1079, %v1175
  %v1177 = vpop.f32.mrf.mxu0
  %1178 = vdwg.mxu0
  %v1179 = vmax.f32 %v1117, 0.0
  %v1180 = vmax.f32 %v1120, 0.0
  %v1181 = vmax.f32 %v1125, 0.0
  %v1182 = vmax.f32 %v1128, 0.0
  %v1183 = vmax.f32 %v1133, 0.0
  %v1184 = vmax.f32 %v1136, 0.0
  %v1185 = vmax.f32 %v1141, 0.0
  %v1186 = vmax.f32 %v1144, 0.0
  %v1187 = vmax.f32 %v1149, 0.0
  %v1188 = vmax.f32 %v1152, 0.0
  %v1189 = vmax.f32 %v1157, 0.0
  %v1190 = vmax.f32 %v1160, 0.0
  %v1191 = vmax.f32 %v1165, 0.0
  %v1192 = vmax.f32 %v1168, 0.0
  %v1193 = vmax.f32 %v1173, 0.0
  %v1194 = vmax.f32 %v1176, 0.0
  %v1195 = vpack.c.bf16 %v1180, %v1179
  %v1196 = vpack.c.bf16 %v1182, %v1181
  %v1197 = vpack.c.bf16 %v1184, %v1183
  %v1198 = vpack.c.bf16 %v1186, %v1185
  %v1199 = vpack.c.bf16 %v1188, %v1187
  %v1200 = vpack.c.bf16 %v1190, %v1189
  %v1201 = vpack.c.bf16 %v1192, %v1191
  %v1202 = vpack.c.bf16 %v1194, %v1193
  %v1211 = vunpack.c.l.b16 %v1195
  %v1212 = vunpack.c.h.b16 %v1195
  %v1213 = vunpack.c.l.b16 %v1196
  %v1214 = vunpack.c.h.b16 %v1196
  %v1215 = vunpack.c.l.b16 %v1197
  %v1216 = vunpack.c.h.b16 %v1197
  %v1217 = vunpack.c.l.b16 %v1198
  %v1218 = vunpack.c.h.b16 %v1198
  %v1219 = vunpack.c.l.b16 %v1199
  %v1220 = vunpack.c.h.b16 %v1199
  %v1221 = vunpack.c.l.b16 %v1200
  %v1222 = vunpack.c.h.b16 %v1200
  %v1223 = vunpack.c.l.b16 %v1201
  %v1224 = vunpack.c.h.b16 %v1201
  %v1225 = vunpack.c.l.b16 %v1202
  %v1226 = vunpack.c.h.b16 %v1202
  %v1227 = vpack.c.b16 %v1211, %v1211
  %v1228 = vpack.c.b16 %v1212, %v1212
  %v1229 = vpack.c.b16 %v1213, %v1213
  %v1230 = vpack.c.b16 %v1214, %v1214
  %v1231 = vpack.c.b16 %v1215, %v1215
  %v1232 = vpack.c.b16 %v1216, %v1216
  %v1233 = vpack.c.b16 %v1217, %v1217
  %v1234 = vpack.c.b16 %v1218, %v1218
  %v1235 = vpack.c.b16 %v1219, %v1219
  %v1236 = vpack.c.b16 %v1220, %v1220
  %v1237 = vpack.c.b16 %v1221, %v1221
  %v1238 = vpack.c.b16 %v1222, %v1222
  %v1239 = vpack.c.b16 %v1223, %v1223
  %v1240 = vpack.c.b16 %v1224, %v1224
  %v1241 = vpack.c.b16 %v1225, %v1225
  %v1242 = vpack.c.b16 %v1226, %v1226
  %1259 = vst [vmem:[%s3] sm:$0xf] %v1227
  %1260 = vst [vmem:[%s3 + $0x4] sm:$0xf] %v1228
  %1261 = vst [vmem:[%s3 + $0x8] sm:$0xf] %v1229
  %1262 = vst [vmem:[%s3 + $0xc] sm:$0xf] %v1230
  %1263 = vst [vmem:[%s3 + $0x10] sm:$0xf] %v1231
  %1264 = vst [vmem:[%s3 + $0x14] sm:$0xf] %v1232
  %1265 = vst [vmem:[%s3 + $0x18] sm:$0xf] %v1233
  %1266 = vst [vmem:[%s3 + $0x1c] sm:$0xf] %v1234
  %1267 = vst [vmem:[%s3 + $0x20] sm:$0xf] %v1235
  %1268 = vst [vmem:[%s3 + $0x24] sm:$0xf] %v1236
  %1269 = vst [vmem:[%s3 + $0x28] sm:$0xf] %v1237
  %1270 = vst [vmem:[%s3 + $0x2c] sm:$0xf] %v1238
  %1271 = vst [vmem:[%s3 + $0x30] sm:$0xf] %v1239
  %1272 = vst [vmem:[%s3 + $0x34] sm:$0xf] %v1240
  %1273 = vst [vmem:[%s3 + $0x38] sm:$0xf] %v1241
  %1274 = vst [vmem:[%s3 + $0x3c] sm:$0xf] %v1242
  // Predicated region
  $region14: #{ganin_forward.4} parent=0 // pred_check
    _
  $region15: #{ganin_forward.4} parent=0 // pred_check_branch
    %1276 = sbr.rel (0) target = $region17
  $region16: #{ganin_forward.4} parent=0 // pred_region
    _
  $region17: #{ganin_forward.4} parent=0 // pred_fallthru
    _
  // Predicated region
  $region18: #{ganin_forward.4} parent=0 // pred_check
    _
  $region19: #{ganin_forward.4} parent=0 // pred_check_branch
    %1278 = sbr.rel (0) target = $region21
  $region20: #{ganin_forward.4} parent=0 // pred_region
    _
  $region21: #{ganin_forward.4} parent=0 // pred_fallthru
    _

// kernel: ganin_forward.5
$region0: #{ganin_forward.5}
  #allocation0 [shape = 'u32[]', space=smem, size = 0x4, offset = 0x4, fixed_abs, tag = 'smem constant byte address 0x4 - core index']
  #allocation1 [shape = 'u32[144,128]{1,0:T(1,128)}', space=vmem, size = 0x12000, scoped, tag = 'internal scratch']
  %s0 = inlined_call_operand.vmem [shape: bf16[16,768], index: 0, kind: input, shape index: {}]
  %s1 = inlined_call_operand.vmem [shape: bf16[768,256], index: 1, kind: input, shape index: {}]
  %s2 = inlined_call_operand.vmem [shape: f32[1,256], index: 2, kind: input, shape index: {}]
  %s3 = inlined_call_operand.vmem [shape: bf16[256,128], index: 3, kind: input, shape index: {}]
  %s4 = inlined_call_operand.vmem [shape: f32[1,128], index: 4, kind: input, shape index: {}]
  %s5 = inlined_call_operand.vmem [shape: bf16[128,128], index: 5, kind: input, shape index: {}]
  %s6 = inlined_call_operand.vmem [shape: f32[1,128], index: 6, kind: input, shape index: {}]
  %s7 = inlined_call_operand.vmem [shape: bf16[256,128], index: 7, kind: input, shape index: {}]
  %s8 = inlined_call_operand.vmem [shape: f32[1,128], index: 8, kind: input, shape index: {}]
  %s9 = inlined_call_operand.vmem [shape: f32[16,128], index: 9, kind: output, shape index: {0}]
  %s10 = inlined_call_operand.vmem [shape: f32[16,128], index: 10, kind: output, shape index: {1}]
  %11 = xla_tuple %s9, %s10
  %s12 = sld [smem:[#allocation0]]
  $region54: #{ganin_forward.5} parent=0
    _
  %s14 = ssub.s32 1, %s12
  %s15 = scalar_select 0, %s14, %s12
  // Predicated region
  $region2: #{ganin_forward.5} parent=0 // pred_check
    _
  $region3: #{ganin_forward.5} parent=0 // pred_check_branch
    %17 = sbr.rel (0) target = $region5
  $region4: #{ganin_forward.5} parent=0 // pred_region
    _
  $region5: #{ganin_forward.5} parent=0 // pred_fallthru
    _
  // Predicated region
  $region6: #{ganin_forward.5} parent=0 // pred_check
    _
  $region7: #{ganin_forward.5} parent=0 // pred_check_branch
    %19 = sbr.rel (0) target = $region9
  $region8: #{ganin_forward.5} parent=0 // pred_region
    _
  $region9: #{ganin_forward.5} parent=0 // pred_fallthru
    _
  // Predicated region
  $region10: #{ganin_forward.5} parent=0 // pred_check
    _
  $region11: #{ganin_forward.5} parent=0 // pred_check_branch
    %21 = sbr.rel (0) target = $region13
  $region12: #{ganin_forward.5} parent=0 // pred_region
    _
  $region13: #{ganin_forward.5} parent=0 // pred_fallthru
    _
  // Predicated region
  $region14: #{ganin_forward.5} parent=0 // pred_check
    _
  $region15: #{ganin_forward.5} parent=0 // pred_check_branch
    %23 = sbr.rel (0) target = $region17
  $region16: #{ganin_forward.5} parent=0 // pred_region
    _
  $region17: #{ganin_forward.5} parent=0 // pred_fallthru
    _
  // Predicated region
  $region18: #{ganin_forward.5} parent=0 // pred_check
    _
  $region19: #{ganin_forward.5} parent=0 // pred_check_branch
    %25 = sbr.rel (0) target = $region21
  $region20: #{ganin_forward.5} parent=0 // pred_region
    _
  $region21: #{ganin_forward.5} parent=0 // pred_fallthru
    _
  // Predicated region
  $region22: #{ganin_forward.5} parent=0 // pred_check
    _
  $region23: #{ganin_forward.5} parent=0 // pred_check_branch
    %27 = sbr.rel (0) target = $region25
  $region24: #{ganin_forward.5} parent=0 // pred_region
    _
  $region25: #{ganin_forward.5} parent=0 // pred_fallthru
    _
  // Predicated region
  $region26: #{ganin_forward.5} parent=0 // pred_check
    _
  $region27: #{ganin_forward.5} parent=0 // pred_check_branch
    %29 = sbr.rel (0) target = $region29
  $region28: #{ganin_forward.5} parent=0 // pred_region
    _
  $region29: #{ganin_forward.5} parent=0 // pred_fallthru
    _
  // Predicated region
  $region30: #{ganin_forward.5} parent=0 // pred_check
    _
  $region31: #{ganin_forward.5} parent=0 // pred_check_branch
    %31 = sbr.rel (0) target = $region33
  $region32: #{ganin_forward.5} parent=0 // pred_region
    _
  $region33: #{ganin_forward.5} parent=0 // pred_fallthru
    _
  // Predicated region
  $region34: #{ganin_forward.5} parent=0 // pred_check
    _
  $region35: #{ganin_forward.5} parent=0 // pred_check_branch
    %33 = sbr.rel (0) target = $region37
  $region36: #{ganin_forward.5} parent=0 // pred_region
    _
  $region37: #{ganin_forward.5} parent=0 // pred_fallthru
    _
  %v35 = vld [vmem:[%s0] sm:$0xff]
  %v36 = vld [vmem:[%s0 + $0x8] sm:$0xff]
  %v37 = vld [vmem:[%s0 + $0x10] sm:$0xff]
  %v38 = vld [vmem:[%s0 + $0x18] sm:$0xff]
  %v39 = vld [vmem:[%s0 + $0x20] sm:$0xff]
  %v40 = vld [vmem:[%s0 + $0x28] sm:$0xff]
  %v41 = vld [vmem:[%s1] sm:$0xff]
  %v42 = vld [vmem:[%s1 + $0x8] sm:$0xff]
  %v43 = vld [vmem:[%s1 + $0x10] sm:$0xff]
  %v44 = vld [vmem:[%s1 + $0x18] sm:$0xff]
  %v45 = vld [vmem:[%s1 + $0x20] sm:$0xff]
  %v46 = vld [vmem:[%s1 + $0x28] sm:$0xff]
  %v47 = vld [vmem:[%s1 + $0x30] sm:$0xff]
  %v48 = vld [vmem:[%s1 + $0x38] sm:$0xff]
  %v49 = vld [vmem:[%s1 + $0x40] sm:$0xff]
  %v50 = vld [vmem:[%s1 + $0x48] sm:$0xff]
  %v51 = vld [vmem:[%s1 + $0x50] sm:$0xff]
  %v52 = vld [vmem:[%s1 + $0x58] sm:$0xff]
  %v53 = vld [vmem:[%s1 + $0x60] sm:$0xff]
  %v54 = vld [vmem:[%s1 + $0x68] sm:$0xff]
  %v55 = vld [vmem:[%s1 + $0x70] sm:$0xff]
  %v56 = vld [vmem:[%s1 + $0x78] sm:$0xff]
  %v57 = vld [vmem:[%s1 + $0x80] sm:$0xff]
  %v58 = vld [vmem:[%s1 + $0x88] sm:$0xff]
  %v59 = vld [vmem:[%s1 + $0x90] sm:$0xff]
  %v60 = vld [vmem:[%s1 + $0x98] sm:$0xff]
  %v61 = vld [vmem:[%s1 + $0xa0] sm:$0xff]
  %v62 = vld [vmem:[%s1 + $0xa8] sm:$0xff]
  %v63 = vld [vmem:[%s1 + $0xb0] sm:$0xff]
  %v64 = vld [vmem:[%s1 + $0xb8] sm:$0xff]
  %v65 = vld [vmem:[%s1 + $0xc0] sm:$0xff]
  %v66 = vld [vmem:[%s1 + $0xc8] sm:$0xff]
  %v67 = vld [vmem:[%s1 + $0xd0] sm:$0xff]
  %v68 = vld [vmem:[%s1 + $0xd8] sm:$0xff]
  %v69 = vld [vmem:[%s1 + $0xe0] sm:$0xff]
  %v70 = vld [vmem:[%s1 + $0xe8] sm:$0xff]
  %v71 = vld [vmem:[%s1 + $0xf0] sm:$0xff]
  %v72 = vld [vmem:[%s1 + $0xf8] sm:$0xff]
  %v73 = vld [vmem:[%s1 + $0x100] sm:$0xff]
  %v74 = vld [vmem:[%s1 + $0x108] sm:$0xff]
  %v75 = vld [vmem:[%s1 + $0x110] sm:$0xff]
  %v76 = vld [vmem:[%s1 + $0x118] sm:$0xff]
  %v77 = vld [vmem:[%s1 + $0x120] sm:$0xff]
  %v78 = vld [vmem:[%s1 + $0x128] sm:$0xff]
  %v79 = vld [vmem:[%s1 + $0x130] sm:$0xff]
  %v80 = vld [vmem:[%s1 + $0x138] sm:$0xff]
  %v81 = vld [vmem:[%s1 + $0x140] sm:$0xff]
  %v82 = vld [vmem:[%s1 + $0x148] sm:$0xff]
  %v83 = vld [vmem:[%s1 + $0x150] sm:$0xff]
  %v84 = vld [vmem:[%s1 + $0x158] sm:$0xff]
  %v85 = vld [vmem:[%s1 + $0x160] sm:$0xff]
  %v86 = vld [vmem:[%s1 + $0x168] sm:$0xff]
  %v87 = vld [vmem:[%s1 + $0x170] sm:$0xff]
  %v88 = vld [vmem:[%s1 + $0x178] sm:$0xff]
  %v89 = vld [vmem:[%s1 + $0x180] sm:$0xff]
  %v90 = vld [vmem:[%s1 + $0x188] sm:$0xff]
  %v91 = vld [vmem:[%s1 + $0x190] sm:$0xff]
  %v92 = vld [vmem:[%s1 + $0x198] sm:$0xff]
  %v93 = vld [vmem:[%s1 + $0x1a0] sm:$0xff]
  %v94 = vld [vmem:[%s1 + $0x1a8] sm:$0xff]
  %v95 = vld [vmem:[%s1 + $0x1b0] sm:$0xff]
  %v96 = vld [vmem:[%s1 + $0x1b8] sm:$0xff]
  %v97 = vld [vmem:[%s1 + $0x1c0] sm:$0xff]
  %v98 = vld [vmem:[%s1 + $0x1c8] sm:$0xff]
  %v99 = vld [vmem:[%s1 + $0x1d0] sm:$0xff]
  %v100 = vld [vmem:[%s1 + $0x1d8] sm:$0xff]
  %v101 = vld [vmem:[%s1 + $0x1e0] sm:$0xff]
  %v102 = vld [vmem:[%s1 + $0x1e8] sm:$0xff]
  %v103 = vld [vmem:[%s1 + $0x1f0] sm:$0xff]
  %v104 = vld [vmem:[%s1 + $0x1f8] sm:$0xff]
  %v105 = vld [vmem:[%s1 + $0x200] sm:$0xff]
  %v106 = vld [vmem:[%s1 + $0x208] sm:$0xff]
  %v107 = vld [vmem:[%s1 + $0x210] sm:$0xff]
  %v108 = vld [vmem:[%s1 + $0x218] sm:$0xff]
  %v109 = vld [vmem:[%s1 + $0x220] sm:$0xff]
  %v110 = vld [vmem:[%s1 + $0x228] sm:$0xff]
  %v111 = vld [vmem:[%s1 + $0x230] sm:$0xff]
  %v112 = vld [vmem:[%s1 + $0x238] sm:$0xff]
  %v113 = vld [vmem:[%s1 + $0x240] sm:$0xff]
  %v114 = vld [vmem:[%s1 + $0x248] sm:$0xff]
  %v115 = vld [vmem:[%s1 + $0x250] sm:$0xff]
  %v116 = vld [vmem:[%s1 + $0x258] sm:$0xff]
  %v117 = vld [vmem:[%s1 + $0x260] sm:$0xff]
  %v118 = vld [vmem:[%s1 + $0x268] sm:$0xff]
  %v119 = vld [vmem:[%s1 + $0x270] sm:$0xff]
  %v120 = vld [vmem:[%s1 + $0x278] sm:$0xff]
  %v121 = vld [vmem:[%s1 + $0x280] sm:$0xff]
  %v122 = vld [vmem:[%s1 + $0x288] sm:$0xff]
  %v123 = vld [vmem:[%s1 + $0x290] sm:$0xff]
  %v124 = vld [vmem:[%s1 + $0x298] sm:$0xff]
  %v125 = vld [vmem:[%s1 + $0x2a0] sm:$0xff]
  %v126 = vld [vmem:[%s1 + $0x2a8] sm:$0xff]
  %v127 = vld [vmem:[%s1 + $0x2b0] sm:$0xff]
  %v128 = vld [vmem:[%s1 + $0x2b8] sm:$0xff]
  %v129 = vld [vmem:[%s1 + $0x2c0] sm:$0xff]
  %v130 = vld [vmem:[%s1 + $0x2c8] sm:$0xff]
  %v131 = vld [vmem:[%s1 + $0x2d0] sm:$0xff]
  %v132 = vld [vmem:[%s1 + $0x2d8] sm:$0xff]
  %v133 = vld [vmem:[%s1 + $0x2e0] sm:$0xff]
  %v134 = vld [vmem:[%s1 + $0x2e8] sm:$0xff]
  %v135 = vld [vmem:[%s1 + $0x2f0] sm:$0xff]
  %v136 = vld [vmem:[%s1 + $0x2f8] sm:$0xff]
  %v137 = vld [vmem:[%s2] sm:$0x3]
  %v139 = vlaneseq
  %v140 = vshrl.u32 %v139, 7
  %v141 = vsub.s32 0, %v140
  %v142 = vrot.slane %v137, %v141
  %v143 = vlaneseq
  %v144 = vshrl.u32 %v143, 7
  %v145 = vsub.s32 1, %v144
  %v146 = vrot.slane %v137, %v145
  %v155 = vunpack.c.l.b16 %v35
  %v156 = vunpack.c.h.b16 %v35
  %v157 = vunpack.c.l.b16 %v36
  %v158 = vunpack.c.h.b16 %v36
  %v159 = vunpack.c.l.b16 %v37
  %v160 = vunpack.c.h.b16 %v37
  %v161 = vunpack.c.l.b16 %v38
  %v162 = vunpack.c.h.b16 %v38
  %v163 = vunpack.c.l.b16 %v39
  %v164 = vunpack.c.h.b16 %v39
  %v165 = vunpack.c.l.b16 %v40
  %v166 = vunpack.c.h.b16 %v40
  %v167 = vpack.c.b16 %v161, %v155
  %v168 = vpack.c.b16 %v162, %v156
  %v169 = vpack.c.b16 %v163, %v157
  %v170 = vpack.c.b16 %v164, %v158
  %v171 = vpack.c.b16 %v165, %v159
  %v172 = vpack.c.b16 %v166, %v160
  %v275 = vunpack.c.l.b16 %v41
  %v276 = vunpack.c.h.b16 %v41
  %v277 = vunpack.c.l.b16 %v42
  %v278 = vunpack.c.h.b16 %v42
  %v279 = vunpack.c.l.b16 %v43
  %v280 = vunpack.c.h.b16 %v43
  %v281 = vunpack.c.l.b16 %v44
  %v282 = vunpack.c.h.b16 %v44
  %v283 = vunpack.c.l.b16 %v45
  %v284 = vunpack.c.h.b16 %v45
  %v285 = vunpack.c.l.b16 %v46
  %v286 = vunpack.c.h.b16 %v46
  %v287 = vunpack.c.l.b16 %v47
  %v288 = vunpack.c.h.b16 %v47
  %v289 = vunpack.c.l.b16 %v48
  %v290 = vunpack.c.h.b16 %v48
  %v291 = vunpack.c.l.b16 %v49
  %v292 = vunpack.c.h.b16 %v49
  %v293 = vunpack.c.l.b16 %v50
  %v294 = vunpack.c.h.b16 %v50
  %v295 = vunpack.c.l.b16 %v51
  %v296 = vunpack.c.h.b16 %v51
  %v297 = vunpack.c.l.b16 %v52
  %v298 = vunpack.c.h.b16 %v52
  %v299 = vunpack.c.l.b16 %v53
  %v300 = vunpack.c.h.b16 %v53
  %v301 = vunpack.c.l.b16 %v54
  %v302 = vunpack.c.h.b16 %v54
  %v303 = vunpack.c.l.b16 %v55
  %v304 = vunpack.c.h.b16 %v55
  %v305 = vunpack.c.l.b16 %v56
  %v306 = vunpack.c.h.b16 %v56
  %v307 = vunpack.c.l.b16 %v57
  %v308 = vunpack.c.h.b16 %v57
  %v309 = vunpack.c.l.b16 %v58
  %v310 = vunpack.c.h.b16 %v58
  %v311 = vunpack.c.l.b16 %v59
  %v312 = vunpack.c.h.b16 %v59
  %v313 = vunpack.c.l.b16 %v60
  %v314 = vunpack.c.h.b16 %v60
  %v315 = vunpack.c.l.b16 %v61
  %v316 = vunpack.c.h.b16 %v61
  %v317 = vunpack.c.l.b16 %v62
  %v318 = vunpack.c.h.b16 %v62
  %v319 = vunpack.c.l.b16 %v63
  %v320 = vunpack.c.h.b16 %v63
  %v321 = vunpack.c.l.b16 %v64
  %v322 = vunpack.c.h.b16 %v64
  %v323 = vunpack.c.l.b16 %v65
  %v324 = vunpack.c.h.b16 %v65
  %v325 = vunpack.c.l.b16 %v66
  %v326 = vunpack.c.h.b16 %v66
  %v327 = vunpack.c.l.b16 %v67
  %v328 = vunpack.c.h.b16 %v67
  %v329 = vunpack.c.l.b16 %v68
  %v330 = vunpack.c.h.b16 %v68
  %v331 = vunpack.c.l.b16 %v69
  %v332 = vunpack.c.h.b16 %v69
  %v333 = vunpack.c.l.b16 %v70
  %v334 = vunpack.c.h.b16 %v70
  %v335 = vunpack.c.l.b16 %v71
  %v336 = vunpack.c.h.b16 %v71
  %v337 = vunpack.c.l.b16 %v72
  %v338 = vunpack.c.h.b16 %v72
  %v339 = vunpack.c.l.b16 %v73
  %v340 = vunpack.c.h.b16 %v73
  %v341 = vunpack.c.l.b16 %v74
  %v342 = vunpack.c.h.b16 %v74
  %v343 = vunpack.c.l.b16 %v75
  %v344 = vunpack.c.h.b16 %v75
  %v345 = vunpack.c.l.b16 %v76
  %v346 = vunpack.c.h.b16 %v76
  %v347 = vunpack.c.l.b16 %v77
  %v348 = vunpack.c.h.b16 %v77
  %v349 = vunpack.c.l.b16 %v78
  %v350 = vunpack.c.h.b16 %v78
  %v351 = vunpack.c.l.b16 %v79
  %v352 = vunpack.c.h.b16 %v79
  %v353 = vunpack.c.l.b16 %v80
  %v354 = vunpack.c.h.b16 %v80
  %v355 = vunpack.c.l.b16 %v81
  %v356 = vunpack.c.h.b16 %v81
  %v357 = vunpack.c.l.b16 %v82
  %v358 = vunpack.c.h.b16 %v82
  %v359 = vunpack.c.l.b16 %v83
  %v360 = vunpack.c.h.b16 %v83
  %v361 = vunpack.c.l.b16 %v84
  %v362 = vunpack.c.h.b16 %v84
  %v363 = vunpack.c.l.b16 %v85
  %v364 = vunpack.c.h.b16 %v85
  %v365 = vunpack.c.l.b16 %v86
  %v366 = vunpack.c.h.b16 %v86
  %v367 = vunpack.c.l.b16 %v87
  %v368 = vunpack.c.h.b16 %v87
  %v369 = vunpack.c.l.b16 %v88
  %v370 = vunpack.c.h.b16 %v88
  %v371 = vunpack.c.l.b16 %v89
  %v372 = vunpack.c.h.b16 %v89
  %v373 = vunpack.c.l.b16 %v90
  %v374 = vunpack.c.h.b16 %v90
  %v375 = vunpack.c.l.b16 %v91
  %v376 = vunpack.c.h.b16 %v91
  %v377 = vunpack.c.l.b16 %v92
  %v378 = vunpack.c.h.b16 %v92
  %v379 = vunpack.c.l.b16 %v93
  %v380 = vunpack.c.h.b16 %v93
  %v381 = vunpack.c.l.b16 %v94
  %v382 = vunpack.c.h.b16 %v94
  %v383 = vunpack.c.l.b16 %v95
  %v384 = vunpack.c.h.b16 %v95
  %v385 = vunpack.c.l.b16 %v96
  %v386 = vunpack.c.h.b16 %v96
  %v387 = vunpack.c.l.b16 %v97
  %v388 = vunpack.c.h.b16 %v97
  %v389 = vunpack.c.l.b16 %v98
  %v390 = vunpack.c.h.b16 %v98
  %v391 = vunpack.c.l.b16 %v99
  %v392 = vunpack.c.h.b16 %v99
  %v393 = vunpack.c.l.b16 %v100
  %v394 = vunpack.c.h.b16 %v100
  %v395 = vunpack.c.l.b16 %v101
  %v396 = vunpack.c.h.b16 %v101
  %v397 = vunpack.c.l.b16 %v102
  %v398 = vunpack.c.h.b16 %v102
  %v399 = vunpack.c.l.b16 %v103
  %v400 = vunpack.c.h.b16 %v103
  %v401 = vunpack.c.l.b16 %v104
  %v402 = vunpack.c.h.b16 %v104
  %v403 = vunpack.c.l.b16 %v105
  %v404 = vunpack.c.h.b16 %v105
  %v405 = vunpack.c.l.b16 %v106
  %v406 = vunpack.c.h.b16 %v106
  %v407 = vunpack.c.l.b16 %v107
  %v408 = vunpack.c.h.b16 %v107
  %v409 = vunpack.c.l.b16 %v108
  %v410 = vunpack.c.h.b16 %v108
  %v411 = vunpack.c.l.b16 %v109
  %v412 = vunpack.c.h.b16 %v109
  %v413 = vunpack.c.l.b16 %v110
  %v414 = vunpack.c.h.b16 %v110
  %v415 = vunpack.c.l.b16 %v111
  %v416 = vunpack.c.h.b16 %v111
  %v417 = vunpack.c.l.b16 %v112
  %v418 = vunpack.c.h.b16 %v112
  %v419 = vunpack.c.l.b16 %v113
  %v420 = vunpack.c.h.b16 %v113
  %v421 = vunpack.c.l.b16 %v114
  %v422 = vunpack.c.h.b16 %v114
  %v423 = vunpack.c.l.b16 %v115
  %v424 = vunpack.c.h.b16 %v115
  %v425 = vunpack.c.l.b16 %v116
  %v426 = vunpack.c.h.b16 %v116
  %v427 = vunpack.c.l.b16 %v117
  %v428 = vunpack.c.h.b16 %v117
  %v429 = vunpack.c.l.b16 %v118
  %v430 = vunpack.c.h.b16 %v118
  %v431 = vunpack.c.l.b16 %v119
  %v432 = vunpack.c.h.b16 %v119
  %v433 = vunpack.c.l.b16 %v120
  %v434 = vunpack.c.h.b16 %v120
  %v435 = vunpack.c.l.b16 %v121
  %v436 = vunpack.c.h.b16 %v121
  %v437 = vunpack.c.l.b16 %v122
  %v438 = vunpack.c.h.b16 %v122
  %v439 = vunpack.c.l.b16 %v123
  %v440 = vunpack.c.h.b16 %v123
  %v441 = vunpack.c.l.b16 %v124
  %v442 = vunpack.c.h.b16 %v124
  %v443 = vunpack.c.l.b16 %v125
  %v444 = vunpack.c.h.b16 %v125
  %v445 = vunpack.c.l.b16 %v126
  %v446 = vunpack.c.h.b16 %v126
  %v447 = vunpack.c.l.b16 %v127
  %v448 = vunpack.c.h.b16 %v127
  %v449 = vunpack.c.l.b16 %v128
  %v450 = vunpack.c.h.b16 %v128
  %v451 = vunpack.c.l.b16 %v129
  %v452 = vunpack.c.h.b16 %v129
  %v453 = vunpack.c.l.b16 %v130
  %v454 = vunpack.c.h.b16 %v130
  %v455 = vunpack.c.l.b16 %v131
  %v456 = vunpack.c.h.b16 %v131
  %v457 = vunpack.c.l.b16 %v132
  %v458 = vunpack.c.h.b16 %v132
  %v459 = vunpack.c.l.b16 %v133
  %v460 = vunpack.c.h.b16 %v133
  %v461 = vunpack.c.l.b16 %v134
  %v462 = vunpack.c.h.b16 %v134
  %v463 = vunpack.c.l.b16 %v135
  %v464 = vunpack.c.h.b16 %v135
  %v465 = vunpack.c.l.b16 %v136
  %v466 = vunpack.c.h.b16 %v136
  %v467 = vpack.c.b16 %v277, %v275
  %v468 = vpack.c.b16 %v278, %v276
  %v469 = vpack.c.b16 %v281, %v279
  %v470 = vpack.c.b16 %v282, %v280
  %v471 = vpack.c.b16 %v285, %v283
  %v472 = vpack.c.b16 %v286, %v284
  %v473 = vpack.c.b16 %v289, %v287
  %v474 = vpack.c.b16 %v290, %v288
  %v475 = vpack.c.b16 %v293, %v291
  %v476 = vpack.c.b16 %v294, %v292
  %v477 = vpack.c.b16 %v297, %v295
  %v478 = vpack.c.b16 %v298, %v296
  %v479 = vpack.c.b16 %v301, %v299
  %v480 = vpack.c.b16 %v302, %v300
  %v481 = vpack.c.b16 %v305, %v303
  %v482 = vpack.c.b16 %v306, %v304
  %v483 = vpack.c.b16 %v309, %v307
  %v484 = vpack.c.b16 %v310, %v308
  %v485 = vpack.c.b16 %v313, %v311
  %v486 = vpack.c.b16 %v314, %v312
  %v487 = vpack.c.b16 %v317, %v315
  %v488 = vpack.c.b16 %v318, %v316
  %v489 = vpack.c.b16 %v321, %v319
  %v490 = vpack.c.b16 %v322, %v320
  %v491 = vpack.c.b16 %v325, %v323
  %v492 = vpack.c.b16 %v326, %v324
  %v493 = vpack.c.b16 %v329, %v327
  %v494 = vpack.c.b16 %v330, %v328
  %v495 = vpack.c.b16 %v333, %v331
  %v496 = vpack.c.b16 %v334, %v332
  %v497 = vpack.c.b16 %v337, %v335
  %v498 = vpack.c.b16 %v338, %v336
  %v499 = vpack.c.b16 %v341, %v339
  %v500 = vpack.c.b16 %v342, %v340
  %v501 = vpack.c.b16 %v345, %v343
  %v502 = vpack.c.b16 %v346, %v344
  %v503 = vpack.c.b16 %v349, %v347
  %v504 = vpack.c.b16 %v350, %v348
  %v505 = vpack.c.b16 %v353, %v351
  %v506 = vpack.c.b16 %v354, %v352
  %v507 = vpack.c.b16 %v357, %v355
  %v508 = vpack.c.b16 %v358, %v356
  %v509 = vpack.c.b16 %v361, %v359
  %v510 = vpack.c.b16 %v362, %v360
  %v511 = vpack.c.b16 %v365, %v363
  %v512 = vpack.c.b16 %v366, %v364
  %v513 = vpack.c.b16 %v369, %v367
  %v514 = vpack.c.b16 %v370, %v368
  %v515 = vpack.c.b16 %v373, %v371
  %v516 = vpack.c.b16 %v374, %v372
  %v517 = vpack.c.b16 %v377, %v375
  %v518 = vpack.c.b16 %v378, %v376
  %v519 = vpack.c.b16 %v381, %v379
  %v520 = vpack.c.b16 %v382, %v380
  %v521 = vpack.c.b16 %v385, %v383
  %v522 = vpack.c.b16 %v386, %v384
  %v523 = vpack.c.b16 %v389, %v387
  %v524 = vpack.c.b16 %v390, %v388
  %v525 = vpack.c.b16 %v393, %v391
  %v526 = vpack.c.b16 %v394, %v392
  %v527 = vpack.c.b16 %v397, %v395
  %v528 = vpack.c.b16 %v398, %v396
  %v529 = vpack.c.b16 %v401, %v399
  %v530 = vpack.c.b16 %v402, %v400
  %v531 = vpack.c.b16 %v405, %v403
  %v532 = vpack.c.b16 %v406, %v404
  %v533 = vpack.c.b16 %v409, %v407
  %v534 = vpack.c.b16 %v410, %v408
  %v535 = vpack.c.b16 %v413, %v411
  %v536 = vpack.c.b16 %v414, %v412
  %v537 = vpack.c.b16 %v417, %v415
  %v538 = vpack.c.b16 %v418, %v416
  %v539 = vpack.c.b16 %v421, %v419
  %v540 = vpack.c.b16 %v422, %v420
  %v541 = vpack.c.b16 %v425, %v423
  %v542 = vpack.c.b16 %v426, %v424
  %v543 = vpack.c.b16 %v429, %v427
  %v544 = vpack.c.b16 %v430, %v428
  %v545 = vpack.c.b16 %v433, %v431
  %v546 = vpack.c.b16 %v434, %v432
  %v547 = vpack.c.b16 %v437, %v435
  %v548 = vpack.c.b16 %v438, %v436
  %v549 = vpack.c.b16 %v441, %v439
  %v550 = vpack.c.b16 %v442, %v440
  %v551 = vpack.c.b16 %v445, %v443
  %v552 = vpack.c.b16 %v446, %v444
  %v553 = vpack.c.b16 %v449, %v447
  %v554 = vpack.c.b16 %v450, %v448
  %v555 = vpack.c.b16 %v453, %v451
  %v556 = vpack.c.b16 %v454, %v452
  %v557 = vpack.c.b16 %v457, %v455
  %v558 = vpack.c.b16 %v458, %v456
  %v559 = vpack.c.b16 %v461, %v459
  %v560 = vpack.c.b16 %v462, %v460
  %v561 = vpack.c.b16 %v465, %v463
  %v562 = vpack.c.b16 %v466, %v464
  %659 = vmatprep.subr.bf16.mxu0 %v482
  %660 = vmatpush1.bf16.msra.mxu0 %v481
  %661 = vmatprep.subr.bf16.mxu0 %v480
  %662 = vmatpush1.bf16.msra.mxu0 %v479
  %663 = vmatprep.subr.bf16.mxu0 %v478
  %664 = vmatpush1.bf16.msra.mxu0 %v477
  %665 = vmatprep.subr.bf16.mxu0 %v476
  %666 = vmatpush1.bf16.msra.mxu0 %v475
  %667 = vmatprep.subr.bf16.mxu0 %v474
  %668 = vmatpush1.bf16.msra.mxu0 %v473
  %669 = vmatprep.subr.bf16.mxu0 %v472
  %670 = vmatpush1.bf16.msra.mxu0 %v471
  %671 = vmatprep.subr.bf16.mxu0 %v470
  %672 = vmatpush1.bf16.msra.mxu0 %v469
  %673 = vmatprep.subr.bf16.mxu0 %v468
  %674 = vmatpush1.bf16.msra.mxu0 %v467
  %675 = vmatprep.subr.bf16.mxu0 %v498
  %676 = vmatpush2.bf16.msra.mxu0 %v497
  %677 = vmatprep.subr.bf16.mxu0 %v496
  %678 = vmatpush2.bf16.msra.mxu0 %v495
  %679 = vmatprep.subr.bf16.mxu0 %v494
  %680 = vmatpush2.bf16.msra.mxu0 %v493
  %681 = vmatprep.subr.bf16.mxu0 %v492
  %682 = vmatpush2.bf16.msra.mxu0 %v491
  %683 = vmatprep.subr.bf16.mxu0 %v490
  %684 = vmatpush2.bf16.msra.mxu0 %v489
  %685 = vmatprep.subr.bf16.mxu0 %v488
  %686 = vmatpush2.bf16.msra.mxu0 %v487
  %687 = vmatprep.subr.bf16.mxu0 %v486
  %688 = vmatpush2.bf16.msra.mxu0 %v485
  %689 = vmatprep.subr.bf16.mxu0 %v484
  %690 = vmatpush2.bf16.msra.mxu0 %v483
  %691 = vmatprep.mubr.bf16.mxu0 %v168
  %692 = vmatmul.mubr.bf16.gmra.mxu0 %v167
  %v693 = vpop.f32.mrf.mxu0
  %v694 = vadd.f32 %v142, %v693
  %v695 = vpop.f32.mrf.mxu0
  %v696 = vadd.f32 %v146, %v695
  %v697 = vpop.f32.mrf.mxu0
  %v698 = vadd.f32 %v142, %v697
  %v699 = vpop.f32.mrf.mxu0
  %v700 = vadd.f32 %v146, %v699
  %701 = vdwg.mxu0
  %702 = vmatprep.subr.bf16.mxu0 %v514
  %703 = vmatpush1.bf16.msra.mxu0 %v513
  %704 = vmatprep.subr.bf16.mxu0 %v512
  %705 = vmatpush1.bf16.msra.mxu0 %v511
  %706 = vmatprep.subr.bf16.mxu0 %v510
  %707 = vmatpush1.bf16.msra.mxu0 %v509
  %708 = vmatprep.subr.bf16.mxu0 %v508
  %709 = vmatpush1.bf16.msra.mxu0 %v507
  %710 = vmatprep.subr.bf16.mxu0 %v506
  %711 = vmatpush1.bf16.msra.mxu0 %v505
  %712 = vmatprep.subr.bf16.mxu0 %v504
  %713 = vmatpush1.bf16.msra.mxu0 %v503
  %714 = vmatprep.subr.bf16.mxu0 %v502
  %715 = vmatpush1.bf16.msra.mxu0 %v501
  %716 = vmatprep.subr.bf16.mxu0 %v500
  %717 = vmatpush1.bf16.msra.mxu0 %v499
  %718 = vmatprep.subr.bf16.mxu0 %v530
  %719 = vmatpush2.bf16.msra.mxu0 %v529
  %720 = vmatprep.subr.bf16.mxu0 %v528
  %721 = vmatpush2.bf16.msra.mxu0 %v527
  %722 = vmatprep.subr.bf16.mxu0 %v526
  %723 = vmatpush2.bf16.msra.mxu0 %v525
  %724 = vmatprep.subr.bf16.mxu0 %v524
  %725 = vmatpush2.bf16.msra.mxu0 %v523
  %726 = vmatprep.subr.bf16.mxu0 %v522
  %727 = vmatpush2.bf16.msra.mxu0 %v521
  %728 = vmatprep.subr.bf16.mxu0 %v520
  %729 = vmatpush2.bf16.msra.mxu0 %v519
  %730 = vmatprep.subr.bf16.mxu0 %v518
  %731 = vmatpush2.bf16.msra.mxu0 %v517
  %732 = vmatprep.subr.bf16.mxu0 %v516
  %733 = vmatpush2.bf16.msra.mxu0 %v515
  %734 = vmatprep.mubr.bf16.mxu0 %v170
  %735 = vmatmul.mubr.bf16.gmra.mxu0 %v169
  %v736 = vpop.f32.mrf.mxu0
  %v737 = vadd.f32 %v694, %v736
  %v738 = vpop.f32.mrf.mxu0
  %v739 = vadd.f32 %v696, %v738
  %v740 = vpop.f32.mrf.mxu0
  %v741 = vadd.f32 %v698, %v740
  %v742 = vpop.f32.mrf.mxu0
  %v743 = vadd.f32 %v700, %v742
  %744 = vdwg.mxu0
  %745 = vmatprep.subr.bf16.mxu0 %v546
  %746 = vmatpush1.bf16.msra.mxu0 %v545
  %747 = vmatprep.subr.bf16.mxu0 %v544
  %748 = vmatpush1.bf16.msra.mxu0 %v543
  %749 = vmatprep.subr.bf16.mxu0 %v542
  %750 = vmatpush1.bf16.msra.mxu0 %v541
  %751 = vmatprep.subr.bf16.mxu0 %v540
  %752 = vmatpush1.bf16.msra.mxu0 %v539
  %753 = vmatprep.subr.bf16.mxu0 %v538
  %754 = vmatpush1.bf16.msra.mxu0 %v537
  %755 = vmatprep.subr.bf16.mxu0 %v536
  %756 = vmatpush1.bf16.msra.mxu0 %v535
  %757 = vmatprep.subr.bf16.mxu0 %v534
  %758 = vmatpush1.bf16.msra.mxu0 %v533
  %759 = vmatprep.subr.bf16.mxu0 %v532
  %760 = vmatpush1.bf16.msra.mxu0 %v531
  %761 = vmatprep.subr.bf16.mxu0 %v562
  %762 = vmatpush2.bf16.msra.mxu0 %v561
  %763 = vmatprep.subr.bf16.mxu0 %v560
  %764 = vmatpush2.bf16.msra.mxu0 %v559
  %765 = vmatprep.subr.bf16.mxu0 %v558
  %766 = vmatpush2.bf16.msra.mxu0 %v557
  %767 = vmatprep.subr.bf16.mxu0 %v556
  %768 = vmatpush2.bf16.msra.mxu0 %v555
  %769 = vmatprep.subr.bf16.mxu0 %v554
  %770 = vmatpush2.bf16.msra.mxu0 %v553
  %771 = vmatprep.subr.bf16.mxu0 %v552
  %772 = vmatpush2.bf16.msra.mxu0 %v551
  %773 = vmatprep.subr.bf16.mxu0 %v550
  %774 = vmatpush2.bf16.msra.mxu0 %v549
  %775 = vmatprep.subr.bf16.mxu0 %v548
  %776 = vmatpush2.bf16.msra.mxu0 %v547
  %777 = vmatprep.mubr.bf16.mxu0 %v172
  %778 = vmatmul.mubr.bf16.gmra.mxu0 %v171
  %v779 = vpop.f32.mrf.mxu0
  %v780 = vadd.f32 %v737, %v779
  %v781 = vpop.f32.mrf.mxu0
  %v782 = vadd.f32 %v739, %v781
  %v783 = vpop.f32.mrf.mxu0
  %v784 = vadd.f32 %v741, %v783
  %v785 = vpop.f32.mrf.mxu0
  %v786 = vadd.f32 %v743, %v785
  %787 = vdwg.mxu0
  %v788 = vmax.f32 %v780, 0.0
  %v789 = vmax.f32 %v782, 0.0
  %v790 = vmax.f32 %v784, 0.0
  %v791 = vmax.f32 %v786, 0.0
  %v792 = vpack.c.bf16 %v790, %v788
  %v793 = vpack.c.bf16 %v791, %v789
  %v794 = vld [vmem:[%s3] sm:$0xf]
  %v795 = vld [vmem:[%s3 + $0x4] sm:$0xf]
  %v796 = vld [vmem:[%s3 + $0x8] sm:$0xf]
  %v797 = vld [vmem:[%s3 + $0xc] sm:$0xf]
  %v798 = vld [vmem:[%s3 + $0x10] sm:$0xf]
  %v799 = vld [vmem:[%s3 + $0x14] sm:$0xf]
  %v800 = vld [vmem:[%s3 + $0x18] sm:$0xf]
  %v801 = vld [vmem:[%s3 + $0x1c] sm:$0xf]
  %v802 = vld [vmem:[%s3 + $0x20] sm:$0xf]
  %v803 = vld [vmem:[%s3 + $0x24] sm:$0xf]
  %v804 = vld [vmem:[%s3 + $0x28] sm:$0xf]
  %v805 = vld [vmem:[%s3 + $0x2c] sm:$0xf]
  %v806 = vld [vmem:[%s3 + $0x30] sm:$0xf]
  %v807 = vld [vmem:[%s3 + $0x34] sm:$0xf]
  %v808 = vld [vmem:[%s3 + $0x38] sm:$0xf]
  %v809 = vld [vmem:[%s3 + $0x3c] sm:$0xf]
  %v810 = vld [vmem:[%s3 + $0x40] sm:$0xf]
  %v811 = vld [vmem:[%s3 + $0x44] sm:$0xf]
  %v812 = vld [vmem:[%s3 + $0x48] sm:$0xf]
  %v813 = vld [vmem:[%s3 + $0x4c] sm:$0xf]
  %v814 = vld [vmem:[%s3 + $0x50] sm:$0xf]
  %v815 = vld [vmem:[%s3 + $0x54] sm:$0xf]
  %v816 = vld [vmem:[%s3 + $0x58] sm:$0xf]
  %v817 = vld [vmem:[%s3 + $0x5c] sm:$0xf]
  %v818 = vld [vmem:[%s3 + $0x60] sm:$0xf]
  %v819 = vld [vmem:[%s3 + $0x64] sm:$0xf]
  %v820 = vld [vmem:[%s3 + $0x68] sm:$0xf]
  %v821 = vld [vmem:[%s3 + $0x6c] sm:$0xf]
  %v822 = vld [vmem:[%s3 + $0x70] sm:$0xf]
  %v823 = vld [vmem:[%s3 + $0x74] sm:$0xf]
  %v824 = vld [vmem:[%s3 + $0x78] sm:$0xf]
  %v825 = vld [vmem:[%s3 + $0x7c] sm:$0xf]
  %v826 = vld [vmem:[%s4] sm:$0x1]
  %v828 = vlaneseq
  %v829 = vshrl.u32 %v828, 7
  %v830 = vsub.s32 0, %v829
  %v831 = vrot.slane %v826, %v830
  %v865 = vunpack.c.l.b16 %v794
  %v866 = vunpack.c.l.b16 %v795
  %v867 = vunpack.c.l.b16 %v796
  %v868 = vunpack.c.l.b16 %v797
  %v869 = vunpack.c.l.b16 %v798
  %v870 = vunpack.c.l.b16 %v799
  %v871 = vunpack.c.l.b16 %v800
  %v872 = vunpack.c.l.b16 %v801
  %v873 = vunpack.c.l.b16 %v802
  %v874 = vunpack.c.l.b16 %v803
  %v875 = vunpack.c.l.b16 %v804
  %v876 = vunpack.c.l.b16 %v805
  %v877 = vunpack.c.l.b16 %v806
  %v878 = vunpack.c.l.b16 %v807
  %v879 = vunpack.c.l.b16 %v808
  %v880 = vunpack.c.l.b16 %v809
  %v881 = vunpack.c.l.b16 %v810
  %v882 = vunpack.c.l.b16 %v811
  %v883 = vunpack.c.l.b16 %v812
  %v884 = vunpack.c.l.b16 %v813
  %v885 = vunpack.c.l.b16 %v814
  %v886 = vunpack.c.l.b16 %v815
  %v887 = vunpack.c.l.b16 %v816
  %v888 = vunpack.c.l.b16 %v817
  %v889 = vunpack.c.l.b16 %v818
  %v890 = vunpack.c.l.b16 %v819
  %v891 = vunpack.c.l.b16 %v820
  %v892 = vunpack.c.l.b16 %v821
  %v893 = vunpack.c.l.b16 %v822
  %v894 = vunpack.c.l.b16 %v823
  %v895 = vunpack.c.l.b16 %v824
  %v896 = vunpack.c.l.b16 %v825
  %v897 = vpack.c.b16 %v866, %v865
  %v898 = vpack.c.b16 %v868, %v867
  %v899 = vpack.c.b16 %v870, %v869
  %v900 = vpack.c.b16 %v872, %v871
  %v901 = vpack.c.b16 %v874, %v873
  %v902 = vpack.c.b16 %v876, %v875
  %v903 = vpack.c.b16 %v878, %v877
  %v904 = vpack.c.b16 %v880, %v879
  %v905 = vpack.c.b16 %v882, %v881
  %v906 = vpack.c.b16 %v884, %v883
  %v907 = vpack.c.b16 %v886, %v885
  %v908 = vpack.c.b16 %v888, %v887
  %v909 = vpack.c.b16 %v890, %v889
  %v910 = vpack.c.b16 %v892, %v891
  %v911 = vpack.c.b16 %v894, %v893
  %v912 = vpack.c.b16 %v896, %v895
  %929 = vmatprep.subr.bf16.mxu0 0
  %930 = vmatpush1.bf16.msra.mxu0 %v904
  %931 = vmatprep.subr.bf16.mxu0 0
  %932 = vmatpush1.bf16.msra.mxu0 %v903
  %933 = vmatprep.subr.bf16.mxu0 0
  %934 = vmatpush1.bf16.msra.mxu0 %v902
  %935 = vmatprep.subr.bf16.mxu0 0
  %936 = vmatpush1.bf16.msra.mxu0 %v901
  %937 = vmatprep.subr.bf16.mxu0 0
  %938 = vmatpush1.bf16.msra.mxu0 %v900
  %939 = vmatprep.subr.bf16.mxu0 0
  %940 = vmatpush1.bf16.msra.mxu0 %v899
  %941 = vmatprep.subr.bf16.mxu0 0
  %942 = vmatpush1.bf16.msra.mxu0 %v898
  %943 = vmatprep.subr.bf16.mxu0 0
  %944 = vmatpush1.bf16.msra.mxu0 %v897
  %945 = vmatprep.subr.bf16.mxu0 0
  %946 = vmatpush2.bf16.msra.mxu0 %v912
  %947 = vmatprep.subr.bf16.mxu0 0
  %948 = vmatpush2.bf16.msra.mxu0 %v911
  %949 = vmatprep.subr.bf16.mxu0 0
  %950 = vmatpush2.bf16.msra.mxu0 %v910
  %951 = vmatprep.subr.bf16.mxu0 0
  %952 = vmatpush2.bf16.msra.mxu0 %v909
  %953 = vmatprep.subr.bf16.mxu0 0
  %954 = vmatpush2.bf16.msra.mxu0 %v908
  %955 = vmatprep.subr.bf16.mxu0 0
  %956 = vmatpush2.bf16.msra.mxu0 %v907
  %957 = vmatprep.subr.bf16.mxu0 0
  %958 = vmatpush2.bf16.msra.mxu0 %v906
  %959 = vmatprep.subr.bf16.mxu0 0
  %960 = vmatpush2.bf16.msra.mxu0 %v905
  %961 = vmatprep.mubr.bf16.mxu0 %v793
  %962 = vmatmul.mubr.bf16.gmra.mxu0 %v792
  %v963 = vpop.f32.mrf.mxu0
  %v964 = vadd.f32 %v831, %v963
  %v965 = vpop.f32.mrf.mxu0
  %v966 = vpop.f32.mrf.mxu0
  %v967 = vadd.f32 %v831, %v966
  %v968 = vpop.f32.mrf.mxu0
  %969 = vdwg.mxu0
  %v970 = vmax.f32 %v964, 0.0
  %v971 = vmax.f32 %v967, 0.0
  %v972 = vpack.c.bf16 %v971, %v970
  %v973 = vld [vmem:[%s5] sm:$0xf]
  %v974 = vld [vmem:[%s5 + $0x4] sm:$0xf]
  %v975 = vld [vmem:[%s5 + $0x8] sm:$0xf]
  %v976 = vld [vmem:[%s5 + $0xc] sm:$0xf]
  %v977 = vld [vmem:[%s5 + $0x10] sm:$0xf]
  %v978 = vld [vmem:[%s5 + $0x14] sm:$0xf]
  %v979 = vld [vmem:[%s5 + $0x18] sm:$0xf]
  %v980 = vld [vmem:[%s5 + $0x1c] sm:$0xf]
  %v981 = vld [vmem:[%s5 + $0x20] sm:$0xf]
  %v982 = vld [vmem:[%s5 + $0x24] sm:$0xf]
  %v983 = vld [vmem:[%s5 + $0x28] sm:$0xf]
  %v984 = vld [vmem:[%s5 + $0x2c] sm:$0xf]
  %v985 = vld [vmem:[%s5 + $0x30] sm:$0xf]
  %v986 = vld [vmem:[%s5 + $0x34] sm:$0xf]
  %v987 = vld [vmem:[%s5 + $0x38] sm:$0xf]
  %v988 = vld [vmem:[%s5 + $0x3c] sm:$0xf]
  %v989 = vld [vmem:[%s6] sm:$0x1]
  %v991 = vlaneseq
  %v992 = vshrl.u32 %v991, 7
  %v993 = vsub.s32 0, %v992
  %v994 = vrot.slane %v989, %v993
  %v1012 = vunpack.c.l.b16 %v973
  %v1013 = vunpack.c.l.b16 %v974
  %v1014 = vunpack.c.l.b16 %v975
  %v1015 = vunpack.c.l.b16 %v976
  %v1016 = vunpack.c.l.b16 %v977
  %v1017 = vunpack.c.l.b16 %v978
  %v1018 = vunpack.c.l.b16 %v979
  %v1019 = vunpack.c.l.b16 %v980
  %v1020 = vunpack.c.l.b16 %v981
  %v1021 = vunpack.c.l.b16 %v982
  %v1022 = vunpack.c.l.b16 %v983
  %v1023 = vunpack.c.l.b16 %v984
  %v1024 = vunpack.c.l.b16 %v985
  %v1025 = vunpack.c.l.b16 %v986
  %v1026 = vunpack.c.l.b16 %v987
  %v1027 = vunpack.c.l.b16 %v988
  %v1028 = vpack.c.b16 %v1013, %v1012
  %v1029 = vpack.c.b16 %v1015, %v1014
  %v1030 = vpack.c.b16 %v1017, %v1016
  %v1031 = vpack.c.b16 %v1019, %v1018
  %v1032 = vpack.c.b16 %v1021, %v1020
  %v1033 = vpack.c.b16 %v1023, %v1022
  %v1034 = vpack.c.b16 %v1025, %v1024
  %v1035 = vpack.c.b16 %v1027, %v1026
  %1044 = vmatprep.subr.bf16.mxu0 0
  %1045 = vmatpush1.bf16.msra.mxu0 %v1035
  %1046 = vmatprep.subr.bf16.mxu0 0
  %1047 = vmatpush1.bf16.msra.mxu0 %v1034
  %1048 = vmatprep.subr.bf16.mxu0 0
  %1049 = vmatpush1.bf16.msra.mxu0 %v1033
  %1050 = vmatprep.subr.bf16.mxu0 0
  %1051 = vmatpush1.bf16.msra.mxu0 %v1032
  %1052 = vmatprep.subr.bf16.mxu0 0
  %1053 = vmatpush1.bf16.msra.mxu0 %v1031
  %1054 = vmatprep.subr.bf16.mxu0 0
  %1055 = vmatpush1.bf16.msra.mxu0 %v1030
  %1056 = vmatprep.subr.bf16.mxu0 0
  %1057 = vmatpush1.bf16.msra.mxu0 %v1029
  %1058 = vmatprep.subr.bf16.mxu0 0
  %1059 = vmatpush1.bf16.msra.mxu0 %v1028
  %1060 = vmatprep.subr.bf16.mxu0 0
  %1061 = vmatpush2.bf16.msra.mxu0 0
  %1062 = vmatprep.subr.bf16.mxu0 0
  %1063 = vmatpush2.bf16.msra.mxu0 0
  %1064 = vmatprep.subr.bf16.mxu0 0
  %1065 = vmatpush2.bf16.msra.mxu0 0
  %1066 = vmatprep.subr.bf16.mxu0 0
  %1067 = vmatpush2.bf16.msra.mxu0 0
  %1068 = vmatprep.subr.bf16.mxu0 0
  %1069 = vmatpush2.bf16.msra.mxu0 0
  %1070 = vmatprep.subr.bf16.mxu0 0
  %1071 = vmatpush2.bf16.msra.mxu0 0
  %1072 = vmatprep.subr.bf16.mxu0 0
  %1073 = vmatpush2.bf16.msra.mxu0 0
  %1074 = vmatprep.subr.bf16.mxu0 0
  %1075 = vmatpush2.bf16.msra.mxu0 0
  %1076 = vmatprep.mubr.bf16.mxu0 0
  %1077 = vmatmul.mubr.bf16.gmra.mxu0 %v972
  %v1078 = vpop.f32.mrf.mxu0
  %v1079 = vadd.f32 %v994, %v1078
  %v1080 = vpop.f32.mrf.mxu0
  %v1081 = vpop.f32.mrf.mxu0
  %v1082 = vadd.f32 %v994, %v1081
  %v1083 = vpop.f32.mrf.mxu0
  %1084 = vdwg.mxu0
  %1085 = vst [vmem:[%s9] sm:$0xff] %v1079
  %1086 = vst [vmem:[%s9 + $0x8] sm:$0xff] %v1082
  %v1087 = vld [vmem:[%s7] sm:$0xf]
  %v1088 = vld [vmem:[%s7 + $0x4] sm:$0xf]
  %v1089 = vld [vmem:[%s7 + $0x8] sm:$0xf]
  %v1090 = vld [vmem:[%s7 + $0xc] sm:$0xf]
  %v1091 = vld [vmem:[%s7 + $0x10] sm:$0xf]
  %v1092 = vld [vmem:[%s7 + $0x14] sm:$0xf]
  %v1093 = vld [vmem:[%s7 + $0x18] sm:$0xf]
  %v1094 = vld [vmem:[%s7 + $0x1c] sm:$0xf]
  %v1095 = vld [vmem:[%s7 + $0x20] sm:$0xf]
  %v1096 = vld [vmem:[%s7 + $0x24] sm:$0xf]
  %v1097 = vld [vmem:[%s7 + $0x28] sm:$0xf]
  %v1098 = vld [vmem:[%s7 + $0x2c] sm:$0xf]
  %v1099 = vld [vmem:[%s7 + $0x30] sm:$0xf]
  %v1100 = vld [vmem:[%s7 + $0x34] sm:$0xf]
  %v1101 = vld [vmem:[%s7 + $0x38] sm:$0xf]
  %v1102 = vld [vmem:[%s7 + $0x3c] sm:$0xf]
  %v1103 = vld [vmem:[%s7 + $0x40] sm:$0xf]
  %v1104 = vld [vmem:[%s7 + $0x44] sm:$0xf]
  %v1105 = vld [vmem:[%s7 + $0x48] sm:$0xf]
  %v1106 = vld [vmem:[%s7 + $0x4c] sm:$0xf]
  %v1107 = vld [vmem:[%s7 + $0x50] sm:$0xf]
  %v1108 = vld [vmem:[%s7 + $0x54] sm:$0xf]
  %v1109 = vld [vmem:[%s7 + $0x58] sm:$0xf]
  %v1110 = vld [vmem:[%s7 + $0x5c] sm:$0xf]
  %v1111 = vld [vmem:[%s7 + $0x60] sm:$0xf]
  %v1112 = vld [vmem:[%s7 + $0x64] sm:$0xf]
  %v1113 = vld [vmem:[%s7 + $0x68] sm:$0xf]
  %v1114 = vld [vmem:[%s7 + $0x6c] sm:$0xf]
  %v1115 = vld [vmem:[%s7 + $0x70] sm:$0xf]
  %v1116 = vld [vmem:[%s7 + $0x74] sm:$0xf]
  %v1117 = vld [vmem:[%s7 + $0x78] sm:$0xf]
  %v1118 = vld [vmem:[%s7 + $0x7c] sm:$0xf]
  %v1119 = vld [vmem:[%s8] sm:$0x1]
  %v1121 = vlaneseq
  %v1122 = vshrl.u32 %v1121, 7
  %v1123 = vsub.s32 0, %v1122
  %v1124 = vrot.slane %v1119, %v1123
  %v1158 = vunpack.c.l.b16 %v1087
  %v1159 = vunpack.c.l.b16 %v1088
  %v1160 = vunpack.c.l.b16 %v1089
  %v1161 = vunpack.c.l.b16 %v1090
  %v1162 = vunpack.c.l.b16 %v1091
  %v1163 = vunpack.c.l.b16 %v1092
  %v1164 = vunpack.c.l.b16 %v1093
  %v1165 = vunpack.c.l.b16 %v1094
  %v1166 = vunpack.c.l.b16 %v1095
  %v1167 = vunpack.c.l.b16 %v1096
  %v1168 = vunpack.c.l.b16 %v1097
  %v1169 = vunpack.c.l.b16 %v1098
  %v1170 = vunpack.c.l.b16 %v1099
  %v1171 = vunpack.c.l.b16 %v1100
  %v1172 = vunpack.c.l.b16 %v1101
  %v1173 = vunpack.c.l.b16 %v1102
  %v1174 = vunpack.c.l.b16 %v1103
  %v1175 = vunpack.c.l.b16 %v1104
  %v1176 = vunpack.c.l.b16 %v1105
  %v1177 = vunpack.c.l.b16 %v1106
  %v1178 = vunpack.c.l.b16 %v1107
  %v1179 = vunpack.c.l.b16 %v1108
  %v1180 = vunpack.c.l.b16 %v1109
  %v1181 = vunpack.c.l.b16 %v1110
  %v1182 = vunpack.c.l.b16 %v1111
  %v1183 = vunpack.c.l.b16 %v1112
  %v1184 = vunpack.c.l.b16 %v1113
  %v1185 = vunpack.c.l.b16 %v1114
  %v1186 = vunpack.c.l.b16 %v1115
  %v1187 = vunpack.c.l.b16 %v1116
  %v1188 = vunpack.c.l.b16 %v1117
  %v1189 = vunpack.c.l.b16 %v1118
  %v1190 = vpack.c.b16 %v1159, %v1158
  %v1191 = vpack.c.b16 %v1161, %v1160
  %v1192 = vpack.c.b16 %v1163, %v1162
  %v1193 = vpack.c.b16 %v1165, %v1164
  %v1194 = vpack.c.b16 %v1167, %v1166
  %v1195 = vpack.c.b16 %v1169, %v1168
  %v1196 = vpack.c.b16 %v1171, %v1170
  %v1197 = vpack.c.b16 %v1173, %v1172
  %v1198 = vpack.c.b16 %v1175, %v1174
  %v1199 = vpack.c.b16 %v1177, %v1176
  %v1200 = vpack.c.b16 %v1179, %v1178
  %v1201 = vpack.c.b16 %v1181, %v1180
  %v1202 = vpack.c.b16 %v1183, %v1182
  %v1203 = vpack.c.b16 %v1185, %v1184
  %v1204 = vpack.c.b16 %v1187, %v1186
  %v1205 = vpack.c.b16 %v1189, %v1188
  %1222 = vmatprep.subr.bf16.mxu0 0
  %1223 = vmatpush1.bf16.msra.mxu0 %v1197
  %1224 = vmatprep.subr.bf16.mxu0 0
  %1225 = vmatpush1.bf16.msra.mxu0 %v1196
  %1226 = vmatprep.subr.bf16.mxu0 0
  %1227 = vmatpush1.bf16.msra.mxu0 %v1195
  %1228 = vmatprep.subr.bf16.mxu0 0
  %1229 = vmatpush1.bf16.msra.mxu0 %v1194
  %1230 = vmatprep.subr.bf16.mxu0 0
  %1231 = vmatpush1.bf16.msra.mxu0 %v1193
  %1232 = vmatprep.subr.bf16.mxu0 0
  %1233 = vmatpush1.bf16.msra.mxu0 %v1192
  %1234 = vmatprep.subr.bf16.mxu0 0
  %1235 = vmatpush1.bf16.msra.mxu0 %v1191
  %1236 = vmatprep.subr.bf16.mxu0 0
  %1237 = vmatpush1.bf16.msra.mxu0 %v1190
  %1238 = vmatprep.subr.bf16.mxu0 0
  %1239 = vmatpush2.bf16.msra.mxu0 %v1205
  %1240 = vmatprep.subr.bf16.mxu0 0
  %1241 = vmatpush2.bf16.msra.mxu0 %v1204
  %1242 = vmatprep.subr.bf16.mxu0 0
  %1243 = vmatpush2.bf16.msra.mxu0 %v1203
  %1244 = vmatprep.subr.bf16.mxu0 0
  %1245 = vmatpush2.bf16.msra.mxu0 %v1202
  %1246 = vmatprep.subr.bf16.mxu0 0
  %1247 = vmatpush2.bf16.msra.mxu0 %v1201
  %1248 = vmatprep.subr.bf16.mxu0 0
  %1249 = vmatpush2.bf16.msra.mxu0 %v1200
  %1250 = vmatprep.subr.bf16.mxu0 0
  %1251 = vmatpush2.bf16.msra.mxu0 %v1199
  %1252 = vmatprep.subr.bf16.mxu0 0
  %1253 = vmatpush2.bf16.msra.mxu0 %v1198
  %1254 = vmatprep.mubr.bf16.mxu0 %v793
  %1255 = vmatmul.mubr.bf16.gmra.mxu0 %v792
  %v1256 = vpop.f32.mrf.mxu0
  %v1257 = vadd.f32 %v1124, %v1256
  %v1258 = vpop.f32.mrf.mxu0
  %v1259 = vpop.f32.mrf.mxu0
  %v1260 = vadd.f32 %v1124, %v1259
  %v1261 = vpop.f32.mrf.mxu0
  %1262 = vdwg.mxu0
  %1263 = vst [vmem:[%s10] sm:$0xff] %v1257
  %1264 = vst [vmem:[%s10 + $0x8] sm:$0xff] %v1260
  // Predicated region
  $region38: #{ganin_forward.5} parent=0 // pred_check
    _
  $region39: #{ganin_forward.5} parent=0 // pred_check_branch
    %1266 = sbr.rel (0) target = $region41
  $region40: #{ganin_forward.5} parent=0 // pred_region
    _
  $region41: #{ganin_forward.5} parent=0 // pred_fallthru
    _
  // Predicated region
  $region42: #{ganin_forward.5} parent=0 // pred_check
    _
  $region43: #{ganin_forward.5} parent=0 // pred_check_branch
    %1268 = sbr.rel (0) target = $region45
  $region44: #{ganin_forward.5} parent=0 // pred_region
    _
  $region45: #{ganin_forward.5} parent=0 // pred_fallthru
    _
  // Predicated region
  $region46: #{ganin_forward.5} parent=0 // pred_check
    _
  $region47: #{ganin_forward.5} parent=0 // pred_check_branch
    %1270 = sbr.rel (0) target = $region49
  $region48: #{ganin_forward.5} parent=0 // pred_region
    _
  $region49: #{ganin_forward.5} parent=0 // pred_fallthru
    _
  // Predicated region
  $region50: #{ganin_forward.5} parent=0 // pred_check
    _
  $region51: #{ganin_forward.5} parent=0 // pred_check_branch
    %1272 = sbr.rel (0) target = $region53
  $region52: #{ganin_forward.5} parent=0 // pred_region
    _
  $region53: #{ganin_forward.5} parent=0 // pred_fallthru
    _

</llo_original>
